<compile_context>
chip_gen: v7x
topology: tpu7x:2x2x1
jax: 0.10.0
libtpu: 0.0.40
codegen_flags: <defaults>
</compile_context>

<pallas_src>
import functools

import jax
import jax.numpy as jnp
from jax import lax
from jax.experimental import pallas as pl
from jax.experimental.pallas import tpu as pltpu


def _round_up(x, m):
    return ((x + m - 1) // m) * m


def _choose_tn(m):
    """Lane-dim (output-pixel) tile and padded M."""
    if m <= 512:
        return m, m                       # single grid step, full block
    for cand in (512, 384, 256, 128):
        if m % cand == 0:
            return cand, m
    return 512, _round_up(m, 512)


def _choose_tk(k):
    """Contraction tile (K is always a multiple of 128 here)."""
    if k <= 2048:
        return k
    for cand in range(2048, 0, -128):
        if k % cand == 0:
            return cand
    return k


# ----------------------------- Pallas kernel -------------------------------

def _conv_mm_kernel(w_ref, p_ref, b_ref, *out_refs, emit_stats):
    """One (Cout, tk) x (tk, tn) MXU step of y^T = W2d @ patches^T (+ bias).

    Grid = (M tiles, K tiles); K is the reduction axis (last, 'arbitrary').
    The f32 output block doubles as the accumulator.  On the last K step the
    bias is added and (optionally) per-channel sum / sum-of-squares of the
    *pre-bias* result are written so BatchNorm batch statistics never require
    another HBM pass over the activation.
    """
    if emit_stats:
        out_ref, sum_ref, sq_ref = out_refs
    else:
        (out_ref,) = out_refs

    k = pl.program_id(1)

    @pl.when(k == 0)
    def _init():
        out_ref[...] = jnp.zeros_like(out_ref)

    out_ref[...] += jnp.dot(w_ref[...], p_ref[...],
                            preferred_element_type=jnp.float32)

    @pl.when(k == pl.num_programs(1) - 1)
    def _finalize():
        z = out_ref[...]                                   # pre-bias conv result
        if emit_stats:
            s = jnp.sum(z, axis=1, keepdims=True)          # (Cout, 1)
            q = jnp.sum(z * z, axis=1, keepdims=True)      # (Cout, 1)
            sum_ref[...] = jnp.broadcast_to(s[None], sum_ref.shape)
            sq_ref[...] = jnp.broadcast_to(q[None], sq_ref.shape)
        out_ref[...] = z + b_ref[...]


def conv_layer_matmul(w2d, patches_t, bias, *, emit_stats):
    """y^T (Cout, M) = w2d (Cout, K) @ patches^T (K, M) + bias, bf16 MXU."""
    n, k = w2d.shape
    k2, m = patches_t.shape
    assert k == k2
    tn, m_pad = _choose_tn(m)
    tk = _choose_tk(k)
    if m_pad != m:
        # zero patch columns -> pre-bias result 0 there, so stats stay exact.
        patches_t = jnp.pad(patches_t, ((0, 0), (0, m_pad - m)))
    grid_m = m_pad // tn
    grid_k = k // tk

    out_shape = [jax.ShapeDtypeStruct((n, m_pad), jnp.float32)]
    out_specs = [pl.BlockSpec((n, tn), lambda i, kk: (0, i))]
    if emit_stats:
        out_shape += [jax.ShapeDtypeStruct((grid_m, n, 128), jnp.float32)] * 2
        out_specs += [pl.BlockSpec((1, n, 128), lambda i, kk: (i, 0, 0))] * 2

    res = pl.pallas_call(
        functools.partial(_conv_mm_kernel, emit_stats=emit_stats),
        out_shape=tuple(out_shape),
        grid=(grid_m, grid_k),
        in_specs=[
            pl.BlockSpec((n, tk), lambda i, kk: (0, kk)),     # weights
            pl.BlockSpec((tk, tn), lambda i, kk: (kk, i)),    # patches^T
            pl.BlockSpec((n, 1), lambda i, kk: (0, 0)),       # bias
        ],
        out_specs=tuple(out_specs),
        compiler_params=pltpu.CompilerParams(
            dimension_semantics=("parallel", "arbitrary")),
    )(w2d, patches_t, bias.reshape(n, 1).astype(jnp.float32))

    y_t = res[0][:, :m]
    if emit_stats:
        s = jnp.sum(res[1][:, :, 0], axis=0)
        q = jnp.sum(res[2][:, :, 0], axis=0)
        return y_t, s, q
    return y_t, None, None


# ------------------------------ host glue ----------------------------------

def _patches_transposed(a_cbhw, ho, wo):
    """im2col^T for a 4x4 / stride-2 / pad-1 conv, channels-first.

    a_cbhw: (C, B, H, W) activation with the previous layer's BN-affine +
    LeakyReLU already applied, so zero padding is inserted *after* the
    activation exactly like PyTorch.  Returns (16*C, B*Ho*Wo) bf16 with the
    K axis ordered (cin, kh, kw) to match w.reshape(Cout, Cin*16) and the big
    pixel axis in the lane direction.
    """
    c, b, _, _ = a_cbhw.shape
    xp = jnp.pad(a_cbhw, ((0, 0), (0, 0), (1, 1), (1, 1)))
    slabs = []
    for i in range(4):
        for j in range(4):
            slabs.append(xp[:, :, i:i + 2 * ho:2, j:j + 2 * wo:2])
    p = jnp.stack(slabs, axis=1)                     # (C, 16, B, Ho, Wo)
    return p.reshape(c * 16, b * ho * wo).astype(jnp.bfloat16)


def discriminator_forward(params, x_nchw, eps=1e-5):
    batch = x_nchw.shape[0]
    # Channels-first / batch-second internal layout (C, B, H, W): keeps every
    # Pallas output (Cout, pixels) lane-dense and makes the final flatten free.
    x = jnp.transpose(x_nchw, (1, 0, 2, 3)).astype(jnp.float32)

    layers = [("conv1", False), ("conv2", True), ("conv3", True),
              ("conv4", True), ("conv5", False)]

    need_act = False          # does x still need the previous layer's post-op?
    act_scale = None          # BN scale/shift (None -> plain LeakyReLU)
    act_shift = None

    for name, has_bn in layers:
        w, bias = params[name]                       # (Cout, Cin, 4, 4), (Cout,)
        cout, cin, _, _ = w.shape
        c, _, h, wdt = x.shape
        ho, wo = h // 2, wdt // 2

        # Previous layer's BN affine + LeakyReLU, fused by XLA into the same
        # fusion that builds the patch matrix (never a standalone HBM pass).
        a = x
        if need_act:
            if act_scale is not None:
                a = a * act_scale.reshape(c, 1, 1, 1) + act_shift.reshape(c, 1, 1, 1)
            a = jnp.where(a > 0, a, 0.2 * a)

        # Zero-pad input channels so K = 16*Cin is a multiple of 128
        # (conv1: 3 -> 8 gives K = 128) -> full-width MXU contractions.
        cin_p = _round_up(cin, 8)
        if cin_p != cin:
            a = jnp.pad(a, ((0, cin_p - cin), (0, 0), (0, 0), (0, 0)))
            w = jnp.pad(w, ((0, 0), (0, cin_p - cin), (0, 0), (0, 0)))

        # TODO(synk): build the patch matrix inside the Pallas kernel (from the
        # DMA'd input tile) instead of materializing the bf16 patches via XLA.
        patches_t = _patches_transposed(a, ho, wo)           # (16*cin_p, B*Ho*Wo)
        w2d = w.reshape(cout, cin_p * 16).astype(jnp.bfloat16)

        y_t, s, q = conv_layer_matmul(w2d, patches_t, bias, emit_stats=has_bn)

        if has_bn:
            gamma, beta = params[name + "_bn"]
            m_count = batch * ho * wo
            mean = s / m_count + bias                # stats are pre-bias
            var = q / m_count - (s / m_count) ** 2   # biased, like train-mode BN
            act_scale = gamma * lax.rsqrt(var + eps)
            act_shift = beta - mean * act_scale
        else:
            act_scale, act_shift = None, None
        need_act = True

        x = y_t.reshape(cout, batch, ho, wo)         # raw conv+bias, (C, B, H, W)

    # conv5 has no activation; flatten in NCHW order exactly like
    # out.view(-1, 16*ndf*3*3); the (K, 1) linear head stays in XLA.
    feat = jnp.transpose(x, (1, 0, 2, 3)).reshape(batch, -1)
    w_lin, b_lin = params["linear"]
    return feat @ w_lin.T + b_lin


def init_params(key, ndf):
    chans = [3, ndf, ndf * 2, ndf * 4, ndf * 8, ndf * 16]
    params = {}
    keys = jax.random.split(key, 12)
    ki = 0
    for l in range(5):
        cin, cout = chans[l], chans[l + 1]
        w = jax.random.normal(keys[ki], (cout, cin, 4, 4), jnp.float32) * 0.05
        ki += 1
        b = jax.random.normal(keys[ki], (cout,), jnp.float32) * 0.05
        ki += 1
        params[f"conv{l + 1}"] = (w, b)
        if l in (1, 2, 3):  # layers followed by BatchNorm2d
            params[f"conv{l + 1}_bn"] = (jnp.ones((cout,), jnp.float32),
                                         jnp.zeros((cout,), jnp.float32))
    w_lin = jax.random.normal(keys[ki], (1, ndf * 16 * 3 * 3), jnp.float32) * 0.05
    ki += 1
    b_lin = jax.random.normal(keys[ki], (1,), jnp.float32) * 0.05
    params["linear"] = (w_lin, b_lin)
    return params


# ----------------------- pure-JAX reference (for check) ---------------------

def reference_forward(params, x, eps=1e-5):
    def conv(h, w, b):
        y = lax.conv_general_dilated(h, w, (2, 2), [(1, 1), (1, 1)],
                                     dimension_numbers=("NCHW", "OIHW", "NCHW"))
        return y + b.reshape(1, -1, 1, 1)

    def leaky(h):
        return jnp.where(h > 0, h, 0.2 * h)

    def bn(h, gamma, beta):
        mean = jnp.mean(h, axis=(0, 2, 3), keepdims=True)
        var = jnp.var(h, axis=(0, 2, 3), keepdims=True)
        return (gamma.reshape(1, -1, 1, 1) * (h - mean) / jnp.sqrt(var + eps)
                + beta.reshape(1, -1, 1, 1))

    h = leaky(conv(x, *params["conv1"]))
    h = leaky(bn(conv(h, *params["conv2"]), *params["conv2_bn"]))
    h = leaky(bn(conv(h, *params["conv3"]), *params["conv3_bn"]))
    h = leaky(bn(conv(h, *params["conv4"]), *params["conv4_bn"]))
    h = conv(h, *params["conv5"])
    h = h.reshape(h.shape[0], -1)
    w_lin, b_lin = params["linear"]
    return h @ w_lin.T + b_lin


if __name__ == "__main__":
    ndf = 8
    key = jax.random.PRNGKey(0)
    pkey, xkey = jax.random.split(key)
    params = init_params(pkey, ndf)
    # 96x96 input: five stride-2 convs bring it to the 3x3 the Linear expects.
    x = jax.random.normal(xkey, (2, 3, 96, 96), jnp.float32)

    fwd = jax.jit(discriminator_forward)
    out = jax.block_until_ready(fwd(params, x))
    assert out.shape == (2, 1)

    ref = reference_forward(params, x)
    # bf16 MXU inputs (f32 accumulation / epilogue) => slightly looser
    # tolerance than the previous pure-f32 pipeline.
    assert jnp.allclose(out, ref, rtol=3e-2, atol=5e-2), (out, ref)

    print("KERNEL_OK")
</pallas_src>

<mosaic_0001>
module attributes {stable_mosaic.version = 11 : i64} {
  func.func @_conv_mm_kernel(%arg0: i32, %arg1: i32, %arg2: memref<8x128xbf16, #tpu.memory_space<vmem>>, %arg3: memref<128x512xbf16, #tpu.memory_space<vmem>>, %arg4: memref<8x1xf32, #tpu.memory_space<vmem>>, %arg5: memref<8x512xf32, #tpu.memory_space<vmem>>) attributes {dimension_semantics = [#tpu.dimension_semantics<parallel>, #tpu.dimension_semantics<arbitrary>], iteration_bounds = array<i64: 9, 1>, scalar_prefetch = 0 : i64, scratch_operands = 0 : i64, tpu.core_type = #tpu.core_type<tc>, window_params = [{transform_indices = @transform_0, window_bounds = array<i64: 8, 128>}, {transform_indices = @transform_1, window_bounds = array<i64: 128, 512>}, {pipeline_mode = #tpu.pipeline_mode<synchronous>, transform_indices = @transform_2, window_bounds = array<i64: 8, 1>}, {transform_indices = @transform_3, window_bounds = array<i64: 8, 512>}]} {
    %c0_i32 = arith.constant 0 : i32
    %0 = arith.cmpi eq, %arg1, %c0_i32 : i32
    %1 = arith.extui %0 : i1 to i32
    %c0_i32_0 = arith.constant 0 : i32
    %2 = arith.cmpi ne, %1, %c0_i32_0 : i32
    scf.if %2 {
      %cst_10 = arith.constant 0.000000e+00 : f32
      %12 = vector.broadcast %cst_10 : f32 to vector<8x512xf32>
      %c0_11 = arith.constant 0 : index
      %c0_12 = arith.constant 0 : index
      %13 = vector.load %arg5[%c0_11, %c0_12] : memref<8x512xf32, #tpu.memory_space<vmem>>, vector<8x512xf32>
      tpu.vector_store %arg5[%c0_11, %c0_12], %12 {strides = array<i32>} : memref<8x512xf32, #tpu.memory_space<vmem>>, vector<8x512xf32>,
    } else {
    }
    %c0 = arith.constant 0 : index
    %c0_1 = arith.constant 0 : index
    %3 = vector.load %arg5[%c0, %c0_1] : memref<8x512xf32, #tpu.memory_space<vmem>>, vector<8x512xf32>
    %c0_2 = arith.constant 0 : index
    %c0_3 = arith.constant 0 : index
    %4 = vector.load %arg2[%c0_2, %c0_3] : memref<8x128xbf16, #tpu.memory_space<vmem>>, vector<8x128xbf16>
    %c0_4 = arith.constant 0 : index
    %c0_5 = arith.constant 0 : index
    %5 = vector.load %arg3[%c0_4, %c0_5] : memref<128x512xbf16, #tpu.memory_space<vmem>>, vector<128x512xbf16>
    %cst = arith.constant dense<0.000000e+00> : vector<8x512xf32>
    %6 = tpu.matmul %4, %5, %cst {dimension_numbers = #tpu.dot_dimension_numbers<[1], [0], [0], [1], [0, 0, 1, 1], [], []>} : vector<8x128xbf16>, vector<128x512xbf16>, vector<8x512xf32> -> vector<8x512xf32>
    %7 = arith.addf %3, %6 : vector<8x512xf32>
    %c0_6 = arith.constant 0 : index
    %c0_7 = arith.constant 0 : index
    %8 = vector.load %arg5[%c0_6, %c0_7] : memref<8x512xf32, #tpu.memory_space<vmem>>, vector<8x512xf32>
    tpu.vector_store %arg5[%c0_6, %c0_7], %7 {strides = array<i32>} : memref<8x512xf32, #tpu.memory_space<vmem>>, vector<8x512xf32>,
    %c0_i32_8 = arith.constant 0 : i32
    %9 = arith.cmpi eq, %arg1, %c0_i32_8 : i32
    %10 = arith.extui %9 : i1 to i32
    %c0_i32_9 = arith.constant 0 : i32
    %11 = arith.cmpi ne, %10, %c0_i32_9 : i32
    scf.if %11 {
      %c0_10 = arith.constant 0 : index
      %c0_11 = arith.constant 0 : index
      %12 = vector.load %arg5[%c0_10, %c0_11] : memref<8x512xf32, #tpu.memory_space<vmem>>, vector<8x512xf32>
      %c0_12 = arith.constant 0 : index
      %c0_13 = arith.constant 0 : index
      %13 = vector.load %arg4[%c0_12, %c0_13] : memref<8x1xf32, #tpu.memory_space<vmem>>, vector<8x1xf32>
      %14 = vector.broadcast %13 : vector<8x1xf32> to vector<8x512xf32>
      %15 = arith.addf %12, %14 : vector<8x512xf32>
      %c0_14 = arith.constant 0 : index
      %c0_15 = arith.constant 0 : index
      %16 = vector.load %arg5[%c0_14, %c0_15] : memref<8x512xf32, #tpu.memory_space<vmem>>, vector<8x512xf32>
      tpu.vector_store %arg5[%c0_14, %c0_15], %15 {strides = array<i32>} : memref<8x512xf32, #tpu.memory_space<vmem>>, vector<8x512xf32>,
    } else {
    }
    return
  }
  func.func @transform_0(%arg0: i32, %arg1: i32) -> (i32, i32) {
    %c0_i32 = arith.constant 0 : i32
    %c0_i32_0 = arith.constant 0 : i32
    return %c0_i32, %arg1 : i32, i32
  }
  func.func @transform_1(%arg0: i32, %arg1: i32) -> (i32, i32) {
    %c0_i32 = arith.constant 0 : i32
    return %arg1, %arg0 : i32, i32
  }
  func.func @transform_2(%arg0: i32, %arg1: i32) -> (i32, i32) {
    %c0_i32 = arith.constant 0 : i32
    %c0_i32_0 = arith.constant 0 : i32
    %c0_i32_1 = arith.constant 0 : i32
    return %c0_i32, %c0_i32_0 : i32, i32
  }
  func.func @transform_3(%arg0: i32, %arg1: i32) -> (i32, i32) {
    %c0_i32 = arith.constant 0 : i32
    %c0_i32_0 = arith.constant 0 : i32
    return %c0_i32, %arg0 : i32, i32
  }
}

module attributes {stable_mosaic.version = 11 : i64} {
  func.func @_conv_mm_kernel(%arg0: i32, %arg1: i32, %arg2: memref<16x128xbf16, #tpu.memory_space<vmem>>, %arg3: memref<128x384xbf16, #tpu.memory_space<vmem>>, %arg4: memref<16x1xf32, #tpu.memory_space<vmem>>, %arg5: memref<16x384xf32, #tpu.memory_space<vmem>>, %arg6: memref<1x16x128xf32, #tpu.memory_space<vmem>>, %arg7: memref<1x16x128xf32, #tpu.memory_space<vmem>>) attributes {dimension_semantics = [#tpu.dimension_semantics<parallel>, #tpu.dimension_semantics<arbitrary>], iteration_bounds = array<i64: 3, 1>, scalar_prefetch = 0 : i64, scratch_operands = 0 : i64, tpu.core_type = #tpu.core_type<tc>, window_params = [{transform_indices = @transform_0, window_bounds = array<i64: 16, 128>}, {transform_indices = @transform_1, window_bounds = array<i64: 128, 384>}, {pipeline_mode = #tpu.pipeline_mode<synchronous>, transform_indices = @transform_2, window_bounds = array<i64: 16, 1>}, {transform_indices = @transform_3, window_bounds = array<i64: 16, 384>}, {transform_indices = @transform_4, window_bounds = array<i64: 1, 16, 128>}, {transform_indices = @transform_5, window_bounds = array<i64: 1, 16, 128>}]} {
    %c0_i32 = arith.constant 0 : i32
    %0 = arith.cmpi eq, %arg1, %c0_i32 : i32
    %1 = arith.extui %0 : i1 to i32
    %c0_i32_0 = arith.constant 0 : i32
    %2 = arith.cmpi ne, %1, %c0_i32_0 : i32
    scf.if %2 {
      %cst_10 = arith.constant 0.000000e+00 : f32
      %12 = vector.broadcast %cst_10 : f32 to vector<16x384xf32>
      %c0_11 = arith.constant 0 : index
      %c0_12 = arith.constant 0 : index
      %13 = vector.load %arg5[%c0_11, %c0_12] : memref<16x384xf32, #tpu.memory_space<vmem>>, vector<16x384xf32>
      tpu.vector_store %arg5[%c0_11, %c0_12], %12 {strides = array<i32>} : memref<16x384xf32, #tpu.memory_space<vmem>>, vector<16x384xf32>,
    } else {
    }
    %c0 = arith.constant 0 : index
    %c0_1 = arith.constant 0 : index
    %3 = vector.load %arg5[%c0, %c0_1] : memref<16x384xf32, #tpu.memory_space<vmem>>, vector<16x384xf32>
    %c0_2 = arith.constant 0 : index
    %c0_3 = arith.constant 0 : index
    %4 = vector.load %arg2[%c0_2, %c0_3] : memref<16x128xbf16, #tpu.memory_space<vmem>>, vector<16x128xbf16>
    %c0_4 = arith.constant 0 : index
    %c0_5 = arith.constant 0 : index
    %5 = vector.load %arg3[%c0_4, %c0_5] : memref<128x384xbf16, #tpu.memory_space<vmem>>, vector<128x384xbf16>
    %cst = arith.constant dense<0.000000e+00> : vector<16x384xf32>
    %6 = tpu.matmul %4, %5, %cst {dimension_numbers = #tpu.dot_dimension_numbers<[1], [0], [0], [1], [0, 0, 1, 1], [], []>} : vector<16x128xbf16>, vector<128x384xbf16>, vector<16x384xf32> -> vector<16x384xf32>
    %7 = arith.addf %3, %6 : vector<16x384xf32>
    %c0_6 = arith.constant 0 : index
    %c0_7 = arith.constant 0 : index
    %8 = vector.load %arg5[%c0_6, %c0_7] : memref<16x384xf32, #tpu.memory_space<vmem>>, vector<16x384xf32>
    tpu.vector_store %arg5[%c0_6, %c0_7], %7 {strides = array<i32>} : memref<16x384xf32, #tpu.memory_space<vmem>>, vector<16x384xf32>,
    %c0_i32_8 = arith.constant 0 : i32
    %9 = arith.cmpi eq, %arg1, %c0_i32_8 : i32
    %10 = arith.extui %9 : i1 to i32
    %c0_i32_9 = arith.constant 0 : i32
    %11 = arith.cmpi ne, %10, %c0_i32_9 : i32
    scf.if %11 {
      %c0_10 = arith.constant 0 : index
      %c0_11 = arith.constant 0 : index
      %12 = vector.load %arg5[%c0_10, %c0_11] : memref<16x384xf32, #tpu.memory_space<vmem>>, vector<16x384xf32>
      %cst_12 = arith.constant dense<0.000000e+00> : vector<16xf32>
      %13 = vector.multi_reduction <add>, %12, %cst_12 [1] : vector<16x384xf32> to vector<16xf32>
      %14 = vector.shape_cast %13 : vector<16xf32> to vector<16x1xf32>
      %15 = arith.mulf %12, %12 : vector<16x384xf32>
      %cst_13 = arith.constant dense<0.000000e+00> : vector<16xf32>
      %16 = vector.multi_reduction <add>, %15, %cst_13 [1] : vector<16x384xf32> to vector<16xf32>
      %17 = vector.shape_cast %16 : vector<16xf32> to vector<16x1xf32>
      %18 = vector.shape_cast %14 : vector<16x1xf32> to vector<1x16x1xf32>
      %19 = vector.shape_cast %18 : vector<1x16x1xf32> to vector<1x16x1xf32>
      %20 = vector.broadcast %19 : vector<1x16x1xf32> to vector<1x16x128xf32>
      %c0_14 = arith.constant 0 : index
      %c0_15 = arith.constant 0 : index
      %c0_16 = arith.constant 0 : index
      %21 = vector.load %arg6[%c0_14, %c0_15, %c0_16] : memref<1x16x128xf32, #tpu.memory_space<vmem>>, vector<1x16x128xf32>
      tpu.vector_store %arg6[%c0_14, %c0_15, %c0_16], %20 {strides = array<i32>} : memref<1x16x128xf32, #tpu.memory_space<vmem>>, vector<1x16x128xf32>,
      %22 = vector.shape_cast %17 : vector<16x1xf32> to vector<1x16x1xf32>
      %23 = vector.shape_cast %22 : vector<1x16x1xf32> to vector<1x16x1xf32>
      %24 = vector.broadcast %23 : vector<1x16x1xf32> to vector<1x16x128xf32>
      %c0_17 = arith.constant 0 : index
      %c0_18 = arith.constant 0 : index
      %c0_19 = arith.constant 0 : index
      %25 = vector.load %arg7[%c0_17, %c0_18, %c0_19] : memref<1x16x128xf32, #tpu.memory_space<vmem>>, vector<1x16x128xf32>
      tpu.vector_store %arg7[%c0_17, %c0_18, %c0_19], %24 {strides = array<i32>} : memref<1x16x128xf32, #tpu.memory_space<vmem>>, vector<1x16x128xf32>,
      %c0_20 = arith.constant 0 : index
      %c0_21 = arith.constant 0 : index
      %26 = vector.load %arg4[%c0_20, %c0_21] : memref<16x1xf32, #tpu.memory_space<vmem>>, vector<16x1xf32>
      %27 = vector.broadcast %26 : vector<16x1xf32> to vector<16x384xf32>
      %28 = arith.addf %12, %27 : vector<16x384xf32>
      %c0_22 = arith.constant 0 : index
      %c0_23 = arith.constant 0 : index
      %29 = vector.load %arg5[%c0_22, %c0_23] : memref<16x384xf32, #tpu.memory_space<vmem>>, vector<16x384xf32>
      tpu.vector_store %arg5[%c0_22, %c0_23], %28 {strides = array<i32>} : memref<16x384xf32, #tpu.memory_space<vmem>>, vector<16x384xf32>,
    } else {
    }
    return
  }
  func.func @transform_0(%arg0: i32, %arg1: i32) -> (i32, i32) {
    %c0_i32 = arith.constant 0 : i32
    %c0_i32_0 = arith.constant 0 : i32
    return %c0_i32, %arg1 : i32, i32
  }
  func.func @transform_1(%arg0: i32, %arg1: i32) -> (i32, i32) {
    %c0_i32 = arith.constant 0 : i32
    return %arg1, %arg0 : i32, i32
  }
  func.func @transform_2(%arg0: i32, %arg1: i32) -> (i32, i32) {
    %c0_i32 = arith.constant 0 : i32
    %c0_i32_0 = arith.constant 0 : i32
    %c0_i32_1 = arith.constant 0 : i32
    return %c0_i32, %c0_i32_0 : i32, i32
  }
  func.func @transform_3(%arg0: i32, %arg1: i32) -> (i32, i32) {
    %c0_i32 = arith.constant 0 : i32
    %c0_i32_0 = arith.constant 0 : i32
    return %c0_i32, %arg0 : i32, i32
  }
  func.func @transform_4(%arg0: i32, %arg1: i32) -> (i32, i32, i32) {
    %c0_i32 = arith.constant 0 : i32
    %c0_i32_0 = arith.constant 0 : i32
    %c0_i32_1 = arith.constant 0 : i32
    return %arg0, %c0_i32, %c0_i32_0 : i32, i32, i32
  }
  func.func @transform_5(%arg0: i32, %arg1: i32) -> (i32, i32, i32) {
    %c0_i32 = arith.constant 0 : i32
    %c0_i32_0 = arith.constant 0 : i32
    %c0_i32_1 = arith.constant 0 : i32
    return %arg0, %c0_i32, %c0_i32_0 : i32, i32, i32
  }
}

module attributes {stable_mosaic.version = 11 : i64} {
  func.func @_conv_mm_kernel(%arg0: i32, %arg1: i32, %arg2: memref<32x256xbf16, #tpu.memory_space<vmem>>, %arg3: memref<256x288xbf16, #tpu.memory_space<vmem>>, %arg4: memref<32x1xf32, #tpu.memory_space<vmem>>, %arg5: memref<32x288xf32, #tpu.memory_space<vmem>>, %arg6: memref<1x32x128xf32, #tpu.memory_space<vmem>>, %arg7: memref<1x32x128xf32, #tpu.memory_space<vmem>>) attributes {dimension_semantics = [#tpu.dimension_semantics<parallel>, #tpu.dimension_semantics<arbitrary>], iteration_bounds = array<i64: 1, 1>, scalar_prefetch = 0 : i64, scratch_operands = 0 : i64, tpu.core_type = #tpu.core_type<tc>, window_params = [{transform_indices = @transform_0, window_bounds = array<i64: 32, 256>}, {transform_indices = @transform_1, window_bounds = array<i64: 256, 288>}, {pipeline_mode = #tpu.pipeline_mode<synchronous>, transform_indices = @transform_2, window_bounds = array<i64: 32, 1>}, {transform_indices = @transform_3, window_bounds = array<i64: 32, 288>}, {transform_indices = @transform_4, window_bounds = array<i64: 1, 32, 128>}, {transform_indices = @transform_5, window_bounds = array<i64: 1, 32, 128>}]} {
    %c0_i32 = arith.constant 0 : i32
    %0 = arith.cmpi eq, %arg1, %c0_i32 : i32
    %1 = arith.extui %0 : i1 to i32
    %c0_i32_0 = arith.constant 0 : i32
    %2 = arith.cmpi ne, %1, %c0_i32_0 : i32
    scf.if %2 {
      %cst_10 = arith.constant 0.000000e+00 : f32
      %12 = vector.broadcast %cst_10 : f32 to vector<32x288xf32>
      %c0_11 = arith.constant 0 : index
      %c0_12 = arith.constant 0 : index
      %13 = vector.load %arg5[%c0_11, %c0_12] : memref<32x288xf32, #tpu.memory_space<vmem>>, vector<32x288xf32>
      tpu.vector_store %arg5[%c0_11, %c0_12], %12 {strides = array<i32>} : memref<32x288xf32, #tpu.memory_space<vmem>>, vector<32x288xf32>,
    } else {
    }
    %c0 = arith.constant 0 : index
    %c0_1 = arith.constant 0 : index
    %3 = vector.load %arg5[%c0, %c0_1] : memref<32x288xf32, #tpu.memory_space<vmem>>, vector<32x288xf32>
    %c0_2 = arith.constant 0 : index
    %c0_3 = arith.constant 0 : index
    %4 = vector.load %arg2[%c0_2, %c0_3] : memref<32x256xbf16, #tpu.memory_space<vmem>>, vector<32x256xbf16>
    %c0_4 = arith.constant 0 : index
    %c0_5 = arith.constant 0 : index
    %5 = vector.load %arg3[%c0_4, %c0_5] : memref<256x288xbf16, #tpu.memory_space<vmem>>, vector<256x288xbf16>
    %cst = arith.constant dense<0.000000e+00> : vector<32x288xf32>
    %6 = tpu.matmul %4, %5, %cst {dimension_numbers = #tpu.dot_dimension_numbers<[1], [0], [0], [1], [0, 0, 1, 1], [], []>} : vector<32x256xbf16>, vector<256x288xbf16>, vector<32x288xf32> -> vector<32x288xf32>
    %7 = arith.addf %3, %6 : vector<32x288xf32>
    %c0_6 = arith.constant 0 : index
    %c0_7 = arith.constant 0 : index
    %8 = vector.load %arg5[%c0_6, %c0_7] : memref<32x288xf32, #tpu.memory_space<vmem>>, vector<32x288xf32>
    tpu.vector_store %arg5[%c0_6, %c0_7], %7 {strides = array<i32>} : memref<32x288xf32, #tpu.memory_space<vmem>>, vector<32x288xf32>,
    %c0_i32_8 = arith.constant 0 : i32
    %9 = arith.cmpi eq, %arg1, %c0_i32_8 : i32
    %10 = arith.extui %9 : i1 to i32
    %c0_i32_9 = arith.constant 0 : i32
    %11 = arith.cmpi ne, %10, %c0_i32_9 : i32
    scf.if %11 {
      %c0_10 = arith.constant 0 : index
      %c0_11 = arith.constant 0 : index
      %12 = vector.load %arg5[%c0_10, %c0_11] : memref<32x288xf32, #tpu.memory_space<vmem>>, vector<32x288xf32>
      %cst_12 = arith.constant dense<0.000000e+00> : vector<32xf32>
      %13 = vector.multi_reduction <add>, %12, %cst_12 [1] : vector<32x288xf32> to vector<32xf32>
      %14 = vector.shape_cast %13 : vector<32xf32> to vector<32x1xf32>
      %15 = arith.mulf %12, %12 : vector<32x288xf32>
      %cst_13 = arith.constant dense<0.000000e+00> : vector<32xf32>
      %16 = vector.multi_reduction <add>, %15, %cst_13 [1] : vector<32x288xf32> to vector<32xf32>
      %17 = vector.shape_cast %16 : vector<32xf32> to vector<32x1xf32>
      %18 = vector.shape_cast %14 : vector<32x1xf32> to vector<1x32x1xf32>
      %19 = vector.shape_cast %18 : vector<1x32x1xf32> to vector<1x32x1xf32>
      %20 = vector.broadcast %19 : vector<1x32x1xf32> to vector<1x32x128xf32>
      %c0_14 = arith.constant 0 : index
      %c0_15 = arith.constant 0 : index
      %c0_16 = arith.constant 0 : index
      %21 = vector.load %arg6[%c0_14, %c0_15, %c0_16] : memref<1x32x128xf32, #tpu.memory_space<vmem>>, vector<1x32x128xf32>
      tpu.vector_store %arg6[%c0_14, %c0_15, %c0_16], %20 {strides = array<i32>} : memref<1x32x128xf32, #tpu.memory_space<vmem>>, vector<1x32x128xf32>,
      %22 = vector.shape_cast %17 : vector<32x1xf32> to vector<1x32x1xf32>
      %23 = vector.shape_cast %22 : vector<1x32x1xf32> to vector<1x32x1xf32>
      %24 = vector.broadcast %23 : vector<1x32x1xf32> to vector<1x32x128xf32>
      %c0_17 = arith.constant 0 : index
      %c0_18 = arith.constant 0 : index
      %c0_19 = arith.constant 0 : index
      %25 = vector.load %arg7[%c0_17, %c0_18, %c0_19] : memref<1x32x128xf32, #tpu.memory_space<vmem>>, vector<1x32x128xf32>
      tpu.vector_store %arg7[%c0_17, %c0_18, %c0_19], %24 {strides = array<i32>} : memref<1x32x128xf32, #tpu.memory_space<vmem>>, vector<1x32x128xf32>,
      %c0_20 = arith.constant 0 : index
      %c0_21 = arith.constant 0 : index
      %26 = vector.load %arg4[%c0_20, %c0_21] : memref<32x1xf32, #tpu.memory_space<vmem>>, vector<32x1xf32>
      %27 = vector.broadcast %26 : vector<32x1xf32> to vector<32x288xf32>
      %28 = arith.addf %12, %27 : vector<32x288xf32>
      %c0_22 = arith.constant 0 : index
      %c0_23 = arith.constant 0 : index
      %29 = vector.load %arg5[%c0_22, %c0_23] : memref<32x288xf32, #tpu.memory_space<vmem>>, vector<32x288xf32>
      tpu.vector_store %arg5[%c0_22, %c0_23], %28 {strides = array<i32>} : memref<32x288xf32, #tpu.memory_space<vmem>>, vector<32x288xf32>,
    } else {
    }
    return
  }
  func.func @transform_0(%arg0: i32, %arg1: i32) -> (i32, i32) {
    %c0_i32 = arith.constant 0 : i32
    %c0_i32_0 = arith.constant 0 : i32
    return %c0_i32, %arg1 : i32, i32
  }
  func.func @transform_1(%arg0: i32, %arg1: i32) -> (i32, i32) {
    %c0_i32 = arith.constant 0 : i32
    return %arg1, %arg0 : i32, i32
  }
  func.func @transform_2(%arg0: i32, %arg1: i32) -> (i32, i32) {
    %c0_i32 = arith.constant 0 : i32
    %c0_i32_0 = arith.constant 0 : i32
    %c0_i32_1 = arith.constant 0 : i32
    return %c0_i32, %c0_i32_0 : i32, i32
  }
  func.func @transform_3(%arg0: i32, %arg1: i32) -> (i32, i32) {
    %c0_i32 = arith.constant 0 : i32
    %c0_i32_0 = arith.constant 0 : i32
    return %c0_i32, %arg0 : i32, i32
  }
  func.func @transform_4(%arg0: i32, %arg1: i32) -> (i32, i32, i32) {
    %c0_i32 = arith.constant 0 : i32
    %c0_i32_0 = arith.constant 0 : i32
    %c0_i32_1 = arith.constant 0 : i32
    return %arg0, %c0_i32, %c0_i32_0 : i32, i32, i32
  }
  func.func @transform_5(%arg0: i32, %arg1: i32) -> (i32, i32, i32) {
    %c0_i32 = arith.constant 0 : i32
    %c0_i32_0 = arith.constant 0 : i32
    %c0_i32_1 = arith.constant 0 : i32
    return %arg0, %c0_i32, %c0_i32_0 : i32, i32, i32
  }
}

module attributes {stable_mosaic.version = 11 : i64} {
  func.func @_conv_mm_kernel(%arg0: i32, %arg1: i32, %arg2: memref<64x512xbf16, #tpu.memory_space<vmem>>, %arg3: memref<512x72xbf16, #tpu.memory_space<vmem>>, %arg4: memref<64x1xf32, #tpu.memory_space<vmem>>, %arg5: memref<64x72xf32, #tpu.memory_space<vmem>>, %arg6: memref<1x64x128xf32, #tpu.memory_space<vmem>>, %arg7: memref<1x64x128xf32, #tpu.memory_space<vmem>>) attributes {dimension_semantics = [#tpu.dimension_semantics<parallel>, #tpu.dimension_semantics<arbitrary>], iteration_bounds = array<i64: 1, 1>, scalar_prefetch = 0 : i64, scratch_operands = 0 : i64, tpu.core_type = #tpu.core_type<tc>, window_params = [{transform_indices = @transform_0, window_bounds = array<i64: 64, 512>}, {transform_indices = @transform_1, window_bounds = array<i64: 512, 72>}, {pipeline_mode = #tpu.pipeline_mode<synchronous>, transform_indices = @transform_2, window_bounds = array<i64: 64, 1>}, {transform_indices = @transform_3, window_bounds = array<i64: 64, 72>}, {transform_indices = @transform_4, window_bounds = array<i64: 1, 64, 128>}, {transform_indices = @transform_5, window_bounds = array<i64: 1, 64, 128>}]} {
    %c0_i32 = arith.constant 0 : i32
    %0 = arith.cmpi eq, %arg1, %c0_i32 : i32
    %1 = arith.extui %0 : i1 to i32
    %c0_i32_0 = arith.constant 0 : i32
    %2 = arith.cmpi ne, %1, %c0_i32_0 : i32
    scf.if %2 {
      %cst_10 = arith.constant 0.000000e+00 : f32
      %12 = vector.broadcast %cst_10 : f32 to vector<64x72xf32>
      %c0_11 = arith.constant 0 : index
      %c0_12 = arith.constant 0 : index
      %13 = vector.load %arg5[%c0_11, %c0_12] : memref<64x72xf32, #tpu.memory_space<vmem>>, vector<64x72xf32>
      tpu.vector_store %arg5[%c0_11, %c0_12], %12 {strides = array<i32>} : memref<64x72xf32, #tpu.memory_space<vmem>>, vector<64x72xf32>,
    } else {
    }
    %c0 = arith.constant 0 : index
    %c0_1 = arith.constant 0 : index
    %3 = vector.load %arg5[%c0, %c0_1] : memref<64x72xf32, #tpu.memory_space<vmem>>, vector<64x72xf32>
    %c0_2 = arith.constant 0 : index
    %c0_3 = arith.constant 0 : index
    %4 = vector.load %arg2[%c0_2, %c0_3] : memref<64x512xbf16, #tpu.memory_space<vmem>>, vector<64x512xbf16>
    %c0_4 = arith.constant 0 : index
    %c0_5 = arith.constant 0 : index
    %5 = vector.load %arg3[%c0_4, %c0_5] : memref<512x72xbf16, #tpu.memory_space<vmem>>, vector<512x72xbf16>
    %cst = arith.constant dense<0.000000e+00> : vector<64x72xf32>
    %6 = tpu.matmul %4, %5, %cst {dimension_numbers = #tpu.dot_dimension_numbers<[1], [0], [0], [1], [0, 0, 1, 1], [], []>} : vector<64x512xbf16>, vector<512x72xbf16>, vector<64x72xf32> -> vector<64x72xf32>
    %7 = arith.addf %3, %6 : vector<64x72xf32>
    %c0_6 = arith.constant 0 : index
    %c0_7 = arith.constant 0 : index
    %8 = vector.load %arg5[%c0_6, %c0_7] : memref<64x72xf32, #tpu.memory_space<vmem>>, vector<64x72xf32>
    tpu.vector_store %arg5[%c0_6, %c0_7], %7 {strides = array<i32>} : memref<64x72xf32, #tpu.memory_space<vmem>>, vector<64x72xf32>,
    %c0_i32_8 = arith.constant 0 : i32
    %9 = arith.cmpi eq, %arg1, %c0_i32_8 : i32
    %10 = arith.extui %9 : i1 to i32
    %c0_i32_9 = arith.constant 0 : i32
    %11 = arith.cmpi ne, %10, %c0_i32_9 : i32
    scf.if %11 {
      %c0_10 = arith.constant 0 : index
      %c0_11 = arith.constant 0 : index
      %12 = vector.load %arg5[%c0_10, %c0_11] : memref<64x72xf32, #tpu.memory_space<vmem>>, vector<64x72xf32>
      %cst_12 = arith.constant dense<0.000000e+00> : vector<64xf32>
      %13 = vector.multi_reduction <add>, %12, %cst_12 [1] : vector<64x72xf32> to vector<64xf32>
      %14 = vector.shape_cast %13 : vector<64xf32> to vector<64x1xf32>
      %15 = arith.mulf %12, %12 : vector<64x72xf32>
      %cst_13 = arith.constant dense<0.000000e+00> : vector<64xf32>
      %16 = vector.multi_reduction <add>, %15, %cst_13 [1] : vector<64x72xf32> to vector<64xf32>
      %17 = vector.shape_cast %16 : vector<64xf32> to vector<64x1xf32>
      %18 = vector.shape_cast %14 : vector<64x1xf32> to vector<1x64x1xf32>
      %19 = vector.shape_cast %18 : vector<1x64x1xf32> to vector<1x64x1xf32>
      %20 = vector.broadcast %19 : vector<1x64x1xf32> to vector<1x64x128xf32>
      %c0_14 = arith.constant 0 : index
      %c0_15 = arith.constant 0 : index
      %c0_16 = arith.constant 0 : index
      %21 = vector.load %arg6[%c0_14, %c0_15, %c0_16] : memref<1x64x128xf32, #tpu.memory_space<vmem>>, vector<1x64x128xf32>
      tpu.vector_store %arg6[%c0_14, %c0_15, %c0_16], %20 {strides = array<i32>} : memref<1x64x128xf32, #tpu.memory_space<vmem>>, vector<1x64x128xf32>,
      %22 = vector.shape_cast %17 : vector<64x1xf32> to vector<1x64x1xf32>
      %23 = vector.shape_cast %22 : vector<1x64x1xf32> to vector<1x64x1xf32>
      %24 = vector.broadcast %23 : vector<1x64x1xf32> to vector<1x64x128xf32>
      %c0_17 = arith.constant 0 : index
      %c0_18 = arith.constant 0 : index
      %c0_19 = arith.constant 0 : index
      %25 = vector.load %arg7[%c0_17, %c0_18, %c0_19] : memref<1x64x128xf32, #tpu.memory_space<vmem>>, vector<1x64x128xf32>
      tpu.vector_store %arg7[%c0_17, %c0_18, %c0_19], %24 {strides = array<i32>} : memref<1x64x128xf32, #tpu.memory_space<vmem>>, vector<1x64x128xf32>,
      %c0_20 = arith.constant 0 : index
      %c0_21 = arith.constant 0 : index
      %26 = vector.load %arg4[%c0_20, %c0_21] : memref<64x1xf32, #tpu.memory_space<vmem>>, vector<64x1xf32>
      %27 = vector.broadcast %26 : vector<64x1xf32> to vector<64x72xf32>
      %28 = arith.addf %12, %27 : vector<64x72xf32>
      %c0_22 = arith.constant 0 : index
      %c0_23 = arith.constant 0 : index
      %29 = vector.load %arg5[%c0_22, %c0_23] : memref<64x72xf32, #tpu.memory_space<vmem>>, vector<64x72xf32>
      tpu.vector_store %arg5[%c0_22, %c0_23], %28 {strides = array<i32>} : memref<64x72xf32, #tpu.memory_space<vmem>>, vector<64x72xf32>,
    } else {
    }
    return
  }
  func.func @transform_0(%arg0: i32, %arg1: i32) -> (i32, i32) {
    %c0_i32 = arith.constant 0 : i32
    %c0_i32_0 = arith.constant 0 : i32
    return %c0_i32, %arg1 : i32, i32
  }
  func.func @transform_1(%arg0: i32, %arg1: i32) -> (i32, i32) {
    %c0_i32 = arith.constant 0 : i32
    return %arg1, %arg0 : i32, i32
  }
  func.func @transform_2(%arg0: i32, %arg1: i32) -> (i32, i32) {
    %c0_i32 = arith.constant 0 : i32
    %c0_i32_0 = arith.constant 0 : i32
    %c0_i32_1 = arith.constant 0 : i32
    return %c0_i32, %c0_i32_0 : i32, i32
  }
  func.func @transform_3(%arg0: i32, %arg1: i32) -> (i32, i32) {
    %c0_i32 = arith.constant 0 : i32
    %c0_i32_0 = arith.constant 0 : i32
    return %c0_i32, %arg0 : i32, i32
  }
  func.func @transform_4(%arg0: i32, %arg1: i32) -> (i32, i32, i32) {
    %c0_i32 = arith.constant 0 : i32
    %c0_i32_0 = arith.constant 0 : i32
    %c0_i32_1 = arith.constant 0 : i32
    return %arg0, %c0_i32, %c0_i32_0 : i32, i32, i32
  }
  func.func @transform_5(%arg0: i32, %arg1: i32) -> (i32, i32, i32) {
    %c0_i32 = arith.constant 0 : i32
    %c0_i32_0 = arith.constant 0 : i32
    %c0_i32_1 = arith.constant 0 : i32
    return %arg0, %c0_i32, %c0_i32_0 : i32, i32, i32
  }
}

module attributes {stable_mosaic.version = 11 : i64} {
  func.func @_conv_mm_kernel(%arg0: i32, %arg1: i32, %arg2: memref<128x1024xbf16, #tpu.memory_space<vmem>>, %arg3: memref<1024x18xbf16, #tpu.memory_space<vmem>>, %arg4: memref<128x1xf32, #tpu.memory_space<vmem>>, %arg5: memref<128x18xf32, #tpu.memory_space<vmem>>) attributes {dimension_semantics = [#tpu.dimension_semantics<parallel>, #tpu.dimension_semantics<arbitrary>], iteration_bounds = array<i64: 1, 1>, scalar_prefetch = 0 : i64, scratch_operands = 0 : i64, tpu.core_type = #tpu.core_type<tc>, window_params = [{transform_indices = @transform_0, window_bounds = array<i64: 128, 1024>}, {transform_indices = @transform_1, window_bounds = array<i64: 1024, 18>}, {pipeline_mode = #tpu.pipeline_mode<synchronous>, transform_indices = @transform_2, window_bounds = array<i64: 128, 1>}, {transform_indices = @transform_3, window_bounds = array<i64: 128, 18>}]} {
    %c0_i32 = arith.constant 0 : i32
    %0 = arith.cmpi eq, %arg1, %c0_i32 : i32
    %1 = arith.extui %0 : i1 to i32
    %c0_i32_0 = arith.constant 0 : i32
    %2 = arith.cmpi ne, %1, %c0_i32_0 : i32
    scf.if %2 {
      %cst_10 = arith.constant 0.000000e+00 : f32
      %12 = vector.broadcast %cst_10 : f32 to vector<128x18xf32>
      %c0_11 = arith.constant 0 : index
      %c0_12 = arith.constant 0 : index
      %13 = vector.load %arg5[%c0_11, %c0_12] : memref<128x18xf32, #tpu.memory_space<vmem>>, vector<128x18xf32>
      tpu.vector_store %arg5[%c0_11, %c0_12], %12 {strides = array<i32>} : memref<128x18xf32, #tpu.memory_space<vmem>>, vector<128x18xf32>,
    } else {
    }
    %c0 = arith.constant 0 : index
    %c0_1 = arith.constant 0 : index
    %3 = vector.load %arg5[%c0, %c0_1] : memref<128x18xf32, #tpu.memory_space<vmem>>, vector<128x18xf32>
    %c0_2 = arith.constant 0 : index
    %c0_3 = arith.constant 0 : index
    %4 = vector.load %arg2[%c0_2, %c0_3] : memref<128x1024xbf16, #tpu.memory_space<vmem>>, vector<128x1024xbf16>
    %c0_4 = arith.constant 0 : index
    %c0_5 = arith.constant 0 : index
    %5 = vector.load %arg3[%c0_4, %c0_5] : memref<1024x18xbf16, #tpu.memory_space<vmem>>, vector<1024x18xbf16>
    %cst = arith.constant dense<0.000000e+00> : vector<128x18xf32>
    %6 = tpu.matmul %4, %5, %cst {dimension_numbers = #tpu.dot_dimension_numbers<[1], [0], [0], [1], [0, 0, 1, 1], [], []>} : vector<128x1024xbf16>, vector<1024x18xbf16>, vector<128x18xf32> -> vector<128x18xf32>
    %7 = arith.addf %3, %6 : vector<128x18xf32>
    %c0_6 = arith.constant 0 : index
    %c0_7 = arith.constant 0 : index
    %8 = vector.load %arg5[%c0_6, %c0_7] : memref<128x18xf32, #tpu.memory_space<vmem>>, vector<128x18xf32>
    tpu.vector_store %arg5[%c0_6, %c0_7], %7 {strides = array<i32>} : memref<128x18xf32, #tpu.memory_space<vmem>>, vector<128x18xf32>,
    %c0_i32_8 = arith.constant 0 : i32
    %9 = arith.cmpi eq, %arg1, %c0_i32_8 : i32
    %10 = arith.extui %9 : i1 to i32
    %c0_i32_9 = arith.constant 0 : i32
    %11 = arith.cmpi ne, %10, %c0_i32_9 : i32
    scf.if %11 {
      %c0_10 = arith.constant 0 : index
      %c0_11 = arith.constant 0 : index
      %12 = vector.load %arg5[%c0_10, %c0_11] : memref<128x18xf32, #tpu.memory_space<vmem>>, vector<128x18xf32>
      %c0_12 = arith.constant 0 : index
      %c0_13 = arith.constant 0 : index
      %13 = vector.load %arg4[%c0_12, %c0_13] : memref<128x1xf32, #tpu.memory_space<vmem>>, vector<128x1xf32>
      %14 = vector.broadcast %13 : vector<128x1xf32> to vector<128x18xf32>
      %15 = arith.addf %12, %14 : vector<128x18xf32>
      %c0_14 = arith.constant 0 : index
      %c0_15 = arith.constant 0 : index
      %16 = vector.load %arg5[%c0_14, %c0_15] : memref<128x18xf32, #tpu.memory_space<vmem>>, vector<128x18xf32>
      tpu.vector_store %arg5[%c0_14, %c0_15], %15 {strides = array<i32>} : memref<128x18xf32, #tpu.memory_space<vmem>>, vector<128x18xf32>,
    } else {
    }
    return
  }
  func.func @transform_0(%arg0: i32, %arg1: i32) -> (i32, i32) {
    %c0_i32 = arith.constant 0 : i32
    %c0_i32_0 = arith.constant 0 : i32
    return %c0_i32, %arg1 : i32, i32
  }
  func.func @transform_1(%arg0: i32, %arg1: i32) -> (i32, i32) {
    %c0_i32 = arith.constant 0 : i32
    return %arg1, %arg0 : i32, i32
  }
  func.func @transform_2(%arg0: i32, %arg1: i32) -> (i32, i32) {
    %c0_i32 = arith.constant 0 : i32
    %c0_i32_0 = arith.constant 0 : i32
    %c0_i32_1 = arith.constant 0 : i32
    return %c0_i32, %c0_i32_0 : i32, i32
  }
  func.func @transform_3(%arg0: i32, %arg1: i32) -> (i32, i32) {
    %c0_i32 = arith.constant 0 : i32
    %c0_i32_0 = arith.constant 0 : i32
    return %c0_i32, %arg0 : i32, i32
  }
}

</mosaic_0001>

<llo_original>
// kernel: discriminator_forward.5
$region0: #{discriminator_forward.5}
  #allocation0 [shape = 'u32[]', space=smem, size = 0x4, offset = 0x4, fixed_abs, tag = 'smem constant byte address 0x4 - core index']
  #allocation1 [shape = 'u32[144,128]{1,0:T(1,128)}', space=vmem, size = 0x12000, scoped, tag = 'internal scratch']
  %s0 = inlined_call_operand.vmem [shape: bf16[8,128], index: 0, kind: input, shape index: {}]
  %s1 = inlined_call_operand.vmem [shape: bf16[128,4608], index: 1, kind: input, shape index: {}]
  %s2 = inlined_call_operand.vmem [shape: f32[8,1], index: 2, kind: input, shape index: {}]
  %s3 = inlined_call_operand.vmem [shape: f32[8,4608], index: 3, kind: output, shape index: {}]
  %s4 = sld [smem:[#allocation0]]
  $region76: #{discriminator_forward.5} parent=0
    _
  %s6 = ssub.s32 1, %s4
  %s7 = scalar_select 0, %s6, %s4
  $region1: #{discriminator_forward.5} parent=0
    #allocation2 [shape = 'u8[262144]{0}', space=vmem, size = 0x40000, scoped, tag = 'input window, operand 1']
    loop: start=0, step=1, limit=11
    $region2: #{discriminator_forward.5} parent=1 // loop_pre_header
      _
    $region3: #{discriminator_forward.5} parent=1 // loop_header
      %s9 = sphi 0, %s13
      %p10 = scmp.ge.s32.totalorder %s9, 11
      %s16 = sphi 0, %s28
      %s17 = sphi 0, %s24
      %s18 = sphi 0, %s16
      %s19 = sphi 0, %s17
      %s20 = sphi 0, %s18
      %s21 = sphi 0, %s19
      %s31 = sphi 0, %s33
      %s34 = sphi 0, %s31
      %s35 = sphi 0, %s34
      %s51 = sphi 0, %s35
      %s59 = sphi 0, %s61
      %s62 = sphi 0, %s59
      %s63 = sphi 0, %s62
      %s79 = sphi 0, %s63
      %s83 = sphi 0, %s83
      %s85 = sphi 0, %s83
      %s86 = sphi 0, %s85
      %s100 = sphi 0, %s86
      %s106 = sphi 0, %s108
      %s109 = sphi 0, %s106
      %s110 = sphi 0, %s109
      %s126 = sphi 0, %s110
    $region4: #{discriminator_forward.5} parent=1 // loop_header_branch
      %12 = sbr.rel (%p10) target = $region8
    $region5: #{discriminator_forward.5} parent=1 // loop_body
      %s14 = ssub.s32 %s9, 1
      %s15 = ssub.s32 %s9, 2
      %s22 = sadd.s32 1, %s17
      %p23 = scmp.ge.s32.totalorder %s22, 1
      %s24 = scalar_select %p23, 0, %s22
      %s25 = sadd.s32 1, %s16
      %s26 = scalar_select %p23, %s25, %s16
      %p27 = scmp.ge.s32.totalorder %s26, 9
      %s28 = scalar_select %p27, 0, %s26
      %s29 = ssub.s32 %s17, %s24
      %p30 = scmp.eq.s32.totalorder %s29, 0
      %s32 = sadd.s32 %s31, 1
      %s33 = scalar_select %p30, %s31, %s32
      %p36 = pneg %p30
      %p37 = scmp.eq.s32.totalorder %s9, 8
      %p38 = por %p36, %p37
      %p39 = scmp.ne.s32.totalorder %s31, %s34
      %p40 = scmp.eq.s32.totalorder %s9, 0
      %p41 = por %p39, %p40
      %p42 = scmp.ne.s32.totalorder %s31, %s34
      %p43 = scmp.eq.s32.totalorder %s14, 8
      %p44 = por %p42, %p43
      %p45 = scmp.ne.s32.totalorder %s34, %s35
      %p46 = scmp.eq.s32.totalorder %s14, 0
      %p47 = por %p45, %p46
      %p48 = scmp.ne.s32.totalorder %s34, %s35
      %p49 = scmp.eq.s32.totalorder %s15, 8
      %p50 = por %p48, %p49
      %p52 = scmp.ne.s32.totalorder %s35, %s51
      %p53 = scmp.eq.s32.totalorder %s15, 0
      %p54 = por %p52, %p53
      %s55 = ssub.s32 %s17, %s24
      %s56 = ssub.s32 %s16, %s28
      %s57 = sor.u32 %s55, %s56
      %p58 = scmp.eq.s32.totalorder %s57, 0
      %s60 = sadd.s32 %s59, 1
      %s61 = scalar_select %p58, %s59, %s60
      %p64 = pneg %p58
      %p65 = scmp.eq.s32.totalorder %s9, 8
      %p66 = por %p64, %p65
      %p67 = scmp.ne.s32.totalorder %s59, %s62
      %p68 = scmp.eq.s32.totalorder %s9, 0
      %p69 = por %p67, %p68
      %p70 = scmp.ne.s32.totalorder %s59, %s62
      %p71 = scmp.eq.s32.totalorder %s14, 8
      %p72 = por %p70, %p71
      %p73 = scmp.ne.s32.totalorder %s62, %s63
      %p74 = scmp.eq.s32.totalorder %s14, 0
      %p75 = por %p73, %p74
      %p76 = scmp.ne.s32.totalorder %s62, %s63
      %p77 = scmp.eq.s32.totalorder %s15, 8
      %p78 = por %p76, %p77
      %p80 = scmp.ne.s32.totalorder %s63, %s79
      %p81 = scmp.eq.s32.totalorder %s15, 0
      %p82 = por %p80, %p81
      %s84 = sadd.s32 %s83, 1
      %p87 = scmp.eq.s32.totalorder %s9, 8
      %p88 = scmp.ne.s32.totalorder %s83, %s85
      %p89 = scmp.eq.s32.totalorder %s9, 0
      %p90 = por %p88, %p89
      %p91 = scmp.ne.s32.totalorder %s83, %s85
      %p92 = scmp.eq.s32.totalorder %s14, 8
      %p93 = por %p91, %p92
      %p94 = scmp.ne.s32.totalorder %s85, %s86
      %p95 = scmp.eq.s32.totalorder %s14, 0
      %p96 = por %p94, %p95
      %p97 = scmp.ne.s32.totalorder %s85, %s86
      %p98 = scmp.eq.s32.totalorder %s15, 8
      %p99 = por %p97, %p98
      %p101 = scmp.ne.s32.totalorder %s86, %s100
      %p102 = scmp.eq.s32.totalorder %s15, 0
      %p103 = por %p101, %p102
      %s104 = ssub.s32 %s16, %s28
      %p105 = scmp.eq.s32.totalorder %s104, 0
      %s107 = sadd.s32 %s106, 1
      %s108 = scalar_select %p105, %s106, %s107
      %p111 = pneg %p105
      %p112 = scmp.eq.s32.totalorder %s9, 8
      %p113 = por %p111, %p112
      %p114 = scmp.ne.s32.totalorder %s106, %s109
      %p115 = scmp.eq.s32.totalorder %s9, 0
      %p116 = por %p114, %p115
      %p117 = scmp.ne.s32.totalorder %s106, %s109
      %p118 = scmp.eq.s32.totalorder %s14, 8
      %p119 = por %p117, %p118
      %p120 = scmp.ne.s32.totalorder %s109, %s110
      %p121 = scmp.eq.s32.totalorder %s14, 0
      %p122 = por %p120, %p121
      %p123 = scmp.ne.s32.totalorder %s109, %s110
      %p124 = scmp.eq.s32.totalorder %s15, 8
      %p125 = por %p123, %p124
      %p127 = scmp.ne.s32.totalorder %s110, %s126
      %p128 = scmp.eq.s32.totalorder %s15, 0
      %p129 = por %p127, %p128
      %p130 = scmp.le.s32.totalorder 1, %s9
      %p131 = scmp.lt.s32.totalorder %s9, 10
      %p132 = pnand %p130, %p131
      %p133 = pneg %p132
      // Predicated region
      $region9: #{discriminator_forward.5} parent=5 // pred_check
        _
      $region10: #{discriminator_forward.5} parent=5 // pred_check_branch
        %135 = sbr.rel (%p132) target = $region12
      $region11: #{discriminator_forward.5} parent=5 // pred_region
        %s136 = ssub.s32 %s9, 1
        // Predicated region
        $region13: #{discriminator_forward.5} parent=11 // pred_check
          %p137 = pneg %p47
        $region14: #{discriminator_forward.5} parent=11 // pred_check_branch
          %139 = sbr.rel (%p137) target = $region16
        $region15: #{discriminator_forward.5} parent=11 // pred_region
          %p140 = scmp.lt.s32.totalorder %s19, 0
          %s141 = scalar_select %p140, %s19, 0
          %s142 = smul.addr %s141, 4
          %s143 = scalar_lea.vmem %s0, %s142
        $region16: #{discriminator_forward.5} parent=11 // pred_fallthru
          _
        // Predicated region
        $region17: #{discriminator_forward.5} parent=11 // pred_check
          %p144 = pneg %p96
        $region18: #{discriminator_forward.5} parent=11 // pred_check_branch
          %146 = sbr.rel (%p144) target = $region20
        $region19: #{discriminator_forward.5} parent=11 // pred_region
          _
        $region20: #{discriminator_forward.5} parent=11 // pred_fallthru
          _
      $region12: #{discriminator_forward.5} parent=5 // pred_fallthru
        _
      %p147 = scmp.lt.s32.totalorder %s9, 9
      // Predicated region
      $region21: #{discriminator_forward.5} parent=5 // pred_check
        %p148 = pneg %p147
      $region22: #{discriminator_forward.5} parent=5 // pred_check_branch
        %150 = sbr.rel (%p148) target = $region24
      $region23: #{discriminator_forward.5} parent=5 // pred_region
        // Predicated region
        $region25: #{discriminator_forward.5} parent=23 // pred_check
          %p151 = pneg %p69
        $region26: #{discriminator_forward.5} parent=23 // pred_check_branch
          %153 = sbr.rel (%p151) target = $region28
        $region27: #{discriminator_forward.5} parent=23 // pred_region
          %s154 = sand.u32 %s59, 1
          %s155 = sand.u32 %s59, 1
          %s156 = smul.addr %s155, 256
          %s157 = scalar_lea.vmem [#allocation2], %s156
          %s158 = smul.u32 16, %s17
          %s159 = smul.u32 4, %s16
          %s160 = smul.addr %s158, 36
          %s161 = sadd.s32 %s159, %s160
          %s162 = smul.addr %s161, 4
          %s163 = scalar_lea.vmem %s1, %s162
          // Predicated region
          $region29: #{discriminator_forward.5} parent=27 // pred_check
            _
          $region30: #{discriminator_forward.5} parent=27 // pred_check_branch
            %165 = sbr.rel (0) target = $region32
          $region31: #{discriminator_forward.5} parent=27 // pred_region
            // Predicated region
            $region33: #{discriminator_forward.5} parent=31 // pred_check
              _
            $region34: #{discriminator_forward.5} parent=31 // pred_check_branch
              %167 = sbr.rel (0) target = $region36
            $region35: #{discriminator_forward.5} parent=31 // pred_region
              loop: start=0, step=1, limit=1
              $region37: #{discriminator_forward.5} parent=35 // loop_pre_header
                _
              $region38: #{discriminator_forward.5} parent=35 // loop_header
                %s169 = sphi 0, %s173
                %p170 = scmp.ge.s32.totalorder %s169, 1
                %s174 = sphi %s163, %s163
                %s175 = sphi %s157, %s157
              $region39: #{discriminator_forward.5} parent=35 // loop_header_branch
                %172 = sbr.rel (%p170) target = $region43
              $region40: #{discriminator_forward.5} parent=35 // loop_body
                %v176 = vld [vmem:[%s174] sm:$0xff]
                %177 = vst [vmem:[%s175] sm:$0xff] %v176
                %v178 = vld [vmem:[%s174 + $0x8] sm:$0xff]
                %179 = vst [vmem:[%s175 + $0x8] sm:$0xff] %v178
                %v180 = vld [vmem:[%s174 + $0x90] sm:$0xff]
                %181 = vst [vmem:[%s175 + $0x10] sm:$0xff] %v180
                %v182 = vld [vmem:[%s174 + $0x98] sm:$0xff]
                %183 = vst [vmem:[%s175 + $0x18] sm:$0xff] %v182
                %v184 = vld [vmem:[%s174 + $0x120] sm:$0xff]
                %185 = vst [vmem:[%s175 + $0x20] sm:$0xff] %v184
                %v186 = vld [vmem:[%s174 + $0x128] sm:$0xff]
                %187 = vst [vmem:[%s175 + $0x28] sm:$0xff] %v186
                %v188 = vld [vmem:[%s174 + $0x1b0] sm:$0xff]
                %189 = vst [vmem:[%s175 + $0x30] sm:$0xff] %v188
                %v190 = vld [vmem:[%s174 + $0x1b8] sm:$0xff]
                %191 = vst [vmem:[%s175 + $0x38] sm:$0xff] %v190
                %v192 = vld [vmem:[%s174 + $0x240] sm:$0xff]
                %193 = vst [vmem:[%s175 + $0x40] sm:$0xff] %v192
                %v194 = vld [vmem:[%s174 + $0x248] sm:$0xff]
                %195 = vst [vmem:[%s175 + $0x48] sm:$0xff] %v194
                %v196 = vld [vmem:[%s174 + $0x2d0] sm:$0xff]
                %197 = vst [vmem:[%s175 + $0x50] sm:$0xff] %v196
                %v198 = vld [vmem:[%s174 + $0x2d8] sm:$0xff]
                %199 = vst [vmem:[%s175 + $0x58] sm:$0xff] %v198
                %v200 = vld [vmem:[%s174 + $0x360] sm:$0xff]
                %201 = vst [vmem:[%s175 + $0x60] sm:$0xff] %v200
                %v202 = vld [vmem:[%s174 + $0x368] sm:$0xff]
                %203 = vst [vmem:[%s175 + $0x68] sm:$0xff] %v202
                %v204 = vld [vmem:[%s174 + $0x3f0] sm:$0xff]
                %205 = vst [vmem:[%s175 + $0x70] sm:$0xff] %v204
                %v206 = vld [vmem:[%s174 + $0x3f8] sm:$0xff]
                %207 = vst [vmem:[%s175 + $0x78] sm:$0xff] %v206
                %v208 = vld [vmem:[%s174 + $0x480] sm:$0xff]
                %209 = vst [vmem:[%s175 + $0x80] sm:$0xff] %v208
                %v210 = vld [vmem:[%s174 + $0x488] sm:$0xff]
                %211 = vst [vmem:[%s175 + $0x88] sm:$0xff] %v210
                %v212 = vld [vmem:[%s174 + $0x510] sm:$0xff]
                %213 = vst [vmem:[%s175 + $0x90] sm:$0xff] %v212
                %v214 = vld [vmem:[%s174 + $0x518] sm:$0xff]
                %215 = vst [vmem:[%s175 + $0x98] sm:$0xff] %v214
                %v216 = vld [vmem:[%s174 + $0x5a0] sm:$0xff]
                %217 = vst [vmem:[%s175 + $0xa0] sm:$0xff] %v216
                %v218 = vld [vmem:[%s174 + $0x5a8] sm:$0xff]
                %219 = vst [vmem:[%s175 + $0xa8] sm:$0xff] %v218
                %v220 = vld [vmem:[%s174 + $0x630] sm:$0xff]
                %221 = vst [vmem:[%s175 + $0xb0] sm:$0xff] %v220
                %v222 = vld [vmem:[%s174 + $0x638] sm:$0xff]
                %223 = vst [vmem:[%s175 + $0xb8] sm:$0xff] %v222
                %v224 = vld [vmem:[%s174 + $0x6c0] sm:$0xff]
                %225 = vst [vmem:[%s175 + $0xc0] sm:$0xff] %v224
                %v226 = vld [vmem:[%s174 + $0x6c8] sm:$0xff]
                %227 = vst [vmem:[%s175 + $0xc8] sm:$0xff] %v226
                %v228 = vld [vmem:[%s174 + $0x750] sm:$0xff]
                %229 = vst [vmem:[%s175 + $0xd0] sm:$0xff] %v228
                %v230 = vld [vmem:[%s174 + $0x758] sm:$0xff]
                %231 = vst [vmem:[%s175 + $0xd8] sm:$0xff] %v230
                %v232 = vld [vmem:[%s174 + $0x7e0] sm:$0xff]
                %233 = vst [vmem:[%s175 + $0xe0] sm:$0xff] %v232
                %v234 = vld [vmem:[%s174 + $0x7e8] sm:$0xff]
                %235 = vst [vmem:[%s175 + $0xe8] sm:$0xff] %v234
                %v236 = vld [vmem:[%s174 + $0x870] sm:$0xff]
                %237 = vst [vmem:[%s175 + $0xf0] sm:$0xff] %v236
                %v238 = vld [vmem:[%s174 + $0x878] sm:$0xff]
                %239 = vst [vmem:[%s175 + $0xf8] sm:$0xff] %v238
              $region41: #{discriminator_forward.5} parent=35 // loop_footer
                %s173 = sadd.s32 1, %s169
              $region42: #{discriminator_forward.5} parent=35 // loop_footer_branch
                %168 = sbr.rel target = $region38
              $region43: #{discriminator_forward.5} parent=35 // loop_exit
                _
            $region36: #{discriminator_forward.5} parent=31 // pred_fallthru
              _
            // Predicated region
            $region44: #{discriminator_forward.5} parent=31 // pred_check
              _
            $region45: #{discriminator_forward.5} parent=31 // pred_check_branch
              %241 = sbr.rel target = $region47
            $region46: #{discriminator_forward.5} parent=31 // pred_region
              _
            $region47: #{discriminator_forward.5} parent=31 // pred_fallthru
              _
          $region32: #{discriminator_forward.5} parent=27 // pred_fallthru
            _
          %242 = vnop
        $region28: #{discriminator_forward.5} parent=23 // pred_fallthru
          _
      $region24: #{discriminator_forward.5} parent=5 // pred_fallthru
        _
      %p243 = scmp.le.s32.totalorder 1, %s9
      %p244 = scmp.lt.s32.totalorder %s9, 10
      %p245 = pnand %p243, %p244
      %p246 = pneg %p245
      // Predicated region
      $region48: #{discriminator_forward.5} parent=5 // pred_check
        _
      $region49: #{discriminator_forward.5} parent=5 // pred_check_branch
        %248 = sbr.rel (%p245) target = $region51
      $region50: #{discriminator_forward.5} parent=5 // pred_region
        %s249 = ssub.s32 %s9, 1
        %s250 = sand.u32 %s62, 1
        %s251 = sand.u32 %s62, 1
        %s252 = smul.addr %s251, 256
        %s253 = scalar_lea.vmem [#allocation2], %s252
        // Predicated region
        $region52: #{discriminator_forward.5} parent=50 // pred_check
          %p254 = pneg %p75
        $region53: #{discriminator_forward.5} parent=50 // pred_check_branch
          %256 = sbr.rel (%p254) target = $region55
        $region54: #{discriminator_forward.5} parent=50 // pred_region
          _
        $region55: #{discriminator_forward.5} parent=50 // pred_fallthru
          _
        %p257 = scmp.lt.s32.totalorder %s19, 0
        %s258 = scalar_select %p257, %s19, 0
        %s259 = smul.addr %s258, 4
        %s260 = scalar_lea.vmem %s0, %s259
        %p261 = pneg %p47
        %p262 = pneg %p44
        %s263 = sand.u32 %s62, 1
        %s264 = sand.u32 %s62, 1
        %s265 = smul.addr %s264, 256
        %s266 = scalar_lea.vmem [#allocation2], %s265
        %p267 = pneg %p75
        %p268 = pneg %p72
        %p269 = pneg %p96
        %p270 = pneg %p93
        %p271 = pneg %p122
        %p272 = pneg %p119
        %s273 = smul.u32 4, %s18
        %p274 = scmp.lt.s32.totalorder %s273, 35
        %s275 = scalar_select %p274, %s273, 35
        %s276 = smul.addr %s275, 8
        %s277 = scalar_lea.vmem %s3, %s276
        %p278 = scmp.lt.s32.totalorder %s19, 0
        %s279 = scalar_select %p278, %s19, 0
        %s280 = smul.addr %s279, 4
        %s281 = scalar_lea.vmem %s0, %s280
        %s282 = smul.u32 16, %s19
        %s283 = smul.u32 4, %s18
        %s284 = smul.u32 4, %s18
        %p285 = scmp.lt.s32.totalorder %s284, 35
        %s286 = scalar_select %p285, %s284, 35
        %s287 = smul.addr %s286, 8
        %s288 = scalar_lea.vmem %s3, %s287
        %s289 = smul.u32 4, %s18
        %p291 = scmp.eq.s32.totalorder %s19, 0
        // Predicated region
        $region56: #{discriminator_forward.5} parent=50 // pred_check
          %p292 = pneg %p291
        $region57: #{discriminator_forward.5} parent=50 // pred_check_branch
          %294 = sbr.rel (%p292) target = $region59
        $region58: #{discriminator_forward.5} parent=50 // pred_region
          %295 = vst [vmem:[%s288] sm:$0xff] 0.0
          %296 = vst [vmem:[%s288 + $0x8] sm:$0xff] 0.0
          %297 = vst [vmem:[%s288 + $0x10] sm:$0xff] 0.0
          %298 = vst [vmem:[%s288 + $0x18] sm:$0xff] 0.0
        $region59: #{discriminator_forward.5} parent=50 // pred_fallthru
          _
        %v299 = vld [vmem:[%s288] sm:$0xff]
        %v300 = vld [vmem:[%s288 + $0x8] sm:$0xff]
        %v301 = vld [vmem:[%s288 + $0x10] sm:$0xff]
        %v302 = vld [vmem:[%s288 + $0x18] sm:$0xff]
        %v303 = vld [vmem:[%s281] sm:$0xf]
        %v304 = vld [vmem:[%s253] sm:$0xff]
        %v305 = vld [vmem:[%s253 + $0x8] sm:$0xff]
        %v306 = vld [vmem:[%s253 + $0x10] sm:$0xff]
        %v307 = vld [vmem:[%s253 + $0x18] sm:$0xff]
        %v308 = vld [vmem:[%s253 + $0x20] sm:$0xff]
        %v309 = vld [vmem:[%s253 + $0x28] sm:$0xff]
        %v310 = vld [vmem:[%s253 + $0x30] sm:$0xff]
        %v311 = vld [vmem:[%s253 + $0x38] sm:$0xff]
        %v312 = vld [vmem:[%s253 + $0x40] sm:$0xff]
        %v313 = vld [vmem:[%s253 + $0x48] sm:$0xff]
        %v314 = vld [vmem:[%s253 + $0x50] sm:$0xff]
        %v315 = vld [vmem:[%s253 + $0x58] sm:$0xff]
        %v316 = vld [vmem:[%s253 + $0x60] sm:$0xff]
        %v317 = vld [vmem:[%s253 + $0x68] sm:$0xff]
        %v318 = vld [vmem:[%s253 + $0x70] sm:$0xff]
        %v319 = vld [vmem:[%s253 + $0x78] sm:$0xff]
        %v320 = vld [vmem:[%s253 + $0x80] sm:$0xff]
        %v321 = vld [vmem:[%s253 + $0x88] sm:$0xff]
        %v322 = vld [vmem:[%s253 + $0x90] sm:$0xff]
        %v323 = vld [vmem:[%s253 + $0x98] sm:$0xff]
        %v324 = vld [vmem:[%s253 + $0xa0] sm:$0xff]
        %v325 = vld [vmem:[%s253 + $0xa8] sm:$0xff]
        %v326 = vld [vmem:[%s253 + $0xb0] sm:$0xff]
        %v327 = vld [vmem:[%s253 + $0xb8] sm:$0xff]
        %v328 = vld [vmem:[%s253 + $0xc0] sm:$0xff]
        %v329 = vld [vmem:[%s253 + $0xc8] sm:$0xff]
        %v330 = vld [vmem:[%s253 + $0xd0] sm:$0xff]
        %v331 = vld [vmem:[%s253 + $0xd8] sm:$0xff]
        %v332 = vld [vmem:[%s253 + $0xe0] sm:$0xff]
        %v333 = vld [vmem:[%s253 + $0xe8] sm:$0xff]
        %v334 = vld [vmem:[%s253 + $0xf0] sm:$0xff]
        %v335 = vld [vmem:[%s253 + $0xf8] sm:$0xff]
        %v368 = vunpack.c.l.b16 %v304
        %v369 = vunpack.c.h.b16 %v304
        %v370 = vunpack.c.l.b16 %v305
        %v371 = vunpack.c.h.b16 %v305
        %v372 = vunpack.c.l.b16 %v306
        %v373 = vunpack.c.h.b16 %v306
        %v374 = vunpack.c.l.b16 %v307
        %v375 = vunpack.c.h.b16 %v307
        %v376 = vunpack.c.l.b16 %v308
        %v377 = vunpack.c.h.b16 %v308
        %v378 = vunpack.c.l.b16 %v309
        %v379 = vunpack.c.h.b16 %v309
        %v380 = vunpack.c.l.b16 %v310
        %v381 = vunpack.c.h.b16 %v310
        %v382 = vunpack.c.l.b16 %v311
        %v383 = vunpack.c.h.b16 %v311
        %v384 = vunpack.c.l.b16 %v312
        %v385 = vunpack.c.h.b16 %v312
        %v386 = vunpack.c.l.b16 %v313
        %v387 = vunpack.c.h.b16 %v313
        %v388 = vunpack.c.l.b16 %v314
        %v389 = vunpack.c.h.b16 %v314
        %v390 = vunpack.c.l.b16 %v315
        %v391 = vunpack.c.h.b16 %v315
        %v392 = vunpack.c.l.b16 %v316
        %v393 = vunpack.c.h.b16 %v316
        %v394 = vunpack.c.l.b16 %v317
        %v395 = vunpack.c.h.b16 %v317
        %v396 = vunpack.c.l.b16 %v318
        %v397 = vunpack.c.h.b16 %v318
        %v398 = vunpack.c.l.b16 %v319
        %v399 = vunpack.c.h.b16 %v319
        %v400 = vunpack.c.l.b16 %v320
        %v401 = vunpack.c.h.b16 %v320
        %v402 = vunpack.c.l.b16 %v321
        %v403 = vunpack.c.h.b16 %v321
        %v404 = vunpack.c.l.b16 %v322
        %v405 = vunpack.c.h.b16 %v322
        %v406 = vunpack.c.l.b16 %v323
        %v407 = vunpack.c.h.b16 %v323
        %v408 = vunpack.c.l.b16 %v324
        %v409 = vunpack.c.h.b16 %v324
        %v410 = vunpack.c.l.b16 %v325
        %v411 = vunpack.c.h.b16 %v325
        %v412 = vunpack.c.l.b16 %v326
        %v413 = vunpack.c.h.b16 %v326
        %v414 = vunpack.c.l.b16 %v327
        %v415 = vunpack.c.h.b16 %v327
        %v416 = vunpack.c.l.b16 %v328
        %v417 = vunpack.c.h.b16 %v328
        %v418 = vunpack.c.l.b16 %v329
        %v419 = vunpack.c.h.b16 %v329
        %v420 = vunpack.c.l.b16 %v330
        %v421 = vunpack.c.h.b16 %v330
        %v422 = vunpack.c.l.b16 %v331
        %v423 = vunpack.c.h.b16 %v331
        %v424 = vunpack.c.l.b16 %v332
        %v425 = vunpack.c.h.b16 %v332
        %v426 = vunpack.c.l.b16 %v333
        %v427 = vunpack.c.h.b16 %v333
        %v428 = vunpack.c.l.b16 %v334
        %v429 = vunpack.c.h.b16 %v334
        %v430 = vunpack.c.l.b16 %v335
        %v431 = vunpack.c.h.b16 %v335
        %v432 = vpack.c.b16 %v372, %v368
        %v433 = vpack.c.b16 %v373, %v369
        %v434 = vpack.c.b16 %v374, %v370
        %v435 = vpack.c.b16 %v375, %v371
        %v436 = vpack.c.b16 %v380, %v376
        %v437 = vpack.c.b16 %v381, %v377
        %v438 = vpack.c.b16 %v382, %v378
        %v439 = vpack.c.b16 %v383, %v379
        %v440 = vpack.c.b16 %v388, %v384
        %v441 = vpack.c.b16 %v389, %v385
        %v442 = vpack.c.b16 %v390, %v386
        %v443 = vpack.c.b16 %v391, %v387
        %v444 = vpack.c.b16 %v396, %v392
        %v445 = vpack.c.b16 %v397, %v393
        %v446 = vpack.c.b16 %v398, %v394
        %v447 = vpack.c.b16 %v399, %v395
        %v448 = vpack.c.b16 %v404, %v400
        %v449 = vpack.c.b16 %v405, %v401
        %v450 = vpack.c.b16 %v406, %v402
        %v451 = vpack.c.b16 %v407, %v403
        %v452 = vpack.c.b16 %v412, %v408
        %v453 = vpack.c.b16 %v413, %v409
        %v454 = vpack.c.b16 %v414, %v410
        %v455 = vpack.c.b16 %v415, %v411
        %v456 = vpack.c.b16 %v420, %v416
        %v457 = vpack.c.b16 %v421, %v417
        %v458 = vpack.c.b16 %v422, %v418
        %v459 = vpack.c.b16 %v423, %v419
        %v460 = vpack.c.b16 %v428, %v424
        %v461 = vpack.c.b16 %v429, %v425
        %v462 = vpack.c.b16 %v430, %v426
        %v463 = vpack.c.b16 %v431, %v427
        %496 = vmatprep.subr.bf16.mxu0 %v433
        %497 = vmatpush1.bf16.msra.mxu0 %v432
        %498 = vmatprep.subr.bf16.mxu0 %v437
        %499 = vmatpush1.bf16.msra.mxu0 %v436
        %500 = vmatprep.subr.bf16.mxu0 %v441
        %501 = vmatpush1.bf16.msra.mxu0 %v440
        %502 = vmatprep.subr.bf16.mxu0 %v445
        %503 = vmatpush1.bf16.msra.mxu0 %v444
        %504 = vmatprep.subr.bf16.mxu0 %v449
        %505 = vmatpush1.bf16.msra.mxu0 %v448
        %506 = vmatprep.subr.bf16.mxu0 %v453
        %507 = vmatpush1.bf16.msra.mxu0 %v452
        %508 = vmatprep.subr.bf16.mxu0 %v457
        %509 = vmatpush1.bf16.msra.mxu0 %v456
        %510 = vmatprep.subr.bf16.mxu0 %v461
        %511 = vmatpush1.bf16.msra.mxu0 %v460
        %512 = vmatprep.subr.bf16.mxu0 0
        %513 = vmatpush1.bf16.msra.mxu0 0
        %514 = vmatprep.subr.bf16.mxu0 0
        %515 = vmatpush1.bf16.msra.mxu0 0
        %516 = vmatprep.subr.bf16.mxu0 0
        %517 = vmatpush1.bf16.msra.mxu0 0
        %518 = vmatprep.subr.bf16.mxu0 0
        %519 = vmatpush1.bf16.msra.mxu0 0
        %520 = vmatprep.subr.bf16.mxu0 0
        %521 = vmatpush1.bf16.msra.mxu0 0
        %522 = vmatprep.subr.bf16.mxu0 0
        %523 = vmatpush1.bf16.msra.mxu0 0
        %524 = vmatprep.subr.bf16.mxu0 0
        %525 = vmatpush1.bf16.msra.mxu0 0
        %526 = vmatprep.subr.bf16.mxu0 0
        %527 = vmatpush1.bf16.msra.mxu0 0
        %528 = vmatprep.mubr.bf16.mxu0 0
        %529 = vmatmul.mubr.bf16.gmra.mrb[0].mxu0 %v303
        %v530 = vpop.f32.mrb[0].mxu0
        %v531 = vadd.f32 0.0, %v530
        %v532 = vpop.f32.mrb[0].mxu0
        %v533 = vadd.f32 0.0, %v532
        %v534 = vpop.f32.mrb[0].mxu0
        %v535 = vpop.f32.mrb[0].mxu0
        %536 = vdwg.mxu0
        %537 = vmatprep.subr.bf16.mxu0 %v435
        %538 = vmatpush1.bf16.msra.mxu0 %v434
        %539 = vmatprep.subr.bf16.mxu0 %v439
        %540 = vmatpush1.bf16.msra.mxu0 %v438
        %541 = vmatprep.subr.bf16.mxu0 %v443
        %542 = vmatpush1.bf16.msra.mxu0 %v442
        %543 = vmatprep.subr.bf16.mxu0 %v447
        %544 = vmatpush1.bf16.msra.mxu0 %v446
        %545 = vmatprep.subr.bf16.mxu0 %v451
        %546 = vmatpush1.bf16.msra.mxu0 %v450
        %547 = vmatprep.subr.bf16.mxu0 %v455
        %548 = vmatpush1.bf16.msra.mxu0 %v454
        %549 = vmatprep.subr.bf16.mxu0 %v459
        %550 = vmatpush1.bf16.msra.mxu0 %v458
        %551 = vmatprep.subr.bf16.mxu0 %v463
        %552 = vmatpush1.bf16.msra.mxu0 %v462
        %553 = vmatprep.subr.bf16.mxu0 0
        %554 = vmatpush1.bf16.msra.mxu0 0
        %555 = vmatprep.subr.bf16.mxu0 0
        %556 = vmatpush1.bf16.msra.mxu0 0
        %557 = vmatprep.subr.bf16.mxu0 0
        %558 = vmatpush1.bf16.msra.mxu0 0
        %559 = vmatprep.subr.bf16.mxu0 0
        %560 = vmatpush1.bf16.msra.mxu0 0
        %561 = vmatprep.subr.bf16.mxu0 0
        %562 = vmatpush1.bf16.msra.mxu0 0
        %563 = vmatprep.subr.bf16.mxu0 0
        %564 = vmatpush1.bf16.msra.mxu0 0
        %565 = vmatprep.subr.bf16.mxu0 0
        %566 = vmatpush1.bf16.msra.mxu0 0
        %567 = vmatprep.subr.bf16.mxu0 0
        %568 = vmatpush1.bf16.msra.mxu0 0
        %569 = vmatprep.mubr.bf16.mxu0 0
        %570 = vmatmul.mubr.bf16.gmra.mrb[0].mxu0 %v303
        %v571 = vpop.f32.mrb[0].mxu0
        %v572 = vadd.f32 0.0, %v571
        %v573 = vpop.f32.mrb[0].mxu0
        %v574 = vadd.f32 0.0, %v573
        %v575 = vpop.f32.mrb[0].mxu0
        %v576 = vpop.f32.mrb[0].mxu0
        %577 = vdwg.mxu0
        %v578 = vadd.f32 %v299, %v531
        %v579 = vadd.f32 %v300, %v533
        %v580 = vadd.f32 %v301, %v572
        %v581 = vadd.f32 %v302, %v574
        %582 = vst [vmem:[%s288] sm:$0xff] %v578
        %583 = vst [vmem:[%s288 + $0x8] sm:$0xff] %v579
        %584 = vst [vmem:[%s288 + $0x10] sm:$0xff] %v580
        %585 = vst [vmem:[%s288 + $0x18] sm:$0xff] %v581
        // Predicated region
        $region60: #{discriminator_forward.5} parent=50 // pred_check
          %p586 = pneg %p291
        $region61: #{discriminator_forward.5} parent=50 // pred_check_branch
          %588 = sbr.rel (%p586) target = $region63
        $region62: #{discriminator_forward.5} parent=50 // pred_region
          %v589 = vld [vmem:[%s288] sm:$0xff]
          %v590 = vld [vmem:[%s288 + $0x8] sm:$0xff]
          %v591 = vld [vmem:[%s288 + $0x10] sm:$0xff]
          %v592 = vld [vmem:[%s288 + $0x18] sm:$0xff]
          %v593 = vld [vmem:[%s2] sm:$0xff]
          %595 = vset.pattern.permute.xlu0 0
          %596 = vperm.xlu0 %595, %v593
          %v597 = vpop.permute.xlu0 %596
          %v599 = vadd.f32 %v589, %v597
          %v600 = vadd.f32 %v590, %v597
          %v601 = vadd.f32 %v591, %v597
          %v602 = vadd.f32 %v592, %v597
          %603 = vst [vmem:[%s288] sm:$0xff] %v599
          %604 = vst [vmem:[%s288 + $0x8] sm:$0xff] %v600
          %605 = vst [vmem:[%s288 + $0x10] sm:$0xff] %v601
          %606 = vst [vmem:[%s288 + $0x18] sm:$0xff] %v602
        $region63: #{discriminator_forward.5} parent=50 // pred_fallthru
          _
        %s607 = smul.u32 4, %s18
        %p608 = scmp.lt.s32.totalorder %s607, 35
        %s609 = scalar_select %p608, %s607, 35
        %s610 = smul.addr %s609, 8
        %s611 = scalar_lea.vmem %s3, %s610
        // Predicated region
        $region64: #{discriminator_forward.5} parent=50 // pred_check
          %p612 = pneg %p119
        $region65: #{discriminator_forward.5} parent=50 // pred_check_branch
          %614 = sbr.rel (%p612) target = $region67
        $region66: #{discriminator_forward.5} parent=50 // pred_region
          %s615 = smul.u32 4, %s18
        $region67: #{discriminator_forward.5} parent=50 // pred_fallthru
          _
      $region51: #{discriminator_forward.5} parent=5 // pred_fallthru
        _
      %p616 = scmp.le.s32.totalorder 2, %s9
      // Predicated region
      $region68: #{discriminator_forward.5} parent=5 // pred_check
        %p617 = pneg %p616
      $region69: #{discriminator_forward.5} parent=5 // pred_check_branch
        %619 = sbr.rel (%p617) target = $region71
      $region70: #{discriminator_forward.5} parent=5 // pred_region
        %s620 = ssub.s32 %s9, 2
        // Predicated region
        $region72: #{discriminator_forward.5} parent=70 // pred_check
          %p621 = pneg %p125
        $region73: #{discriminator_forward.5} parent=70 // pred_check_branch
          %623 = sbr.rel (%p621) target = $region75
        $region74: #{discriminator_forward.5} parent=70 // pred_region
          %s624 = smul.u32 4, %s20
          %p625 = scmp.lt.s32.totalorder %s624, 35
          %s626 = scalar_select %p625, %s624, 35
          %s627 = smul.addr %s626, 8
          %s628 = scalar_lea.vmem %s3, %s627
        $region75: #{discriminator_forward.5} parent=70 // pred_fallthru
          _
      $region71: #{discriminator_forward.5} parent=5 // pred_fallthru
        _
    $region6: #{discriminator_forward.5} parent=1 // loop_footer
      %s13 = sadd.s32 1, %s9
    $region7: #{discriminator_forward.5} parent=1 // loop_footer_branch
      %8 = sbr.rel target = $region3
    $region8: #{discriminator_forward.5} parent=1 // loop_exit
      _

// kernel: discriminator_forward.6
$region0: #{discriminator_forward.6}
  #allocation0 [shape = 'u32[]', space=smem, size = 0x4, offset = 0x4, fixed_abs, tag = 'smem constant byte address 0x4 - core index']
  #allocation1 [shape = 'u32[144,128]{1,0:T(1,128)}', space=vmem, size = 0x12000, scoped, tag = 'internal scratch']
  %s0 = inlined_call_operand.vmem [shape: bf16[16,128], index: 0, kind: input, shape index: {}]
  %s1 = inlined_call_operand.vmem [shape: bf16[128,1152], index: 1, kind: input, shape index: {}]
  %s2 = inlined_call_operand.vmem [shape: f32[16,1], index: 2, kind: input, shape index: {}]
  %s3 = inlined_call_operand.vmem [shape: f32[16,1152], index: 3, kind: output, shape index: {0}]
  %s4 = inlined_call_operand.vmem [shape: f32[3,16,128], index: 4, kind: output, shape index: {1}]
  %s5 = inlined_call_operand.vmem [shape: f32[3,16,128], index: 5, kind: output, shape index: {2}]
  %6 = xla_tuple %s3, %s4, %s5
  %s7 = sld [smem:[#allocation0]]
  $region114: #{discriminator_forward.6} parent=0
    _
  %s9 = ssub.s32 1, %s7
  %s10 = scalar_select 0, %s9, %s7
  $region1: #{discriminator_forward.6} parent=0
    #allocation2 [shape = 'u8[196608]{0}', space=vmem, size = 0x30000, scoped, tag = 'input window, operand 1']
    #allocation3 [shape = 'u8[49152]{0}', space=vmem, size = 0xc000, scoped, tag = 'output window, operand 0']
    loop: start=0, step=1, limit=5
    $region2: #{discriminator_forward.6} parent=1 // loop_pre_header
      _
    $region3: #{discriminator_forward.6} parent=1 // loop_header
      %s12 = sphi 0, %s16
      %p13 = scmp.ge.s32.totalorder %s12, 5
      %s19 = sphi 0, %s31
      %s20 = sphi 0, %s27
      %s21 = sphi 0, %s19
      %s22 = sphi 0, %s20
      %s23 = sphi 0, %s21
      %s24 = sphi 0, %s22
      %s34 = sphi 0, %s36
      %s37 = sphi 0, %s34
      %s38 = sphi 0, %s37
      %s54 = sphi 0, %s38
      %s62 = sphi 0, %s64
      %s65 = sphi 0, %s62
      %s66 = sphi 0, %s65
      %s82 = sphi 0, %s66
      %s86 = sphi 0, %s86
      %s88 = sphi 0, %s86
      %s89 = sphi 0, %s88
      %s103 = sphi 0, %s89
      %s109 = sphi 0, %s111
      %s112 = sphi 0, %s109
      %s113 = sphi 0, %s112
      %s129 = sphi 0, %s113
      %s135 = sphi 0, %s137
      %s138 = sphi 0, %s135
      %s139 = sphi 0, %s138
      %s155 = sphi 0, %s139
      %s161 = sphi 0, %s163
      %s164 = sphi 0, %s161
      %s165 = sphi 0, %s164
      %s181 = sphi 0, %s165
    $region4: #{discriminator_forward.6} parent=1 // loop_header_branch
      %15 = sbr.rel (%p13) target = $region8
    $region5: #{discriminator_forward.6} parent=1 // loop_body
      %s17 = ssub.s32 %s12, 1
      %s18 = ssub.s32 %s12, 2
      %s25 = sadd.s32 1, %s20
      %p26 = scmp.ge.s32.totalorder %s25, 1
      %s27 = scalar_select %p26, 0, %s25
      %s28 = sadd.s32 1, %s19
      %s29 = scalar_select %p26, %s28, %s19
      %p30 = scmp.ge.s32.totalorder %s29, 3
      %s31 = scalar_select %p30, 0, %s29
      %s32 = ssub.s32 %s20, %s27
      %p33 = scmp.eq.s32.totalorder %s32, 0
      %s35 = sadd.s32 %s34, 1
      %s36 = scalar_select %p33, %s34, %s35
      %p39 = pneg %p33
      %p40 = scmp.eq.s32.totalorder %s12, 2
      %p41 = por %p39, %p40
      %p42 = scmp.ne.s32.totalorder %s34, %s37
      %p43 = scmp.eq.s32.totalorder %s12, 0
      %p44 = por %p42, %p43
      %p45 = scmp.ne.s32.totalorder %s34, %s37
      %p46 = scmp.eq.s32.totalorder %s17, 2
      %p47 = por %p45, %p46
      %p48 = scmp.ne.s32.totalorder %s37, %s38
      %p49 = scmp.eq.s32.totalorder %s17, 0
      %p50 = por %p48, %p49
      %p51 = scmp.ne.s32.totalorder %s37, %s38
      %p52 = scmp.eq.s32.totalorder %s18, 2
      %p53 = por %p51, %p52
      %p55 = scmp.ne.s32.totalorder %s38, %s54
      %p56 = scmp.eq.s32.totalorder %s18, 0
      %p57 = por %p55, %p56
      %s58 = ssub.s32 %s20, %s27
      %s59 = ssub.s32 %s19, %s31
      %s60 = sor.u32 %s58, %s59
      %p61 = scmp.eq.s32.totalorder %s60, 0
      %s63 = sadd.s32 %s62, 1
      %s64 = scalar_select %p61, %s62, %s63
      %p67 = pneg %p61
      %p68 = scmp.eq.s32.totalorder %s12, 2
      %p69 = por %p67, %p68
      %p70 = scmp.ne.s32.totalorder %s62, %s65
      %p71 = scmp.eq.s32.totalorder %s12, 0
      %p72 = por %p70, %p71
      %p73 = scmp.ne.s32.totalorder %s62, %s65
      %p74 = scmp.eq.s32.totalorder %s17, 2
      %p75 = por %p73, %p74
      %p76 = scmp.ne.s32.totalorder %s65, %s66
      %p77 = scmp.eq.s32.totalorder %s17, 0
      %p78 = por %p76, %p77
      %p79 = scmp.ne.s32.totalorder %s65, %s66
      %p80 = scmp.eq.s32.totalorder %s18, 2
      %p81 = por %p79, %p80
      %p83 = scmp.ne.s32.totalorder %s66, %s82
      %p84 = scmp.eq.s32.totalorder %s18, 0
      %p85 = por %p83, %p84
      %s87 = sadd.s32 %s86, 1
      %p90 = scmp.eq.s32.totalorder %s12, 2
      %p91 = scmp.ne.s32.totalorder %s86, %s88
      %p92 = scmp.eq.s32.totalorder %s12, 0
      %p93 = por %p91, %p92
      %p94 = scmp.ne.s32.totalorder %s86, %s88
      %p95 = scmp.eq.s32.totalorder %s17, 2
      %p96 = por %p94, %p95
      %p97 = scmp.ne.s32.totalorder %s88, %s89
      %p98 = scmp.eq.s32.totalorder %s17, 0
      %p99 = por %p97, %p98
      %p100 = scmp.ne.s32.totalorder %s88, %s89
      %p101 = scmp.eq.s32.totalorder %s18, 2
      %p102 = por %p100, %p101
      %p104 = scmp.ne.s32.totalorder %s89, %s103
      %p105 = scmp.eq.s32.totalorder %s18, 0
      %p106 = por %p104, %p105
      %s107 = ssub.s32 %s19, %s31
      %p108 = scmp.eq.s32.totalorder %s107, 0
      %s110 = sadd.s32 %s109, 1
      %s111 = scalar_select %p108, %s109, %s110
      %p114 = pneg %p108
      %p115 = scmp.eq.s32.totalorder %s12, 2
      %p116 = por %p114, %p115
      %p117 = scmp.ne.s32.totalorder %s109, %s112
      %p118 = scmp.eq.s32.totalorder %s12, 0
      %p119 = por %p117, %p118
      %p120 = scmp.ne.s32.totalorder %s109, %s112
      %p121 = scmp.eq.s32.totalorder %s17, 2
      %p122 = por %p120, %p121
      %p123 = scmp.ne.s32.totalorder %s112, %s113
      %p124 = scmp.eq.s32.totalorder %s17, 0
      %p125 = por %p123, %p124
      %p126 = scmp.ne.s32.totalorder %s112, %s113
      %p127 = scmp.eq.s32.totalorder %s18, 2
      %p128 = por %p126, %p127
      %p130 = scmp.ne.s32.totalorder %s113, %s129
      %p131 = scmp.eq.s32.totalorder %s18, 0
      %p132 = por %p130, %p131
      %s133 = ssub.s32 %s19, %s31
      %p134 = scmp.eq.s32.totalorder %s133, 0
      %s136 = sadd.s32 %s135, 1
      %s137 = scalar_select %p134, %s135, %s136
      %p140 = pneg %p134
      %p141 = scmp.eq.s32.totalorder %s12, 2
      %p142 = por %p140, %p141
      %p143 = scmp.ne.s32.totalorder %s135, %s138
      %p144 = scmp.eq.s32.totalorder %s12, 0
      %p145 = por %p143, %p144
      %p146 = scmp.ne.s32.totalorder %s135, %s138
      %p147 = scmp.eq.s32.totalorder %s17, 2
      %p148 = por %p146, %p147
      %p149 = scmp.ne.s32.totalorder %s138, %s139
      %p150 = scmp.eq.s32.totalorder %s17, 0
      %p151 = por %p149, %p150
      %p152 = scmp.ne.s32.totalorder %s138, %s139
      %p153 = scmp.eq.s32.totalorder %s18, 2
      %p154 = por %p152, %p153
      %p156 = scmp.ne.s32.totalorder %s139, %s155
      %p157 = scmp.eq.s32.totalorder %s18, 0
      %p158 = por %p156, %p157
      %s159 = ssub.s32 %s19, %s31
      %p160 = scmp.eq.s32.totalorder %s159, 0
      %s162 = sadd.s32 %s161, 1
      %s163 = scalar_select %p160, %s161, %s162
      %p166 = pneg %p160
      %p167 = scmp.eq.s32.totalorder %s12, 2
      %p168 = por %p166, %p167
      %p169 = scmp.ne.s32.totalorder %s161, %s164
      %p170 = scmp.eq.s32.totalorder %s12, 0
      %p171 = por %p169, %p170
      %p172 = scmp.ne.s32.totalorder %s161, %s164
      %p173 = scmp.eq.s32.totalorder %s17, 2
      %p174 = por %p172, %p173
      %p175 = scmp.ne.s32.totalorder %s164, %s165
      %p176 = scmp.eq.s32.totalorder %s17, 0
      %p177 = por %p175, %p176
      %p178 = scmp.ne.s32.totalorder %s164, %s165
      %p179 = scmp.eq.s32.totalorder %s18, 2
      %p180 = por %p178, %p179
      %p182 = scmp.ne.s32.totalorder %s165, %s181
      %p183 = scmp.eq.s32.totalorder %s18, 0
      %p184 = por %p182, %p183
      %p185 = scmp.le.s32.totalorder 1, %s12
      %p186 = scmp.lt.s32.totalorder %s12, 4
      %p187 = pnand %p185, %p186
      %p188 = pneg %p187
      // Predicated region
      $region9: #{discriminator_forward.6} parent=5 // pred_check
        _
      $region10: #{discriminator_forward.6} parent=5 // pred_check_branch
        %190 = sbr.rel (%p187) target = $region12
      $region11: #{discriminator_forward.6} parent=5 // pred_region
        %s191 = ssub.s32 %s12, 1
        // Predicated region
        $region13: #{discriminator_forward.6} parent=11 // pred_check
          %p192 = pneg %p50
        $region14: #{discriminator_forward.6} parent=11 // pred_check_branch
          %194 = sbr.rel (%p192) target = $region16
        $region15: #{discriminator_forward.6} parent=11 // pred_region
          %p195 = scmp.lt.s32.totalorder %s22, 0
          %s196 = scalar_select %p195, %s22, 0
          %s197 = smul.addr %s196, 4
          %s198 = scalar_lea.vmem %s0, %s197
        $region16: #{discriminator_forward.6} parent=11 // pred_fallthru
          _
        // Predicated region
        $region17: #{discriminator_forward.6} parent=11 // pred_check
          %p199 = pneg %p99
        $region18: #{discriminator_forward.6} parent=11 // pred_check_branch
          %201 = sbr.rel (%p199) target = $region20
        $region19: #{discriminator_forward.6} parent=11 // pred_region
          _
        $region20: #{discriminator_forward.6} parent=11 // pred_fallthru
          _
      $region12: #{discriminator_forward.6} parent=5 // pred_fallthru
        _
      %p202 = scmp.lt.s32.totalorder %s12, 3
      // Predicated region
      $region21: #{discriminator_forward.6} parent=5 // pred_check
        %p203 = pneg %p202
      $region22: #{discriminator_forward.6} parent=5 // pred_check_branch
        %205 = sbr.rel (%p203) target = $region24
      $region23: #{discriminator_forward.6} parent=5 // pred_region
        // Predicated region
        $region25: #{discriminator_forward.6} parent=23 // pred_check
          %p206 = pneg %p72
        $region26: #{discriminator_forward.6} parent=23 // pred_check_branch
          %208 = sbr.rel (%p206) target = $region28
        $region27: #{discriminator_forward.6} parent=23 // pred_region
          %s209 = sand.u32 %s62, 1
          %s210 = sand.u32 %s62, 1
          %s211 = smul.addr %s210, 192
          %s212 = scalar_lea.vmem [#allocation2], %s211
          %s213 = smul.u32 16, %s20
          %s214 = smul.u32 3, %s19
          %s215 = smul.addr %s213, 9
          %s216 = sadd.s32 %s214, %s215
          %s217 = smul.addr %s216, 4
          %s218 = scalar_lea.vmem %s1, %s217
          // Predicated region
          $region29: #{discriminator_forward.6} parent=27 // pred_check
            _
          $region30: #{discriminator_forward.6} parent=27 // pred_check_branch
            %220 = sbr.rel (0) target = $region32
          $region31: #{discriminator_forward.6} parent=27 // pred_region
            // Predicated region
            $region33: #{discriminator_forward.6} parent=31 // pred_check
              _
            $region34: #{discriminator_forward.6} parent=31 // pred_check_branch
              %222 = sbr.rel (0) target = $region36
            $region35: #{discriminator_forward.6} parent=31 // pred_region
              %s223 = scalar_lea.vmem %s218, 8
              %s224 = scalar_lea.vmem %s212, 8 [#allocation2]
              loop: start=0, step=1, limit=1
              $region37: #{discriminator_forward.6} parent=35 // loop_pre_header
                _
              $region38: #{discriminator_forward.6} parent=35 // loop_header
                %s226 = sphi 0, %s230
                %p227 = scmp.ge.s32.totalorder %s226, 1
                %s231 = sphi %s218, %s218
                %s232 = sphi %s212, %s212
              $region39: #{discriminator_forward.6} parent=35 // loop_header_branch
                %229 = sbr.rel (%p227) target = $region43
              $region40: #{discriminator_forward.6} parent=35 // loop_body
                %v233 = vld [vmem:[%s231] sm:$0xff]
                %234 = vst [vmem:[%s232] sm:$0xff] %v233
                %v235 = vld [vmem:[%s231 + $0x24] sm:$0xff]
                %236 = vst [vmem:[%s232 + $0xc] sm:$0xff] %v235
                %v237 = vld [vmem:[%s231 + $0x48] sm:$0xff]
                %238 = vst [vmem:[%s232 + $0x18] sm:$0xff] %v237
                %v239 = vld [vmem:[%s231 + $0x6c] sm:$0xff]
                %240 = vst [vmem:[%s232 + $0x24] sm:$0xff] %v239
                %v241 = vld [vmem:[%s231 + $0x90] sm:$0xff]
                %242 = vst [vmem:[%s232 + $0x30] sm:$0xff] %v241
                %v243 = vld [vmem:[%s231 + $0xb4] sm:$0xff]
                %244 = vst [vmem:[%s232 + $0x3c] sm:$0xff] %v243
                %v245 = vld [vmem:[%s231 + $0xd8] sm:$0xff]
                %246 = vst [vmem:[%s232 + $0x48] sm:$0xff] %v245
                %v247 = vld [vmem:[%s231 + $0xfc] sm:$0xff]
                %248 = vst [vmem:[%s232 + $0x54] sm:$0xff] %v247
                %v249 = vld [vmem:[%s231 + $0x120] sm:$0xff]
                %250 = vst [vmem:[%s232 + $0x60] sm:$0xff] %v249
                %v251 = vld [vmem:[%s231 + $0x144] sm:$0xff]
                %252 = vst [vmem:[%s232 + $0x6c] sm:$0xff] %v251
                %v253 = vld [vmem:[%s231 + $0x168] sm:$0xff]
                %254 = vst [vmem:[%s232 + $0x78] sm:$0xff] %v253
                %v255 = vld [vmem:[%s231 + $0x18c] sm:$0xff]
                %256 = vst [vmem:[%s232 + $0x84] sm:$0xff] %v255
                %v257 = vld [vmem:[%s231 + $0x1b0] sm:$0xff]
                %258 = vst [vmem:[%s232 + $0x90] sm:$0xff] %v257
                %v259 = vld [vmem:[%s231 + $0x1d4] sm:$0xff]
                %260 = vst [vmem:[%s232 + $0x9c] sm:$0xff] %v259
                %v261 = vld [vmem:[%s231 + $0x1f8] sm:$0xff]
                %262 = vst [vmem:[%s232 + $0xa8] sm:$0xff] %v261
                %v263 = vld [vmem:[%s231 + $0x21c] sm:$0xff]
                %264 = vst [vmem:[%s232 + $0xb4] sm:$0xff] %v263
              $region41: #{discriminator_forward.6} parent=35 // loop_footer
                %s230 = sadd.s32 1, %s226
              $region42: #{discriminator_forward.6} parent=35 // loop_footer_branch
                %225 = sbr.rel target = $region38
              $region43: #{discriminator_forward.6} parent=35 // loop_exit
                _
              loop: start=0, step=1, limit=1
              $region44: #{discriminator_forward.6} parent=35 // loop_pre_header
                _
              $region45: #{discriminator_forward.6} parent=35 // loop_header
                %s267 = sphi 0, %s271
                %p268 = scmp.ge.s32.totalorder %s267, 1
                %s272 = sphi %s223, %s223
                %s273 = sphi %s224, %s224
              $region46: #{discriminator_forward.6} parent=35 // loop_header_branch
                %270 = sbr.rel (%p268) target = $region50
              $region47: #{discriminator_forward.6} parent=35 // loop_body
                %v274 = vld [vmem:[%s272] sm:$0xf]
                %275 = vst [vmem:[%s273] sm:$0xf] %v274
                %v276 = vld [vmem:[%s272 + $0x24] sm:$0xf]
                %277 = vst [vmem:[%s273 + $0xc] sm:$0xf] %v276
                %v278 = vld [vmem:[%s272 + $0x48] sm:$0xf]
                %279 = vst [vmem:[%s273 + $0x18] sm:$0xf] %v278
                %v280 = vld [vmem:[%s272 + $0x6c] sm:$0xf]
                %281 = vst [vmem:[%s273 + $0x24] sm:$0xf] %v280
                %v282 = vld [vmem:[%s272 + $0x90] sm:$0xf]
                %283 = vst [vmem:[%s273 + $0x30] sm:$0xf] %v282
                %v284 = vld [vmem:[%s272 + $0xb4] sm:$0xf]
                %285 = vst [vmem:[%s273 + $0x3c] sm:$0xf] %v284
                %v286 = vld [vmem:[%s272 + $0xd8] sm:$0xf]
                %287 = vst [vmem:[%s273 + $0x48] sm:$0xf] %v286
                %v288 = vld [vmem:[%s272 + $0xfc] sm:$0xf]
                %289 = vst [vmem:[%s273 + $0x54] sm:$0xf] %v288
                %v290 = vld [vmem:[%s272 + $0x120] sm:$0xf]
                %291 = vst [vmem:[%s273 + $0x60] sm:$0xf] %v290
                %v292 = vld [vmem:[%s272 + $0x144] sm:$0xf]
                %293 = vst [vmem:[%s273 + $0x6c] sm:$0xf] %v292
                %v294 = vld [vmem:[%s272 + $0x168] sm:$0xf]
                %295 = vst [vmem:[%s273 + $0x78] sm:$0xf] %v294
                %v296 = vld [vmem:[%s272 + $0x18c] sm:$0xf]
                %297 = vst [vmem:[%s273 + $0x84] sm:$0xf] %v296
                %v298 = vld [vmem:[%s272 + $0x1b0] sm:$0xf]
                %299 = vst [vmem:[%s273 + $0x90] sm:$0xf] %v298
                %v300 = vld [vmem:[%s272 + $0x1d4] sm:$0xf]
                %301 = vst [vmem:[%s273 + $0x9c] sm:$0xf] %v300
                %v302 = vld [vmem:[%s272 + $0x1f8] sm:$0xf]
                %303 = vst [vmem:[%s273 + $0xa8] sm:$0xf] %v302
                %v304 = vld [vmem:[%s272 + $0x21c] sm:$0xf]
                %305 = vst [vmem:[%s273 + $0xb4] sm:$0xf] %v304
              $region48: #{discriminator_forward.6} parent=35 // loop_footer
                %s271 = sadd.s32 1, %s267
              $region49: #{discriminator_forward.6} parent=35 // loop_footer_branch
                %266 = sbr.rel target = $region45
              $region50: #{discriminator_forward.6} parent=35 // loop_exit
                _
            $region36: #{discriminator_forward.6} parent=31 // pred_fallthru
              _
          $region32: #{discriminator_forward.6} parent=27 // pred_fallthru
            _
          %306 = vnop
        $region28: #{discriminator_forward.6} parent=23 // pred_fallthru
          _
      $region24: #{discriminator_forward.6} parent=5 // pred_fallthru
        _
      %p307 = scmp.le.s32.totalorder 1, %s12
      %p308 = scmp.lt.s32.totalorder %s12, 4
      %p309 = pnand %p307, %p308
      %p310 = pneg %p309
      // Predicated region
      $region51: #{discriminator_forward.6} parent=5 // pred_check
        _
      $region52: #{discriminator_forward.6} parent=5 // pred_check_branch
        %312 = sbr.rel (%p309) target = $region54
      $region53: #{discriminator_forward.6} parent=5 // pred_region
        %s313 = ssub.s32 %s12, 1
        %s314 = sand.u32 %s65, 1
        %s315 = sand.u32 %s65, 1
        %s316 = smul.addr %s315, 192
        %s317 = scalar_lea.vmem [#allocation2], %s316
        // Predicated region
        $region55: #{discriminator_forward.6} parent=53 // pred_check
          %p318 = pneg %p78
        $region56: #{discriminator_forward.6} parent=53 // pred_check_branch
          %320 = sbr.rel (%p318) target = $region58
        $region57: #{discriminator_forward.6} parent=53 // pred_region
          _
        $region58: #{discriminator_forward.6} parent=53 // pred_fallthru
          _
        %p321 = scmp.lt.s32.totalorder %s22, 0
        %s322 = scalar_select %p321, %s22, 0
        %s323 = smul.addr %s322, 4
        %s324 = scalar_lea.vmem %s0, %s323
        %p325 = pneg %p50
        %p326 = pneg %p47
        %s327 = sand.u32 %s65, 1
        %s328 = sand.u32 %s65, 1
        %s329 = smul.addr %s328, 192
        %s330 = scalar_lea.vmem [#allocation2], %s329
        %p331 = pneg %p78
        %p332 = pneg %p75
        %p333 = pneg %p99
        %p334 = pneg %p96
        %p335 = pneg %p125
        %p336 = pneg %p122
        %s337 = sand.u32 %s112, 1
        %s338 = sand.u32 %s112, 1
        %s339 = smul.addr %s338, 48
        %s340 = scalar_lea.vmem [#allocation3], %s339
        %p341 = pneg %p151
        %p342 = pneg %p148
        %p343 = scmp.lt.s32.totalorder %s21, 2
        %s344 = scalar_select %p343, %s21, 2
        %s345 = smul.addr %s344, 2
        %s346 = smul.addr %s345, 8
        %s347 = scalar_lea.vmem %s4, %s346
        %p348 = pneg %p177
        %p349 = pneg %p174
        %p350 = scmp.lt.s32.totalorder %s21, 2
        %s351 = scalar_select %p350, %s21, 2
        %s352 = smul.addr %s351, 2
        %s353 = smul.addr %s352, 8
        %s354 = scalar_lea.vmem %s5, %s353
        %p355 = scmp.lt.s32.totalorder %s22, 0
        %s356 = scalar_select %p355, %s22, 0
        %s357 = smul.addr %s356, 4
        %s358 = scalar_lea.vmem %s0, %s357
        %s359 = smul.u32 16, %s22
        %s360 = smul.u32 3, %s21
        %s361 = smul.u32 3, %s21
        %p362 = scmp.lt.s32.totalorder %s21, 2
        %s363 = scalar_select %p362, %s21, 2
        %s364 = smul.addr %s363, 2
        %s365 = smul.addr %s364, 8
        %s366 = scalar_lea.vmem %s4, %s365
        %p367 = scmp.lt.s32.totalorder %s21, 2
        %s368 = scalar_select %p367, %s21, 2
        %s369 = smul.addr %s368, 2
        %s370 = smul.addr %s369, 8
        %s371 = scalar_lea.vmem %s5, %s370
        %p373 = scmp.eq.s32.totalorder %s22, 0
        // Predicated region
        $region59: #{discriminator_forward.6} parent=53 // pred_check
          %p374 = pneg %p373
        $region60: #{discriminator_forward.6} parent=53 // pred_check_branch
          %376 = sbr.rel (%p374) target = $region62
        $region61: #{discriminator_forward.6} parent=53 // pred_region
          %377 = vst [vmem:[%s340] sm:$0xff] 0.0
          %378 = vst [vmem:[%s340 + $0x8] sm:$0xff] 0.0
          %379 = vst [vmem:[%s340 + $0x10] sm:$0xff] 0.0
          %380 = vst [vmem:[%s340 + $0x18] sm:$0xff] 0.0
          %381 = vst [vmem:[%s340 + $0x20] sm:$0xff] 0.0
          %382 = vst [vmem:[%s340 + $0x28] sm:$0xff] 0.0
        $region62: #{discriminator_forward.6} parent=53 // pred_fallthru
          _
        %v383 = vld [vmem:[%s340] sm:$0xff]
        %v384 = vld [vmem:[%s340 + $0x8] sm:$0xff]
        %v385 = vld [vmem:[%s340 + $0x10] sm:$0xff]
        %v386 = vld [vmem:[%s340 + $0x18] sm:$0xff]
        %v387 = vld [vmem:[%s340 + $0x20] sm:$0xff]
        %v388 = vld [vmem:[%s340 + $0x28] sm:$0xff]
        %v389 = vld [vmem:[%s358] sm:$0xf]
        %v390 = vld [vmem:[%s358 + $0x4] sm:$0xf]
        %v391 = vld [vmem:[%s317] sm:$0xff]
        %v392 = vld [vmem:[%s317 + $0x8] sm:$0xf]
        %v393 = vld [vmem:[%s317 + $0xc] sm:$0xff]
        %v394 = vld [vmem:[%s317 + $0x14] sm:$0xf]
        %v395 = vld [vmem:[%s317 + $0x18] sm:$0xff]
        %v396 = vld [vmem:[%s317 + $0x20] sm:$0xf]
        %v397 = vld [vmem:[%s317 + $0x24] sm:$0xff]
        %v398 = vld [vmem:[%s317 + $0x2c] sm:$0xf]
        %v399 = vld [vmem:[%s317 + $0x30] sm:$0xff]
        %v400 = vld [vmem:[%s317 + $0x38] sm:$0xf]
        %v401 = vld [vmem:[%s317 + $0x3c] sm:$0xff]
        %v402 = vld [vmem:[%s317 + $0x44] sm:$0xf]
        %v403 = vld [vmem:[%s317 + $0x48] sm:$0xff]
        %v404 = vld [vmem:[%s317 + $0x50] sm:$0xf]
        %v405 = vld [vmem:[%s317 + $0x54] sm:$0xff]
        %v406 = vld [vmem:[%s317 + $0x5c] sm:$0xf]
        %v407 = vld [vmem:[%s317 + $0x60] sm:$0xff]
        %v408 = vld [vmem:[%s317 + $0x68] sm:$0xf]
        %v409 = vld [vmem:[%s317 + $0x6c] sm:$0xff]
        %v410 = vld [vmem:[%s317 + $0x74] sm:$0xf]
        %v411 = vld [vmem:[%s317 + $0x78] sm:$0xff]
        %v412 = vld [vmem:[%s317 + $0x80] sm:$0xf]
        %v413 = vld [vmem:[%s317 + $0x84] sm:$0xff]
        %v414 = vld [vmem:[%s317 + $0x8c] sm:$0xf]
        %v415 = vld [vmem:[%s317 + $0x90] sm:$0xff]
        %v416 = vld [vmem:[%s317 + $0x98] sm:$0xf]
        %v417 = vld [vmem:[%s317 + $0x9c] sm:$0xff]
        %v418 = vld [vmem:[%s317 + $0xa4] sm:$0xf]
        %v419 = vld [vmem:[%s317 + $0xa8] sm:$0xff]
        %v420 = vld [vmem:[%s317 + $0xb0] sm:$0xf]
        %v421 = vld [vmem:[%s317 + $0xb4] sm:$0xff]
        %v422 = vld [vmem:[%s317 + $0xbc] sm:$0xf]
        %v425 = vunpack.c.l.b16 %v389
        %v426 = vunpack.c.l.b16 %v390
        %v427 = vpack.c.b16 %v426, %v425
        %v461 = vunpack.c.l.b16 %v391
        %v462 = vunpack.c.h.b16 %v391
        %v463 = vunpack.c.l.b16 %v392
        %v464 = vunpack.c.l.b16 %v393
        %v465 = vunpack.c.h.b16 %v393
        %v466 = vunpack.c.l.b16 %v394
        %v467 = vunpack.c.l.b16 %v395
        %v468 = vunpack.c.h.b16 %v395
        %v469 = vunpack.c.l.b16 %v396
        %v470 = vunpack.c.l.b16 %v397
        %v471 = vunpack.c.h.b16 %v397
        %v472 = vunpack.c.l.b16 %v398
        %v473 = vunpack.c.l.b16 %v399
        %v474 = vunpack.c.h.b16 %v399
        %v475 = vunpack.c.l.b16 %v400
        %v476 = vunpack.c.l.b16 %v401
        %v477 = vunpack.c.h.b16 %v401
        %v478 = vunpack.c.l.b16 %v402
        %v479 = vunpack.c.l.b16 %v403
        %v480 = vunpack.c.h.b16 %v403
        %v481 = vunpack.c.l.b16 %v404
        %v482 = vunpack.c.l.b16 %v405
        %v483 = vunpack.c.h.b16 %v405
        %v484 = vunpack.c.l.b16 %v406
        %v485 = vunpack.c.l.b16 %v407
        %v486 = vunpack.c.h.b16 %v407
        %v487 = vunpack.c.l.b16 %v408
        %v488 = vunpack.c.l.b16 %v409
        %v489 = vunpack.c.h.b16 %v409
        %v490 = vunpack.c.l.b16 %v410
        %v491 = vunpack.c.l.b16 %v411
        %v492 = vunpack.c.h.b16 %v411
        %v493 = vunpack.c.l.b16 %v412
        %v494 = vunpack.c.l.b16 %v413
        %v495 = vunpack.c.h.b16 %v413
        %v496 = vunpack.c.l.b16 %v414
        %v497 = vunpack.c.l.b16 %v415
        %v498 = vunpack.c.h.b16 %v415
        %v499 = vunpack.c.l.b16 %v416
        %v500 = vunpack.c.l.b16 %v417
        %v501 = vunpack.c.h.b16 %v417
        %v502 = vunpack.c.l.b16 %v418
        %v503 = vunpack.c.l.b16 %v419
        %v504 = vunpack.c.h.b16 %v419
        %v505 = vunpack.c.l.b16 %v420
        %v506 = vunpack.c.l.b16 %v421
        %v507 = vunpack.c.h.b16 %v421
        %v508 = vunpack.c.l.b16 %v422
        %v509 = vpack.c.b16 %v464, %v461
        %v510 = vpack.c.b16 %v465, %v462
        %v511 = vpack.c.b16 %v466, %v463
        %v512 = vpack.c.b16 %v470, %v467
        %v513 = vpack.c.b16 %v471, %v468
        %v514 = vpack.c.b16 %v472, %v469
        %v515 = vpack.c.b16 %v476, %v473
        %v516 = vpack.c.b16 %v477, %v474
        %v517 = vpack.c.b16 %v478, %v475
        %v518 = vpack.c.b16 %v482, %v479
        %v519 = vpack.c.b16 %v483, %v480
        %v520 = vpack.c.b16 %v484, %v481
        %v521 = vpack.c.b16 %v488, %v485
        %v522 = vpack.c.b16 %v489, %v486
        %v523 = vpack.c.b16 %v490, %v487
        %v524 = vpack.c.b16 %v494, %v491
        %v525 = vpack.c.b16 %v495, %v492
        %v526 = vpack.c.b16 %v496, %v493
        %v527 = vpack.c.b16 %v500, %v497
        %v528 = vpack.c.b16 %v501, %v498
        %v529 = vpack.c.b16 %v502, %v499
        %v530 = vpack.c.b16 %v506, %v503
        %v531 = vpack.c.b16 %v507, %v504
        %v532 = vpack.c.b16 %v508, %v505
        %557 = vmatprep.subr.bf16.mxu0 %v510
        %558 = vmatpush1.bf16.msra.mxu0 %v509
        %559 = vmatprep.subr.bf16.mxu0 %v513
        %560 = vmatpush1.bf16.msra.mxu0 %v512
        %561 = vmatprep.subr.bf16.mxu0 %v516
        %562 = vmatpush1.bf16.msra.mxu0 %v515
        %563 = vmatprep.subr.bf16.mxu0 %v519
        %564 = vmatpush1.bf16.msra.mxu0 %v518
        %565 = vmatprep.subr.bf16.mxu0 %v522
        %566 = vmatpush1.bf16.msra.mxu0 %v521
        %567 = vmatprep.subr.bf16.mxu0 %v525
        %568 = vmatpush1.bf16.msra.mxu0 %v524
        %569 = vmatprep.subr.bf16.mxu0 %v528
        %570 = vmatpush1.bf16.msra.mxu0 %v527
        %571 = vmatprep.subr.bf16.mxu0 %v531
        %572 = vmatpush1.bf16.msra.mxu0 %v530
        %573 = vmatprep.subr.bf16.mxu0 0
        %574 = vmatpush1.bf16.msra.mxu0 0
        %575 = vmatprep.subr.bf16.mxu0 0
        %576 = vmatpush1.bf16.msra.mxu0 0
        %577 = vmatprep.subr.bf16.mxu0 0
        %578 = vmatpush1.bf16.msra.mxu0 0
        %579 = vmatprep.subr.bf16.mxu0 0
        %580 = vmatpush1.bf16.msra.mxu0 0
        %581 = vmatprep.subr.bf16.mxu0 0
        %582 = vmatpush1.bf16.msra.mxu0 0
        %583 = vmatprep.subr.bf16.mxu0 0
        %584 = vmatpush1.bf16.msra.mxu0 0
        %585 = vmatprep.subr.bf16.mxu0 0
        %586 = vmatpush1.bf16.msra.mxu0 0
        %587 = vmatprep.subr.bf16.mxu0 0
        %588 = vmatpush1.bf16.msra.mxu0 0
        %589 = vmatprep.mubr.bf16.mxu0 0
        %590 = vmatmul.mubr.bf16.gmra.mrb[0].mxu0 %v427
        %v591 = vpop.f32.mrb[0].mxu0
        %v592 = vadd.f32 0.0, %v591
        %v593 = vpop.f32.mrb[0].mxu0
        %v594 = vadd.f32 0.0, %v593
        %v595 = vpop.f32.mrb[0].mxu0
        %v596 = vadd.f32 0.0, %v595
        %v597 = vpop.f32.mrb[0].mxu0
        %v598 = vadd.f32 0.0, %v597
        %599 = vdwg.mxu0
        %600 = vmatprep.subr.bf16.mxu0 0
        %601 = vmatpush1.bf16.msra.mxu0 %v511
        %602 = vmatprep.subr.bf16.mxu0 0
        %603 = vmatpush1.bf16.msra.mxu0 %v514
        %604 = vmatprep.subr.bf16.mxu0 0
        %605 = vmatpush1.bf16.msra.mxu0 %v517
        %606 = vmatprep.subr.bf16.mxu0 0
        %607 = vmatpush1.bf16.msra.mxu0 %v520
        %608 = vmatprep.subr.bf16.mxu0 0
        %609 = vmatpush1.bf16.msra.mxu0 %v523
        %610 = vmatprep.subr.bf16.mxu0 0
        %611 = vmatpush1.bf16.msra.mxu0 %v526
        %612 = vmatprep.subr.bf16.mxu0 0
        %613 = vmatpush1.bf16.msra.mxu0 %v529
        %614 = vmatprep.subr.bf16.mxu0 0
        %615 = vmatpush1.bf16.msra.mxu0 %v532
        %616 = vmatprep.subr.bf16.mxu0 0
        %617 = vmatpush1.bf16.msra.mxu0 0
        %618 = vmatprep.subr.bf16.mxu0 0
        %619 = vmatpush1.bf16.msra.mxu0 0
        %620 = vmatprep.subr.bf16.mxu0 0
        %621 = vmatpush1.bf16.msra.mxu0 0
        %622 = vmatprep.subr.bf16.mxu0 0
        %623 = vmatpush1.bf16.msra.mxu0 0
        %624 = vmatprep.subr.bf16.mxu0 0
        %625 = vmatpush1.bf16.msra.mxu0 0
        %626 = vmatprep.subr.bf16.mxu0 0
        %627 = vmatpush1.bf16.msra.mxu0 0
        %628 = vmatprep.subr.bf16.mxu0 0
        %629 = vmatpush1.bf16.msra.mxu0 0
        %630 = vmatprep.subr.bf16.mxu0 0
        %631 = vmatpush1.bf16.msra.mxu0 0
        %632 = vmatprep.mubr.bf16.mxu0 0
        %633 = vmatmul.mubr.bf16.gmra.mrb[0].mxu0 %v427
        %v634 = vpop.f32.mrb[0].mxu0
        %v635 = vadd.f32 0.0, %v634
        %v636 = vpop.f32.mrb[0].mxu0
        %v637 = vpop.f32.mrb[0].mxu0
        %v638 = vadd.f32 0.0, %v637
        %v639 = vpop.f32.mrb[0].mxu0
        %640 = vdwg.mxu0
        %v641 = vadd.f32 %v383, %v592
        %v642 = vadd.f32 %v384, %v594
        %v643 = vadd.f32 %v385, %v635
        %v644 = vadd.f32 %v386, %v596
        %v645 = vadd.f32 %v387, %v598
        %v646 = vadd.f32 %v388, %v638
        %647 = vst [vmem:[%s340] sm:$0xff] %v641
        %648 = vst [vmem:[%s340 + $0x8] sm:$0xff] %v642
        %649 = vst [vmem:[%s340 + $0x10] sm:$0xff] %v643
        %650 = vst [vmem:[%s340 + $0x18] sm:$0xff] %v644
        %651 = vst [vmem:[%s340 + $0x20] sm:$0xff] %v645
        %652 = vst [vmem:[%s340 + $0x28] sm:$0xff] %v646
        // Predicated region
        $region63: #{discriminator_forward.6} parent=53 // pred_check
          %p653 = pneg %p373
        $region64: #{discriminator_forward.6} parent=53 // pred_check_branch
          %655 = sbr.rel (%p653) target = $region66
        $region65: #{discriminator_forward.6} parent=53 // pred_region
          %v656 = vld [vmem:[%s340] sm:$0xff]
          %v657 = vld [vmem:[%s340 + $0x8] sm:$0xff]
          %v658 = vld [vmem:[%s340 + $0x10] sm:$0xff]
          %v659 = vld [vmem:[%s340 + $0x18] sm:$0xff]
          %v660 = vld [vmem:[%s340 + $0x20] sm:$0xff]
          %v661 = vld [vmem:[%s340 + $0x28] sm:$0xff]
          %v662 = vadd.f32 %v656, %v657
          %v663 = vadd.f32 %v662, %v658
          %664 = vadd.xlane.f32.xlu0 %v663
          %v665 = vpop.xlane.xlu0 %664
          %v666 = vadd.f32 %v659, %v660
          %v667 = vadd.f32 %v666, %v661
          %668 = vadd.xlane.f32.xlu0 %v667
          %v669 = vpop.xlane.xlu0 %668
          %v670 = vmul.f32 %v656, %v656
          %v671 = vmul.f32 %v657, %v657
          %v672 = vmul.f32 %v658, %v658
          %v673 = vmul.f32 %v659, %v659
          %v674 = vmul.f32 %v660, %v660
          %v675 = vmul.f32 %v661, %v661
          %v676 = vadd.f32 %v670, %v671
          %v677 = vadd.f32 %v676, %v672
          %678 = vadd.xlane.f32.xlu0 %v677
          %v679 = vpop.xlane.xlu0 %678
          %v680 = vadd.f32 %v673, %v674
          %v681 = vadd.f32 %v680, %v675
          %682 = vadd.xlane.f32.xlu0 %v681
          %v683 = vpop.xlane.xlu0 %682
          %684 = vst [vmem:[%s366] sm:$0xff] %v665
          %685 = vst [vmem:[%s366 + $0x8] sm:$0xff] %v669
          %686 = vst [vmem:[%s371] sm:$0xff] %v679
          %687 = vst [vmem:[%s371 + $0x8] sm:$0xff] %v683
          %v688 = vld [vmem:[%s2] sm:$0xff]
          %v689 = vld [vmem:[%s2 + $0x8] sm:$0xff]
          %691 = vset.pattern.permute.xlu0 0
          %692 = vperm.xlu0 %691, %v688
          %v693 = vpop.permute.xlu0 %692
          %696 = vset.pattern.permute.xlu0 0
          %697 = vperm.xlu0 %696, %v689
          %v698 = vpop.permute.xlu0 %697
          %v700 = vadd.f32 %v656, %v693
          %v701 = vadd.f32 %v657, %v693
          %v702 = vadd.f32 %v658, %v693
          %v703 = vadd.f32 %v659, %v698
          %v704 = vadd.f32 %v660, %v698
          %v705 = vadd.f32 %v661, %v698
          %706 = vst [vmem:[%s340] sm:$0xff] %v700
          %707 = vst [vmem:[%s340 + $0x8] sm:$0xff] %v701
          %708 = vst [vmem:[%s340 + $0x10] sm:$0xff] %v702
          %709 = vst [vmem:[%s340 + $0x18] sm:$0xff] %v703
          %710 = vst [vmem:[%s340 + $0x20] sm:$0xff] %v704
          %711 = vst [vmem:[%s340 + $0x28] sm:$0xff] %v705
        $region66: #{discriminator_forward.6} parent=53 // pred_fallthru
          _
        %s712 = sand.u32 %s112, 1
        %s713 = sand.u32 %s112, 1
        %s714 = smul.addr %s713, 48
        %s715 = scalar_lea.vmem [#allocation3], %s714
        %p716 = scmp.lt.s32.totalorder %s21, 2
        %s717 = scalar_select %p716, %s21, 2
        %s718 = smul.addr %s717, 2
        %s719 = smul.addr %s718, 8
        %s720 = scalar_lea.vmem %s4, %s719
        %p721 = scmp.lt.s32.totalorder %s21, 2
        %s722 = scalar_select %p721, %s21, 2
        %s723 = smul.addr %s722, 2
        %s724 = smul.addr %s723, 8
        %s725 = scalar_lea.vmem %s5, %s724
        // Predicated region
        $region67: #{discriminator_forward.6} parent=53 // pred_check
          %p726 = pneg %p122
        $region68: #{discriminator_forward.6} parent=53 // pred_check_branch
          %728 = sbr.rel (%p726) target = $region70
        $region69: #{discriminator_forward.6} parent=53 // pred_region
          %s729 = smul.u32 3, %s21
          %s730 = smul.addr %s729, 8
          %s731 = scalar_lea.vmem %s3, %s730
          // Predicated region
          $region71: #{discriminator_forward.6} parent=69 // pred_check
            _
          $region72: #{discriminator_forward.6} parent=69 // pred_check_branch
            %733 = sbr.rel (0) target = $region74
          $region73: #{discriminator_forward.6} parent=69 // pred_region
            // Predicated region
            $region75: #{discriminator_forward.6} parent=73 // pred_check
              _
            $region76: #{discriminator_forward.6} parent=73 // pred_check_branch
              %735 = sbr.rel (0) target = $region78
            $region77: #{discriminator_forward.6} parent=73 // pred_region
              loop: start=0, step=1, limit=1
              $region79: #{discriminator_forward.6} parent=77 // loop_pre_header
                _
              $region80: #{discriminator_forward.6} parent=77 // loop_header
                %s737 = sphi 0, %s741
                %p738 = scmp.ge.s32.totalorder %s737, 1
                %s742 = sphi %s715, %s715
                %s743 = sphi %s731, %s731
              $region81: #{discriminator_forward.6} parent=77 // loop_header_branch
                %740 = sbr.rel (%p738) target = $region85
              $region82: #{discriminator_forward.6} parent=77 // loop_body
                %v744 = vld [vmem:[%s742] sm:$0xff]
                %745 = vst [vmem:[%s743] sm:$0xff] %v744
                %v746 = vld [vmem:[%s742 + $0x8] sm:$0xff]
                %747 = vst [vmem:[%s743 + $0x8] sm:$0xff] %v746
                %v748 = vld [vmem:[%s742 + $0x10] sm:$0xff]
                %749 = vst [vmem:[%s743 + $0x10] sm:$0xff] %v748
                %v750 = vld [vmem:[%s742 + $0x18] sm:$0xff]
                %751 = vst [vmem:[%s743 + $0x48] sm:$0xff] %v750
                %v752 = vld [vmem:[%s742 + $0x20] sm:$0xff]
                %753 = vst [vmem:[%s743 + $0x50] sm:$0xff] %v752
                %v754 = vld [vmem:[%s742 + $0x28] sm:$0xff]
                %755 = vst [vmem:[%s743 + $0x58] sm:$0xff] %v754
              $region83: #{discriminator_forward.6} parent=77 // loop_footer
                %s741 = sadd.s32 1, %s737
              $region84: #{discriminator_forward.6} parent=77 // loop_footer_branch
                %736 = sbr.rel target = $region80
              $region85: #{discriminator_forward.6} parent=77 // loop_exit
                _
            $region78: #{discriminator_forward.6} parent=73 // pred_fallthru
              _
            // Predicated region
            $region86: #{discriminator_forward.6} parent=73 // pred_check
              _
            $region87: #{discriminator_forward.6} parent=73 // pred_check_branch
              %757 = sbr.rel target = $region89
            $region88: #{discriminator_forward.6} parent=73 // pred_region
              _
            $region89: #{discriminator_forward.6} parent=73 // pred_fallthru
              _
          $region74: #{discriminator_forward.6} parent=69 // pred_fallthru
            _
          %758 = vnop
        $region70: #{discriminator_forward.6} parent=53 // pred_fallthru
          _
        // Predicated region
        $region90: #{discriminator_forward.6} parent=53 // pred_check
          %p759 = pneg %p148
        $region91: #{discriminator_forward.6} parent=53 // pred_check_branch
          %761 = sbr.rel (%p759) target = $region93
        $region92: #{discriminator_forward.6} parent=53 // pred_region
          _
        $region93: #{discriminator_forward.6} parent=53 // pred_fallthru
          _
        // Predicated region
        $region94: #{discriminator_forward.6} parent=53 // pred_check
          %p762 = pneg %p174
        $region95: #{discriminator_forward.6} parent=53 // pred_check_branch
          %764 = sbr.rel (%p762) target = $region97
        $region96: #{discriminator_forward.6} parent=53 // pred_region
          _
        $region97: #{discriminator_forward.6} parent=53 // pred_fallthru
          _
      $region54: #{discriminator_forward.6} parent=5 // pred_fallthru
        _
      %p765 = scmp.le.s32.totalorder 2, %s12
      // Predicated region
      $region98: #{discriminator_forward.6} parent=5 // pred_check
        %p766 = pneg %p765
      $region99: #{discriminator_forward.6} parent=5 // pred_check_branch
        %768 = sbr.rel (%p766) target = $region101
      $region100: #{discriminator_forward.6} parent=5 // pred_region
        %s769 = ssub.s32 %s12, 2
        // Predicated region
        $region102: #{discriminator_forward.6} parent=100 // pred_check
          %p770 = pneg %p128
        $region103: #{discriminator_forward.6} parent=100 // pred_check_branch
          %772 = sbr.rel (%p770) target = $region105
        $region104: #{discriminator_forward.6} parent=100 // pred_region
          %s773 = sand.u32 %s113, 1
          %s774 = sand.u32 %s113, 1
          %s775 = smul.addr %s774, 48
          %s776 = scalar_lea.vmem [#allocation3], %s775
        $region105: #{discriminator_forward.6} parent=100 // pred_fallthru
          _
        // Predicated region
        $region106: #{discriminator_forward.6} parent=100 // pred_check
          %p777 = pneg %p154
        $region107: #{discriminator_forward.6} parent=100 // pred_check_branch
          %779 = sbr.rel (%p777) target = $region109
        $region108: #{discriminator_forward.6} parent=100 // pred_region
          %p780 = scmp.lt.s32.totalorder %s23, 2
          %s781 = scalar_select %p780, %s23, 2
          %s782 = smul.addr %s781, 2
          %s783 = smul.addr %s782, 8
          %s784 = scalar_lea.vmem %s4, %s783
        $region109: #{discriminator_forward.6} parent=100 // pred_fallthru
          _
        // Predicated region
        $region110: #{discriminator_forward.6} parent=100 // pred_check
          %p785 = pneg %p180
        $region111: #{discriminator_forward.6} parent=100 // pred_check_branch
          %787 = sbr.rel (%p785) target = $region113
        $region112: #{discriminator_forward.6} parent=100 // pred_region
          %p788 = scmp.lt.s32.totalorder %s23, 2
          %s789 = scalar_select %p788, %s23, 2
          %s790 = smul.addr %s789, 2
          %s791 = smul.addr %s790, 8
          %s792 = scalar_lea.vmem %s5, %s791
        $region113: #{discriminator_forward.6} parent=100 // pred_fallthru
          _
      $region101: #{discriminator_forward.6} parent=5 // pred_fallthru
        _
    $region6: #{discriminator_forward.6} parent=1 // loop_footer
      %s16 = sadd.s32 1, %s12
    $region7: #{discriminator_forward.6} parent=1 // loop_footer_branch
      %11 = sbr.rel target = $region3
    $region8: #{discriminator_forward.6} parent=1 // loop_exit
      _

// kernel: discriminator_forward.7
$region0: #{discriminator_forward.7}
  #allocation0 [shape = 'u32[]', space=smem, size = 0x4, offset = 0x4, fixed_abs, tag = 'smem constant byte address 0x4 - core index']
  #allocation1 [shape = 'u32[144,128]{1,0:T(1,128)}', space=vmem, size = 0x12000, scoped, tag = 'internal scratch']
  %s0 = inlined_call_operand.vmem [shape: bf16[32,256], index: 0, kind: input, shape index: {}]
  %s1 = inlined_call_operand.vmem [shape: bf16[256,288], index: 1, kind: input, shape index: {}]
  %s2 = inlined_call_operand.vmem [shape: f32[32,1], index: 2, kind: input, shape index: {}]
  %s3 = inlined_call_operand.vmem [shape: f32[32,288], index: 3, kind: output, shape index: {0}]
  %s4 = inlined_call_operand.vmem [shape: f32[1,32,128], index: 4, kind: output, shape index: {1}]
  %s5 = inlined_call_operand.vmem [shape: f32[1,32,128], index: 5, kind: output, shape index: {2}]
  %6 = xla_tuple %s3, %s4, %s5
  %s7 = sld [smem:[#allocation0]]
  $region46: #{discriminator_forward.7} parent=0
    _
  %s9 = ssub.s32 1, %s7
  %s10 = scalar_select 0, %s9, %s7
  // Predicated region
  $region2: #{discriminator_forward.7} parent=0 // pred_check
    _
  $region3: #{discriminator_forward.7} parent=0 // pred_check_branch
    %12 = sbr.rel (0) target = $region5
  $region4: #{discriminator_forward.7} parent=0 // pred_region
    _
  $region5: #{discriminator_forward.7} parent=0 // pred_fallthru
    _
  // Predicated region
  $region6: #{discriminator_forward.7} parent=0 // pred_check
    _
  $region7: #{discriminator_forward.7} parent=0 // pred_check_branch
    %14 = sbr.rel (0) target = $region9
  $region8: #{discriminator_forward.7} parent=0 // pred_region
    _
  $region9: #{discriminator_forward.7} parent=0 // pred_fallthru
    _
  // Predicated region
  $region10: #{discriminator_forward.7} parent=0 // pred_check
    _
  $region11: #{discriminator_forward.7} parent=0 // pred_check_branch
    %16 = sbr.rel (0) target = $region13
  $region12: #{discriminator_forward.7} parent=0 // pred_region
    _
  $region13: #{discriminator_forward.7} parent=0 // pred_fallthru
    _
  %p18 = scmp.eq.s32.totalorder 0, 0
  // Predicated region
  $region14: #{discriminator_forward.7} parent=0 // pred_check
    %p19 = pneg %p18
  $region15: #{discriminator_forward.7} parent=0 // pred_check_branch
    %21 = sbr.rel (%p19) target = $region17
  $region16: #{discriminator_forward.7} parent=0 // pred_region
    %22 = vst [vmem:[%s3] sm:$0xff] 0.0
    %23 = vst [vmem:[%s3 + $0x8] sm:$0xff] 0.0
    %vm24 = vcmask 261120
    %25 = vst.msk [vmem:[%s3 + $0x10] sm:$0xff] %vm24, 0.0
    %26 = vst [vmem:[%s3 + $0x18] sm:$0xff] 0.0
    %27 = vst [vmem:[%s3 + $0x20] sm:$0xff] 0.0
    %28 = vst.msk [vmem:[%s3 + $0x28] sm:$0xff] %vm24, 0.0
    %29 = vst [vmem:[%s3 + $0x30] sm:$0xff] 0.0
    %30 = vst [vmem:[%s3 + $0x38] sm:$0xff] 0.0
    %31 = vst.msk [vmem:[%s3 + $0x40] sm:$0xff] %vm24, 0.0
    %32 = vst [vmem:[%s3 + $0x48] sm:$0xff] 0.0
    %33 = vst [vmem:[%s3 + $0x50] sm:$0xff] 0.0
    %34 = vst.msk [vmem:[%s3 + $0x58] sm:$0xff] %vm24, 0.0
  $region17: #{discriminator_forward.7} parent=0 // pred_fallthru
    _
  %v35 = vld [vmem:[%s3] sm:$0xff]
  %v36 = vld [vmem:[%s3 + $0x8] sm:$0xff]
  %v37 = vld [vmem:[%s3 + $0x10] sm:$0xff]
  %v38 = vld [vmem:[%s3 + $0x18] sm:$0xff]
  %v39 = vld [vmem:[%s3 + $0x20] sm:$0xff]
  %v40 = vld [vmem:[%s3 + $0x28] sm:$0xff]
  %v41 = vld [vmem:[%s3 + $0x30] sm:$0xff]
  %v42 = vld [vmem:[%s3 + $0x38] sm:$0xff]
  %v43 = vld [vmem:[%s3 + $0x40] sm:$0xff]
  %v44 = vld [vmem:[%s3 + $0x48] sm:$0xff]
  %v45 = vld [vmem:[%s3 + $0x50] sm:$0xff]
  %v46 = vld [vmem:[%s3 + $0x58] sm:$0xff]
  %v47 = vld [vmem:[%s0] sm:$0xff]
  %v48 = vld [vmem:[%s0 + $0x8] sm:$0xff]
  %v49 = vld [vmem:[%s0 + $0x10] sm:$0xff]
  %v50 = vld [vmem:[%s0 + $0x18] sm:$0xff]
  %v51 = vld [vmem:[%s1] sm:$0xff]
  %v52 = vld [vmem:[%s1 + $0x8] sm:$0xf]
  %v53 = vld [vmem:[%s1 + $0xc] sm:$0xff]
  %v54 = vld [vmem:[%s1 + $0x14] sm:$0xf]
  %v55 = vld [vmem:[%s1 + $0x18] sm:$0xff]
  %v56 = vld [vmem:[%s1 + $0x20] sm:$0xf]
  %v57 = vld [vmem:[%s1 + $0x24] sm:$0xff]
  %v58 = vld [vmem:[%s1 + $0x2c] sm:$0xf]
  %v59 = vld [vmem:[%s1 + $0x30] sm:$0xff]
  %v60 = vld [vmem:[%s1 + $0x38] sm:$0xf]
  %v61 = vld [vmem:[%s1 + $0x3c] sm:$0xff]
  %v62 = vld [vmem:[%s1 + $0x44] sm:$0xf]
  %v63 = vld [vmem:[%s1 + $0x48] sm:$0xff]
  %v64 = vld [vmem:[%s1 + $0x50] sm:$0xf]
  %v65 = vld [vmem:[%s1 + $0x54] sm:$0xff]
  %v66 = vld [vmem:[%s1 + $0x5c] sm:$0xf]
  %v67 = vld [vmem:[%s1 + $0x60] sm:$0xff]
  %v68 = vld [vmem:[%s1 + $0x68] sm:$0xf]
  %v69 = vld [vmem:[%s1 + $0x6c] sm:$0xff]
  %v70 = vld [vmem:[%s1 + $0x74] sm:$0xf]
  %v71 = vld [vmem:[%s1 + $0x78] sm:$0xff]
  %v72 = vld [vmem:[%s1 + $0x80] sm:$0xf]
  %v73 = vld [vmem:[%s1 + $0x84] sm:$0xff]
  %v74 = vld [vmem:[%s1 + $0x8c] sm:$0xf]
  %v75 = vld [vmem:[%s1 + $0x90] sm:$0xff]
  %v76 = vld [vmem:[%s1 + $0x98] sm:$0xf]
  %v77 = vld [vmem:[%s1 + $0x9c] sm:$0xff]
  %v78 = vld [vmem:[%s1 + $0xa4] sm:$0xf]
  %v79 = vld [vmem:[%s1 + $0xa8] sm:$0xff]
  %v80 = vld [vmem:[%s1 + $0xb0] sm:$0xf]
  %v81 = vld [vmem:[%s1 + $0xb4] sm:$0xff]
  %v82 = vld [vmem:[%s1 + $0xbc] sm:$0xf]
  %v83 = vld [vmem:[%s1 + $0xc0] sm:$0xff]
  %v84 = vld [vmem:[%s1 + $0xc8] sm:$0xf]
  %v85 = vld [vmem:[%s1 + $0xcc] sm:$0xff]
  %v86 = vld [vmem:[%s1 + $0xd4] sm:$0xf]
  %v87 = vld [vmem:[%s1 + $0xd8] sm:$0xff]
  %v88 = vld [vmem:[%s1 + $0xe0] sm:$0xf]
  %v89 = vld [vmem:[%s1 + $0xe4] sm:$0xff]
  %v90 = vld [vmem:[%s1 + $0xec] sm:$0xf]
  %v91 = vld [vmem:[%s1 + $0xf0] sm:$0xff]
  %v92 = vld [vmem:[%s1 + $0xf8] sm:$0xf]
  %v93 = vld [vmem:[%s1 + $0xfc] sm:$0xff]
  %v94 = vld [vmem:[%s1 + $0x104] sm:$0xf]
  %v95 = vld [vmem:[%s1 + $0x108] sm:$0xff]
  %v96 = vld [vmem:[%s1 + $0x110] sm:$0xf]
  %v97 = vld [vmem:[%s1 + $0x114] sm:$0xff]
  %v98 = vld [vmem:[%s1 + $0x11c] sm:$0xf]
  %v99 = vld [vmem:[%s1 + $0x120] sm:$0xff]
  %v100 = vld [vmem:[%s1 + $0x128] sm:$0xf]
  %v101 = vld [vmem:[%s1 + $0x12c] sm:$0xff]
  %v102 = vld [vmem:[%s1 + $0x134] sm:$0xf]
  %v103 = vld [vmem:[%s1 + $0x138] sm:$0xff]
  %v104 = vld [vmem:[%s1 + $0x140] sm:$0xf]
  %v105 = vld [vmem:[%s1 + $0x144] sm:$0xff]
  %v106 = vld [vmem:[%s1 + $0x14c] sm:$0xf]
  %v107 = vld [vmem:[%s1 + $0x150] sm:$0xff]
  %v108 = vld [vmem:[%s1 + $0x158] sm:$0xf]
  %v109 = vld [vmem:[%s1 + $0x15c] sm:$0xff]
  %v110 = vld [vmem:[%s1 + $0x164] sm:$0xf]
  %v111 = vld [vmem:[%s1 + $0x168] sm:$0xff]
  %v112 = vld [vmem:[%s1 + $0x170] sm:$0xf]
  %v113 = vld [vmem:[%s1 + $0x174] sm:$0xff]
  %v114 = vld [vmem:[%s1 + $0x17c] sm:$0xf]
  %v119 = vunpack.c.l.b16 %v47
  %v120 = vunpack.c.h.b16 %v47
  %v121 = vunpack.c.l.b16 %v48
  %v122 = vunpack.c.h.b16 %v48
  %v123 = vunpack.c.l.b16 %v49
  %v124 = vunpack.c.h.b16 %v49
  %v125 = vunpack.c.l.b16 %v50
  %v126 = vunpack.c.h.b16 %v50
  %v127 = vpack.c.b16 %v121, %v119
  %v128 = vpack.c.b16 %v122, %v120
  %v129 = vpack.c.b16 %v125, %v123
  %v130 = vpack.c.b16 %v126, %v124
  %v199 = vunpack.c.l.b16 %v51
  %v200 = vunpack.c.h.b16 %v51
  %v201 = vunpack.c.l.b16 %v52
  %v202 = vunpack.c.l.b16 %v53
  %v203 = vunpack.c.h.b16 %v53
  %v204 = vunpack.c.l.b16 %v54
  %v205 = vunpack.c.l.b16 %v55
  %v206 = vunpack.c.h.b16 %v55
  %v207 = vunpack.c.l.b16 %v56
  %v208 = vunpack.c.l.b16 %v57
  %v209 = vunpack.c.h.b16 %v57
  %v210 = vunpack.c.l.b16 %v58
  %v211 = vunpack.c.l.b16 %v59
  %v212 = vunpack.c.h.b16 %v59
  %v213 = vunpack.c.l.b16 %v60
  %v214 = vunpack.c.l.b16 %v61
  %v215 = vunpack.c.h.b16 %v61
  %v216 = vunpack.c.l.b16 %v62
  %v217 = vunpack.c.l.b16 %v63
  %v218 = vunpack.c.h.b16 %v63
  %v219 = vunpack.c.l.b16 %v64
  %v220 = vunpack.c.l.b16 %v65
  %v221 = vunpack.c.h.b16 %v65
  %v222 = vunpack.c.l.b16 %v66
  %v223 = vunpack.c.l.b16 %v67
  %v224 = vunpack.c.h.b16 %v67
  %v225 = vunpack.c.l.b16 %v68
  %v226 = vunpack.c.l.b16 %v69
  %v227 = vunpack.c.h.b16 %v69
  %v228 = vunpack.c.l.b16 %v70
  %v229 = vunpack.c.l.b16 %v71
  %v230 = vunpack.c.h.b16 %v71
  %v231 = vunpack.c.l.b16 %v72
  %v232 = vunpack.c.l.b16 %v73
  %v233 = vunpack.c.h.b16 %v73
  %v234 = vunpack.c.l.b16 %v74
  %v235 = vunpack.c.l.b16 %v75
  %v236 = vunpack.c.h.b16 %v75
  %v237 = vunpack.c.l.b16 %v76
  %v238 = vunpack.c.l.b16 %v77
  %v239 = vunpack.c.h.b16 %v77
  %v240 = vunpack.c.l.b16 %v78
  %v241 = vunpack.c.l.b16 %v79
  %v242 = vunpack.c.h.b16 %v79
  %v243 = vunpack.c.l.b16 %v80
  %v244 = vunpack.c.l.b16 %v81
  %v245 = vunpack.c.h.b16 %v81
  %v246 = vunpack.c.l.b16 %v82
  %v247 = vunpack.c.l.b16 %v83
  %v248 = vunpack.c.h.b16 %v83
  %v249 = vunpack.c.l.b16 %v84
  %v250 = vunpack.c.l.b16 %v85
  %v251 = vunpack.c.h.b16 %v85
  %v252 = vunpack.c.l.b16 %v86
  %v253 = vunpack.c.l.b16 %v87
  %v254 = vunpack.c.h.b16 %v87
  %v255 = vunpack.c.l.b16 %v88
  %v256 = vunpack.c.l.b16 %v89
  %v257 = vunpack.c.h.b16 %v89
  %v258 = vunpack.c.l.b16 %v90
  %v259 = vunpack.c.l.b16 %v91
  %v260 = vunpack.c.h.b16 %v91
  %v261 = vunpack.c.l.b16 %v92
  %v262 = vunpack.c.l.b16 %v93
  %v263 = vunpack.c.h.b16 %v93
  %v264 = vunpack.c.l.b16 %v94
  %v265 = vunpack.c.l.b16 %v95
  %v266 = vunpack.c.h.b16 %v95
  %v267 = vunpack.c.l.b16 %v96
  %v268 = vunpack.c.l.b16 %v97
  %v269 = vunpack.c.h.b16 %v97
  %v270 = vunpack.c.l.b16 %v98
  %v271 = vunpack.c.l.b16 %v99
  %v272 = vunpack.c.h.b16 %v99
  %v273 = vunpack.c.l.b16 %v100
  %v274 = vunpack.c.l.b16 %v101
  %v275 = vunpack.c.h.b16 %v101
  %v276 = vunpack.c.l.b16 %v102
  %v277 = vunpack.c.l.b16 %v103
  %v278 = vunpack.c.h.b16 %v103
  %v279 = vunpack.c.l.b16 %v104
  %v280 = vunpack.c.l.b16 %v105
  %v281 = vunpack.c.h.b16 %v105
  %v282 = vunpack.c.l.b16 %v106
  %v283 = vunpack.c.l.b16 %v107
  %v284 = vunpack.c.h.b16 %v107
  %v285 = vunpack.c.l.b16 %v108
  %v286 = vunpack.c.l.b16 %v109
  %v287 = vunpack.c.h.b16 %v109
  %v288 = vunpack.c.l.b16 %v110
  %v289 = vunpack.c.l.b16 %v111
  %v290 = vunpack.c.h.b16 %v111
  %v291 = vunpack.c.l.b16 %v112
  %v292 = vunpack.c.l.b16 %v113
  %v293 = vunpack.c.h.b16 %v113
  %v294 = vunpack.c.l.b16 %v114
  %v295 = vpack.c.b16 %v202, %v199
  %v296 = vpack.c.b16 %v203, %v200
  %v297 = vpack.c.b16 %v204, %v201
  %v298 = vpack.c.b16 %v208, %v205
  %v299 = vpack.c.b16 %v209, %v206
  %v300 = vpack.c.b16 %v210, %v207
  %v301 = vpack.c.b16 %v214, %v211
  %v302 = vpack.c.b16 %v215, %v212
  %v303 = vpack.c.b16 %v216, %v213
  %v304 = vpack.c.b16 %v220, %v217
  %v305 = vpack.c.b16 %v221, %v218
  %v306 = vpack.c.b16 %v222, %v219
  %v307 = vpack.c.b16 %v226, %v223
  %v308 = vpack.c.b16 %v227, %v224
  %v309 = vpack.c.b16 %v228, %v225
  %v310 = vpack.c.b16 %v232, %v229
  %v311 = vpack.c.b16 %v233, %v230
  %v312 = vpack.c.b16 %v234, %v231
  %v313 = vpack.c.b16 %v238, %v235
  %v314 = vpack.c.b16 %v239, %v236
  %v315 = vpack.c.b16 %v240, %v237
  %v316 = vpack.c.b16 %v244, %v241
  %v317 = vpack.c.b16 %v245, %v242
  %v318 = vpack.c.b16 %v246, %v243
  %v319 = vpack.c.b16 %v250, %v247
  %v320 = vpack.c.b16 %v251, %v248
  %v321 = vpack.c.b16 %v252, %v249
  %v322 = vpack.c.b16 %v256, %v253
  %v323 = vpack.c.b16 %v257, %v254
  %v324 = vpack.c.b16 %v258, %v255
  %v325 = vpack.c.b16 %v262, %v259
  %v326 = vpack.c.b16 %v263, %v260
  %v327 = vpack.c.b16 %v264, %v261
  %v328 = vpack.c.b16 %v268, %v265
  %v329 = vpack.c.b16 %v269, %v266
  %v330 = vpack.c.b16 %v270, %v267
  %v331 = vpack.c.b16 %v274, %v271
  %v332 = vpack.c.b16 %v275, %v272
  %v333 = vpack.c.b16 %v276, %v273
  %v334 = vpack.c.b16 %v280, %v277
  %v335 = vpack.c.b16 %v281, %v278
  %v336 = vpack.c.b16 %v282, %v279
  %v337 = vpack.c.b16 %v286, %v283
  %v338 = vpack.c.b16 %v287, %v284
  %v339 = vpack.c.b16 %v288, %v285
  %v340 = vpack.c.b16 %v292, %v289
  %v341 = vpack.c.b16 %v293, %v290
  %v342 = vpack.c.b16 %v294, %v291
  %391 = vmatprep.subr.bf16.mxu0 %v296
  %392 = vmatpush1.bf16.msra.mxu0 %v295
  %393 = vmatprep.subr.bf16.mxu0 %v299
  %394 = vmatpush1.bf16.msra.mxu0 %v298
  %395 = vmatprep.subr.bf16.mxu0 %v302
  %396 = vmatpush1.bf16.msra.mxu0 %v301
  %397 = vmatprep.subr.bf16.mxu0 %v305
  %398 = vmatpush1.bf16.msra.mxu0 %v304
  %399 = vmatprep.subr.bf16.mxu0 %v308
  %400 = vmatpush1.bf16.msra.mxu0 %v307
  %401 = vmatprep.subr.bf16.mxu0 %v311
  %402 = vmatpush1.bf16.msra.mxu0 %v310
  %403 = vmatprep.subr.bf16.mxu0 %v314
  %404 = vmatpush1.bf16.msra.mxu0 %v313
  %405 = vmatprep.subr.bf16.mxu0 %v317
  %406 = vmatpush1.bf16.msra.mxu0 %v316
  %407 = vmatprep.subr.bf16.mxu0 %v320
  %408 = vmatpush1.bf16.msra.mxu0 %v319
  %409 = vmatprep.subr.bf16.mxu0 %v323
  %410 = vmatpush1.bf16.msra.mxu0 %v322
  %411 = vmatprep.subr.bf16.mxu0 %v326
  %412 = vmatpush1.bf16.msra.mxu0 %v325
  %413 = vmatprep.subr.bf16.mxu0 %v329
  %414 = vmatpush1.bf16.msra.mxu0 %v328
  %415 = vmatprep.subr.bf16.mxu0 %v332
  %416 = vmatpush1.bf16.msra.mxu0 %v331
  %417 = vmatprep.subr.bf16.mxu0 %v335
  %418 = vmatpush1.bf16.msra.mxu0 %v334
  %419 = vmatprep.subr.bf16.mxu0 %v338
  %420 = vmatpush1.bf16.msra.mxu0 %v337
  %421 = vmatprep.subr.bf16.mxu0 %v341
  %422 = vmatpush1.bf16.msra.mxu0 %v340
  %423 = vmatprep.mubr.bf16.mxu0 %v128
  %424 = vmatmul.mubr.bf16.gmra.mrb[0].mxu0 %v127
  %v425 = vpop.f32.mrb[0].mxu0
  %v426 = vadd.f32 0.0, %v425
  %v427 = vpop.f32.mrb[0].mxu0
  %v428 = vadd.f32 0.0, %v427
  %v429 = vpop.f32.mrb[0].mxu0
  %v430 = vadd.f32 0.0, %v429
  %v431 = vpop.f32.mrb[0].mxu0
  %v432 = vadd.f32 0.0, %v431
  %433 = vmatprep.mubr.bf16.mxu0 %v130
  %434 = vmatmul.mubr.bf16.gmra.mrb[0].mxu0 %v129
  %v435 = vpop.f32.mrb[0].mxu0
  %v436 = vadd.f32 0.0, %v435
  %v437 = vpop.f32.mrb[0].mxu0
  %v438 = vadd.f32 0.0, %v437
  %v439 = vpop.f32.mrb[0].mxu0
  %v440 = vadd.f32 0.0, %v439
  %v441 = vpop.f32.mrb[0].mxu0
  %v442 = vadd.f32 0.0, %v441
  %443 = vdwg.mxu0
  %444 = vmatprep.subr.bf16.mxu0 0
  %445 = vmatpush1.bf16.msra.mxu0 %v297
  %446 = vmatprep.subr.bf16.mxu0 0
  %447 = vmatpush1.bf16.msra.mxu0 %v300
  %448 = vmatprep.subr.bf16.mxu0 0
  %449 = vmatpush1.bf16.msra.mxu0 %v303
  %450 = vmatprep.subr.bf16.mxu0 0
  %451 = vmatpush1.bf16.msra.mxu0 %v306
  %452 = vmatprep.subr.bf16.mxu0 0
  %453 = vmatpush1.bf16.msra.mxu0 %v309
  %454 = vmatprep.subr.bf16.mxu0 0
  %455 = vmatpush1.bf16.msra.mxu0 %v312
  %456 = vmatprep.subr.bf16.mxu0 0
  %457 = vmatpush1.bf16.msra.mxu0 %v315
  %458 = vmatprep.subr.bf16.mxu0 0
  %459 = vmatpush1.bf16.msra.mxu0 %v318
  %460 = vmatprep.subr.bf16.mxu0 0
  %461 = vmatpush1.bf16.msra.mxu0 %v321
  %462 = vmatprep.subr.bf16.mxu0 0
  %463 = vmatpush1.bf16.msra.mxu0 %v324
  %464 = vmatprep.subr.bf16.mxu0 0
  %465 = vmatpush1.bf16.msra.mxu0 %v327
  %466 = vmatprep.subr.bf16.mxu0 0
  %467 = vmatpush1.bf16.msra.mxu0 %v330
  %468 = vmatprep.subr.bf16.mxu0 0
  %469 = vmatpush1.bf16.msra.mxu0 %v333
  %470 = vmatprep.subr.bf16.mxu0 0
  %471 = vmatpush1.bf16.msra.mxu0 %v336
  %472 = vmatprep.subr.bf16.mxu0 0
  %473 = vmatpush1.bf16.msra.mxu0 %v339
  %474 = vmatprep.subr.bf16.mxu0 0
  %475 = vmatpush1.bf16.msra.mxu0 %v342
  %476 = vmatprep.mubr.bf16.mxu0 %v128
  %477 = vmatmul.mubr.bf16.gmra.mrb[0].mxu0 %v127
  %v478 = vpop.f32.mrb[0].mxu0
  %v479 = vadd.f32 0.0, %v478
  %v480 = vpop.f32.mrb[0].mxu0
  %v481 = vpop.f32.mrb[0].mxu0
  %v482 = vadd.f32 0.0, %v481
  %v483 = vpop.f32.mrb[0].mxu0
  %484 = vmatprep.mubr.bf16.mxu0 %v130
  %485 = vmatmul.mubr.bf16.gmra.mrb[0].mxu0 %v129
  %v486 = vpop.f32.mrb[0].mxu0
  %v487 = vadd.f32 0.0, %v486
  %v488 = vpop.f32.mrb[0].mxu0
  %v489 = vpop.f32.mrb[0].mxu0
  %v490 = vadd.f32 0.0, %v489
  %v491 = vpop.f32.mrb[0].mxu0
  %492 = vdwg.mxu0
  %v493 = vadd.f32 %v35, %v426
  %v494 = vadd.f32 %v36, %v428
  %v495 = vadd.f32 %v37, %v479
  %v496 = vadd.f32 %v38, %v430
  %v497 = vadd.f32 %v39, %v432
  %v498 = vadd.f32 %v40, %v482
  %v499 = vadd.f32 %v41, %v436
  %v500 = vadd.f32 %v42, %v438
  %v501 = vadd.f32 %v43, %v487
  %v502 = vadd.f32 %v44, %v440
  %v503 = vadd.f32 %v45, %v442
  %v504 = vadd.f32 %v46, %v490
  %505 = vst [vmem:[%s3] sm:$0xff] %v493
  %506 = vst [vmem:[%s3 + $0x8] sm:$0xff] %v494
  %vm507 = vcmask 261120
  %508 = vst.msk [vmem:[%s3 + $0x10] sm:$0xff] %vm507, %v495
  %509 = vst [vmem:[%s3 + $0x18] sm:$0xff] %v496
  %510 = vst [vmem:[%s3 + $0x20] sm:$0xff] %v497
  %511 = vst.msk [vmem:[%s3 + $0x28] sm:$0xff] %vm507, %v498
  %512 = vst [vmem:[%s3 + $0x30] sm:$0xff] %v499
  %513 = vst [vmem:[%s3 + $0x38] sm:$0xff] %v500
  %514 = vst.msk [vmem:[%s3 + $0x40] sm:$0xff] %vm507, %v501
  %515 = vst [vmem:[%s3 + $0x48] sm:$0xff] %v502
  %516 = vst [vmem:[%s3 + $0x50] sm:$0xff] %v503
  %517 = vst.msk [vmem:[%s3 + $0x58] sm:$0xff] %vm507, %v504
  // Predicated region
  $region18: #{discriminator_forward.7} parent=0 // pred_check
    %p518 = pneg %p18
  $region19: #{discriminator_forward.7} parent=0 // pred_check_branch
    %520 = sbr.rel (%p518) target = $region21
  $region20: #{discriminator_forward.7} parent=0 // pred_region
    %v521 = vld [vmem:[%s3] sm:$0xff]
    %v522 = vld [vmem:[%s3 + $0x8] sm:$0xff]
    %v523 = vld [vmem:[%s3 + $0x10] sm:$0xff]
    %v524 = vld [vmem:[%s3 + $0x18] sm:$0xff]
    %v525 = vld [vmem:[%s3 + $0x20] sm:$0xff]
    %v526 = vld [vmem:[%s3 + $0x28] sm:$0xff]
    %v527 = vld [vmem:[%s3 + $0x30] sm:$0xff]
    %v528 = vld [vmem:[%s3 + $0x38] sm:$0xff]
    %v529 = vld [vmem:[%s3 + $0x40] sm:$0xff]
    %v530 = vld [vmem:[%s3 + $0x48] sm:$0xff]
    %v531 = vld [vmem:[%s3 + $0x50] sm:$0xff]
    %v532 = vld [vmem:[%s3 + $0x58] sm:$0xff]
    %v533 = vadd.f32 %v521, %v522
    %v534 = vsel %vm507, %v523, 0.0
    %v535 = vadd.f32 %v533, %v534
    %536 = vadd.xlane.f32.xlu0 %v535
    %v537 = vpop.xlane.xlu0 %536
    %v538 = vadd.f32 %v524, %v525
    %v539 = vsel %vm507, %v526, 0.0
    %v540 = vadd.f32 %v538, %v539
    %541 = vadd.xlane.f32.xlu0 %v540
    %v542 = vpop.xlane.xlu0 %541
    %v543 = vadd.f32 %v527, %v528
    %v544 = vsel %vm507, %v529, 0.0
    %v545 = vadd.f32 %v543, %v544
    %546 = vadd.xlane.f32.xlu0 %v545
    %v547 = vpop.xlane.xlu0 %546
    %v548 = vadd.f32 %v530, %v531
    %v549 = vsel %vm507, %v532, 0.0
    %v550 = vadd.f32 %v548, %v549
    %551 = vadd.xlane.f32.xlu0 %v550
    %v552 = vpop.xlane.xlu0 %551
    %v553 = vmul.f32 %v521, %v521
    %v554 = vmul.f32 %v522, %v522
    %v555 = vmul.f32 %v523, %v523
    %v556 = vmul.f32 %v524, %v524
    %v557 = vmul.f32 %v525, %v525
    %v558 = vmul.f32 %v526, %v526
    %v559 = vmul.f32 %v527, %v527
    %v560 = vmul.f32 %v528, %v528
    %v561 = vmul.f32 %v529, %v529
    %v562 = vmul.f32 %v530, %v530
    %v563 = vmul.f32 %v531, %v531
    %v564 = vmul.f32 %v532, %v532
    %v565 = vadd.f32 %v553, %v554
    %v566 = vsel %vm507, %v555, 0.0
    %v567 = vadd.f32 %v565, %v566
    %568 = vadd.xlane.f32.xlu0 %v567
    %v569 = vpop.xlane.xlu0 %568
    %v570 = vadd.f32 %v556, %v557
    %v571 = vsel %vm507, %v558, 0.0
    %v572 = vadd.f32 %v570, %v571
    %573 = vadd.xlane.f32.xlu0 %v572
    %v574 = vpop.xlane.xlu0 %573
    %v575 = vadd.f32 %v559, %v560
    %v576 = vsel %vm507, %v561, 0.0
    %v577 = vadd.f32 %v575, %v576
    %578 = vadd.xlane.f32.xlu0 %v577
    %v579 = vpop.xlane.xlu0 %578
    %v580 = vadd.f32 %v562, %v563
    %v581 = vsel %vm507, %v564, 0.0
    %v582 = vadd.f32 %v580, %v581
    %583 = vadd.xlane.f32.xlu0 %v582
    %v584 = vpop.xlane.xlu0 %583
    %585 = vst [vmem:[%s4] sm:$0xff] %v537
    %586 = vst [vmem:[%s4 + $0x8] sm:$0xff] %v542
    %587 = vst [vmem:[%s4 + $0x10] sm:$0xff] %v547
    %588 = vst [vmem:[%s4 + $0x18] sm:$0xff] %v552
    %589 = vst [vmem:[%s5] sm:$0xff] %v569
    %590 = vst [vmem:[%s5 + $0x8] sm:$0xff] %v574
    %591 = vst [vmem:[%s5 + $0x10] sm:$0xff] %v579
    %592 = vst [vmem:[%s5 + $0x18] sm:$0xff] %v584
    %v593 = vld [vmem:[%s2] sm:$0xff]
    %v594 = vld [vmem:[%s2 + $0x8] sm:$0xff]
    %v595 = vld [vmem:[%s2 + $0x10] sm:$0xff]
    %v596 = vld [vmem:[%s2 + $0x18] sm:$0xff]
    %598 = vset.pattern.permute.xlu0 0
    %599 = vperm.xlu0 %598, %v593
    %v600 = vpop.permute.xlu0 %599
    %603 = vset.pattern.permute.xlu0 0
    %604 = vperm.xlu0 %603, %v594
    %v605 = vpop.permute.xlu0 %604
    %608 = vset.pattern.permute.xlu0 0
    %609 = vperm.xlu0 %608, %v595
    %v610 = vpop.permute.xlu0 %609
    %613 = vset.pattern.permute.xlu0 0
    %614 = vperm.xlu0 %613, %v596
    %v615 = vpop.permute.xlu0 %614
    %v617 = vadd.f32 %v521, %v600
    %v618 = vadd.f32 %v522, %v600
    %v619 = vadd.f32 %v523, %v600
    %v620 = vadd.f32 %v524, %v605
    %v621 = vadd.f32 %v525, %v605
    %v622 = vadd.f32 %v526, %v605
    %v623 = vadd.f32 %v527, %v610
    %v624 = vadd.f32 %v528, %v610
    %v625 = vadd.f32 %v529, %v610
    %v626 = vadd.f32 %v530, %v615
    %v627 = vadd.f32 %v531, %v615
    %v628 = vadd.f32 %v532, %v615
    %629 = vst [vmem:[%s3] sm:$0xff] %v617
    %630 = vst [vmem:[%s3 + $0x8] sm:$0xff] %v618
    %631 = vst.msk [vmem:[%s3 + $0x10] sm:$0xff] %vm507, %v619
    %632 = vst [vmem:[%s3 + $0x18] sm:$0xff] %v620
    %633 = vst [vmem:[%s3 + $0x20] sm:$0xff] %v621
    %634 = vst.msk [vmem:[%s3 + $0x28] sm:$0xff] %vm507, %v622
    %635 = vst [vmem:[%s3 + $0x30] sm:$0xff] %v623
    %636 = vst [vmem:[%s3 + $0x38] sm:$0xff] %v624
    %637 = vst.msk [vmem:[%s3 + $0x40] sm:$0xff] %vm507, %v625
    %638 = vst [vmem:[%s3 + $0x48] sm:$0xff] %v626
    %639 = vst [vmem:[%s3 + $0x50] sm:$0xff] %v627
    %640 = vst.msk [vmem:[%s3 + $0x58] sm:$0xff] %vm507, %v628
  $region21: #{discriminator_forward.7} parent=0 // pred_fallthru
    _
  // Predicated region
  $region22: #{discriminator_forward.7} parent=0 // pred_check
    _
  $region23: #{discriminator_forward.7} parent=0 // pred_check_branch
    %642 = sbr.rel (0) target = $region25
  $region24: #{discriminator_forward.7} parent=0 // pred_region
    _
  $region25: #{discriminator_forward.7} parent=0 // pred_fallthru
    _
  // Predicated region
  $region26: #{discriminator_forward.7} parent=0 // pred_check
    _
  $region27: #{discriminator_forward.7} parent=0 // pred_check_branch
    %644 = sbr.rel (0) target = $region29
  $region28: #{discriminator_forward.7} parent=0 // pred_region
    _
  $region29: #{discriminator_forward.7} parent=0 // pred_fallthru
    _
  // Predicated region
  $region30: #{discriminator_forward.7} parent=0 // pred_check
    _
  $region31: #{discriminator_forward.7} parent=0 // pred_check_branch
    %646 = sbr.rel (0) target = $region33
  $region32: #{discriminator_forward.7} parent=0 // pred_region
    _
  $region33: #{discriminator_forward.7} parent=0 // pred_fallthru
    _
  // Predicated region
  $region34: #{discriminator_forward.7} parent=0 // pred_check
    _
  $region35: #{discriminator_forward.7} parent=0 // pred_check_branch
    %648 = sbr.rel (0) target = $region37
  $region36: #{discriminator_forward.7} parent=0 // pred_region
    _
  $region37: #{discriminator_forward.7} parent=0 // pred_fallthru
    _
  // Predicated region
  $region38: #{discriminator_forward.7} parent=0 // pred_check
    _
  $region39: #{discriminator_forward.7} parent=0 // pred_check_branch
    %650 = sbr.rel (0) target = $region41
  $region40: #{discriminator_forward.7} parent=0 // pred_region
    _
  $region41: #{discriminator_forward.7} parent=0 // pred_fallthru
    _
  // Predicated region
  $region42: #{discriminator_forward.7} parent=0 // pred_check
    _
  $region43: #{discriminator_forward.7} parent=0 // pred_check_branch
    %652 = sbr.rel (0) target = $region45
  $region44: #{discriminator_forward.7} parent=0 // pred_region
    _
  $region45: #{discriminator_forward.7} parent=0 // pred_fallthru
    _

// kernel: discriminator_forward.8
$region0: #{discriminator_forward.8}
  #allocation0 [shape = 'u32[]', space=smem, size = 0x4, offset = 0x4, fixed_abs, tag = 'smem constant byte address 0x4 - core index']
  #allocation1 [shape = 'u32[144,128]{1,0:T(1,128)}', space=vmem, size = 0x12000, scoped, tag = 'internal scratch']
  %s0 = inlined_call_operand.vmem [shape: bf16[64,512], index: 0, kind: input, shape index: {}]
  %s1 = inlined_call_operand.vmem [shape: bf16[512,72], index: 1, kind: input, shape index: {}]
  %s2 = inlined_call_operand.vmem [shape: f32[64,1], index: 2, kind: input, shape index: {}]
  %s3 = inlined_call_operand.vmem [shape: f32[64,72], index: 3, kind: output, shape index: {0}]
  %s4 = inlined_call_operand.vmem [shape: f32[1,64,128], index: 4, kind: output, shape index: {1}]
  %s5 = inlined_call_operand.vmem [shape: f32[1,64,128], index: 5, kind: output, shape index: {2}]
  %6 = xla_tuple %s3, %s4, %s5
  %s7 = sld [smem:[#allocation0]]
  $region46: #{discriminator_forward.8} parent=0
    _
  %s9 = ssub.s32 1, %s7
  %s10 = scalar_select 0, %s9, %s7
  // Predicated region
  $region2: #{discriminator_forward.8} parent=0 // pred_check
    _
  $region3: #{discriminator_forward.8} parent=0 // pred_check_branch
    %12 = sbr.rel (0) target = $region5
  $region4: #{discriminator_forward.8} parent=0 // pred_region
    _
  $region5: #{discriminator_forward.8} parent=0 // pred_fallthru
    _
  // Predicated region
  $region6: #{discriminator_forward.8} parent=0 // pred_check
    _
  $region7: #{discriminator_forward.8} parent=0 // pred_check_branch
    %14 = sbr.rel (0) target = $region9
  $region8: #{discriminator_forward.8} parent=0 // pred_region
    _
  $region9: #{discriminator_forward.8} parent=0 // pred_fallthru
    _
  // Predicated region
  $region10: #{discriminator_forward.8} parent=0 // pred_check
    _
  $region11: #{discriminator_forward.8} parent=0 // pred_check_branch
    %16 = sbr.rel (0) target = $region13
  $region12: #{discriminator_forward.8} parent=0 // pred_region
    _
  $region13: #{discriminator_forward.8} parent=0 // pred_fallthru
    _
  %p18 = scmp.eq.s32.totalorder 0, 0
  // Predicated region
  $region14: #{discriminator_forward.8} parent=0 // pred_check
    %p19 = pneg %p18
  $region15: #{discriminator_forward.8} parent=0 // pred_check_branch
    %21 = sbr.rel (%p19) target = $region17
  $region16: #{discriminator_forward.8} parent=0 // pred_region
    %vm22 = vcmask 588800
    %23 = vst.msk [vmem:[%s3] sm:$0xff] %vm22, 0.0
    %24 = vst.msk [vmem:[%s3 + $0x8] sm:$0xff] %vm22, 0.0
    %25 = vst.msk [vmem:[%s3 + $0x10] sm:$0xff] %vm22, 0.0
    %26 = vst.msk [vmem:[%s3 + $0x18] sm:$0xff] %vm22, 0.0
    %27 = vst.msk [vmem:[%s3 + $0x20] sm:$0xff] %vm22, 0.0
    %28 = vst.msk [vmem:[%s3 + $0x28] sm:$0xff] %vm22, 0.0
    %29 = vst.msk [vmem:[%s3 + $0x30] sm:$0xff] %vm22, 0.0
    %30 = vst.msk [vmem:[%s3 + $0x38] sm:$0xff] %vm22, 0.0
  $region17: #{discriminator_forward.8} parent=0 // pred_fallthru
    _
  %v31 = vld [vmem:[%s3] sm:$0xff]
  %v32 = vld [vmem:[%s3 + $0x8] sm:$0xff]
  %v33 = vld [vmem:[%s3 + $0x10] sm:$0xff]
  %v34 = vld [vmem:[%s3 + $0x18] sm:$0xff]
  %v35 = vld [vmem:[%s3 + $0x20] sm:$0xff]
  %v36 = vld [vmem:[%s3 + $0x28] sm:$0xff]
  %v37 = vld [vmem:[%s3 + $0x30] sm:$0xff]
  %v38 = vld [vmem:[%s3 + $0x38] sm:$0xff]
  %v39 = vld [vmem:[%s0] sm:$0xff]
  %v40 = vld [vmem:[%s0 + $0x8] sm:$0xff]
  %v41 = vld [vmem:[%s0 + $0x10] sm:$0xff]
  %v42 = vld [vmem:[%s0 + $0x18] sm:$0xff]
  %v43 = vld [vmem:[%s0 + $0x20] sm:$0xff]
  %v44 = vld [vmem:[%s0 + $0x28] sm:$0xff]
  %v45 = vld [vmem:[%s0 + $0x30] sm:$0xff]
  %v46 = vld [vmem:[%s0 + $0x38] sm:$0xff]
  %v47 = vld [vmem:[%s0 + $0x40] sm:$0xff]
  %v48 = vld [vmem:[%s0 + $0x48] sm:$0xff]
  %v49 = vld [vmem:[%s0 + $0x50] sm:$0xff]
  %v50 = vld [vmem:[%s0 + $0x58] sm:$0xff]
  %v51 = vld [vmem:[%s0 + $0x60] sm:$0xff]
  %v52 = vld [vmem:[%s0 + $0x68] sm:$0xff]
  %v53 = vld [vmem:[%s0 + $0x70] sm:$0xff]
  %v54 = vld [vmem:[%s0 + $0x78] sm:$0xff]
  %v55 = vld [vmem:[%s1] sm:$0xf]
  %v56 = vld [vmem:[%s1 + $0x4] sm:$0xf]
  %v57 = vld [vmem:[%s1 + $0x8] sm:$0xf]
  %v58 = vld [vmem:[%s1 + $0xc] sm:$0xf]
  %v59 = vld [vmem:[%s1 + $0x10] sm:$0xf]
  %v60 = vld [vmem:[%s1 + $0x14] sm:$0xf]
  %v61 = vld [vmem:[%s1 + $0x18] sm:$0xf]
  %v62 = vld [vmem:[%s1 + $0x1c] sm:$0xf]
  %v63 = vld [vmem:[%s1 + $0x20] sm:$0xf]
  %v64 = vld [vmem:[%s1 + $0x24] sm:$0xf]
  %v65 = vld [vmem:[%s1 + $0x28] sm:$0xf]
  %v66 = vld [vmem:[%s1 + $0x2c] sm:$0xf]
  %v67 = vld [vmem:[%s1 + $0x30] sm:$0xf]
  %v68 = vld [vmem:[%s1 + $0x34] sm:$0xf]
  %v69 = vld [vmem:[%s1 + $0x38] sm:$0xf]
  %v70 = vld [vmem:[%s1 + $0x3c] sm:$0xf]
  %v71 = vld [vmem:[%s1 + $0x40] sm:$0xf]
  %v72 = vld [vmem:[%s1 + $0x44] sm:$0xf]
  %v73 = vld [vmem:[%s1 + $0x48] sm:$0xf]
  %v74 = vld [vmem:[%s1 + $0x4c] sm:$0xf]
  %v75 = vld [vmem:[%s1 + $0x50] sm:$0xf]
  %v76 = vld [vmem:[%s1 + $0x54] sm:$0xf]
  %v77 = vld [vmem:[%s1 + $0x58] sm:$0xf]
  %v78 = vld [vmem:[%s1 + $0x5c] sm:$0xf]
  %v79 = vld [vmem:[%s1 + $0x60] sm:$0xf]
  %v80 = vld [vmem:[%s1 + $0x64] sm:$0xf]
  %v81 = vld [vmem:[%s1 + $0x68] sm:$0xf]
  %v82 = vld [vmem:[%s1 + $0x6c] sm:$0xf]
  %v83 = vld [vmem:[%s1 + $0x70] sm:$0xf]
  %v84 = vld [vmem:[%s1 + $0x74] sm:$0xf]
  %v85 = vld [vmem:[%s1 + $0x78] sm:$0xf]
  %v86 = vld [vmem:[%s1 + $0x7c] sm:$0xf]
  %v87 = vld [vmem:[%s1 + $0x80] sm:$0xf]
  %v88 = vld [vmem:[%s1 + $0x84] sm:$0xf]
  %v89 = vld [vmem:[%s1 + $0x88] sm:$0xf]
  %v90 = vld [vmem:[%s1 + $0x8c] sm:$0xf]
  %v91 = vld [vmem:[%s1 + $0x90] sm:$0xf]
  %v92 = vld [vmem:[%s1 + $0x94] sm:$0xf]
  %v93 = vld [vmem:[%s1 + $0x98] sm:$0xf]
  %v94 = vld [vmem:[%s1 + $0x9c] sm:$0xf]
  %v95 = vld [vmem:[%s1 + $0xa0] sm:$0xf]
  %v96 = vld [vmem:[%s1 + $0xa4] sm:$0xf]
  %v97 = vld [vmem:[%s1 + $0xa8] sm:$0xf]
  %v98 = vld [vmem:[%s1 + $0xac] sm:$0xf]
  %v99 = vld [vmem:[%s1 + $0xb0] sm:$0xf]
  %v100 = vld [vmem:[%s1 + $0xb4] sm:$0xf]
  %v101 = vld [vmem:[%s1 + $0xb8] sm:$0xf]
  %v102 = vld [vmem:[%s1 + $0xbc] sm:$0xf]
  %v103 = vld [vmem:[%s1 + $0xc0] sm:$0xf]
  %v104 = vld [vmem:[%s1 + $0xc4] sm:$0xf]
  %v105 = vld [vmem:[%s1 + $0xc8] sm:$0xf]
  %v106 = vld [vmem:[%s1 + $0xcc] sm:$0xf]
  %v107 = vld [vmem:[%s1 + $0xd0] sm:$0xf]
  %v108 = vld [vmem:[%s1 + $0xd4] sm:$0xf]
  %v109 = vld [vmem:[%s1 + $0xd8] sm:$0xf]
  %v110 = vld [vmem:[%s1 + $0xdc] sm:$0xf]
  %v111 = vld [vmem:[%s1 + $0xe0] sm:$0xf]
  %v112 = vld [vmem:[%s1 + $0xe4] sm:$0xf]
  %v113 = vld [vmem:[%s1 + $0xe8] sm:$0xf]
  %v114 = vld [vmem:[%s1 + $0xec] sm:$0xf]
  %v115 = vld [vmem:[%s1 + $0xf0] sm:$0xf]
  %v116 = vld [vmem:[%s1 + $0xf4] sm:$0xf]
  %v117 = vld [vmem:[%s1 + $0xf8] sm:$0xf]
  %v118 = vld [vmem:[%s1 + $0xfc] sm:$0xf]
  %v135 = vunpack.c.l.b16 %v39
  %v136 = vunpack.c.h.b16 %v39
  %v137 = vunpack.c.l.b16 %v40
  %v138 = vunpack.c.h.b16 %v40
  %v139 = vunpack.c.l.b16 %v41
  %v140 = vunpack.c.h.b16 %v41
  %v141 = vunpack.c.l.b16 %v42
  %v142 = vunpack.c.h.b16 %v42
  %v143 = vunpack.c.l.b16 %v43
  %v144 = vunpack.c.h.b16 %v43
  %v145 = vunpack.c.l.b16 %v44
  %v146 = vunpack.c.h.b16 %v44
  %v147 = vunpack.c.l.b16 %v45
  %v148 = vunpack.c.h.b16 %v45
  %v149 = vunpack.c.l.b16 %v46
  %v150 = vunpack.c.h.b16 %v46
  %v151 = vunpack.c.l.b16 %v47
  %v152 = vunpack.c.h.b16 %v47
  %v153 = vunpack.c.l.b16 %v48
  %v154 = vunpack.c.h.b16 %v48
  %v155 = vunpack.c.l.b16 %v49
  %v156 = vunpack.c.h.b16 %v49
  %v157 = vunpack.c.l.b16 %v50
  %v158 = vunpack.c.h.b16 %v50
  %v159 = vunpack.c.l.b16 %v51
  %v160 = vunpack.c.h.b16 %v51
  %v161 = vunpack.c.l.b16 %v52
  %v162 = vunpack.c.h.b16 %v52
  %v163 = vunpack.c.l.b16 %v53
  %v164 = vunpack.c.h.b16 %v53
  %v165 = vunpack.c.l.b16 %v54
  %v166 = vunpack.c.h.b16 %v54
  %v167 = vpack.c.b16 %v139, %v135
  %v168 = vpack.c.b16 %v140, %v136
  %v169 = vpack.c.b16 %v141, %v137
  %v170 = vpack.c.b16 %v142, %v138
  %v171 = vpack.c.b16 %v147, %v143
  %v172 = vpack.c.b16 %v148, %v144
  %v173 = vpack.c.b16 %v149, %v145
  %v174 = vpack.c.b16 %v150, %v146
  %v175 = vpack.c.b16 %v155, %v151
  %v176 = vpack.c.b16 %v156, %v152
  %v177 = vpack.c.b16 %v157, %v153
  %v178 = vpack.c.b16 %v158, %v154
  %v179 = vpack.c.b16 %v163, %v159
  %v180 = vpack.c.b16 %v164, %v160
  %v181 = vpack.c.b16 %v165, %v161
  %v182 = vpack.c.b16 %v166, %v162
  %v263 = vunpack.c.l.b16 %v55
  %v264 = vunpack.c.l.b16 %v56
  %v265 = vunpack.c.l.b16 %v57
  %v266 = vunpack.c.l.b16 %v58
  %v267 = vunpack.c.l.b16 %v59
  %v268 = vunpack.c.l.b16 %v60
  %v269 = vunpack.c.l.b16 %v61
  %v270 = vunpack.c.l.b16 %v62
  %v271 = vunpack.c.l.b16 %v63
  %v272 = vunpack.c.l.b16 %v64
  %v273 = vunpack.c.l.b16 %v65
  %v274 = vunpack.c.l.b16 %v66
  %v275 = vunpack.c.l.b16 %v67
  %v276 = vunpack.c.l.b16 %v68
  %v277 = vunpack.c.l.b16 %v69
  %v278 = vunpack.c.l.b16 %v70
  %v279 = vunpack.c.l.b16 %v71
  %v280 = vunpack.c.l.b16 %v72
  %v281 = vunpack.c.l.b16 %v73
  %v282 = vunpack.c.l.b16 %v74
  %v283 = vunpack.c.l.b16 %v75
  %v284 = vunpack.c.l.b16 %v76
  %v285 = vunpack.c.l.b16 %v77
  %v286 = vunpack.c.l.b16 %v78
  %v287 = vunpack.c.l.b16 %v79
  %v288 = vunpack.c.l.b16 %v80
  %v289 = vunpack.c.l.b16 %v81
  %v290 = vunpack.c.l.b16 %v82
  %v291 = vunpack.c.l.b16 %v83
  %v292 = vunpack.c.l.b16 %v84
  %v293 = vunpack.c.l.b16 %v85
  %v294 = vunpack.c.l.b16 %v86
  %v295 = vunpack.c.l.b16 %v87
  %v296 = vunpack.c.l.b16 %v88
  %v297 = vunpack.c.l.b16 %v89
  %v298 = vunpack.c.l.b16 %v90
  %v299 = vunpack.c.l.b16 %v91
  %v300 = vunpack.c.l.b16 %v92
  %v301 = vunpack.c.l.b16 %v93
  %v302 = vunpack.c.l.b16 %v94
  %v303 = vunpack.c.l.b16 %v95
  %v304 = vunpack.c.l.b16 %v96
  %v305 = vunpack.c.l.b16 %v97
  %v306 = vunpack.c.l.b16 %v98
  %v307 = vunpack.c.l.b16 %v99
  %v308 = vunpack.c.l.b16 %v100
  %v309 = vunpack.c.l.b16 %v101
  %v310 = vunpack.c.l.b16 %v102
  %v311 = vunpack.c.l.b16 %v103
  %v312 = vunpack.c.l.b16 %v104
  %v313 = vunpack.c.l.b16 %v105
  %v314 = vunpack.c.l.b16 %v106
  %v315 = vunpack.c.l.b16 %v107
  %v316 = vunpack.c.l.b16 %v108
  %v317 = vunpack.c.l.b16 %v109
  %v318 = vunpack.c.l.b16 %v110
  %v319 = vunpack.c.l.b16 %v111
  %v320 = vunpack.c.l.b16 %v112
  %v321 = vunpack.c.l.b16 %v113
  %v322 = vunpack.c.l.b16 %v114
  %v323 = vunpack.c.l.b16 %v115
  %v324 = vunpack.c.l.b16 %v116
  %v325 = vunpack.c.l.b16 %v117
  %v326 = vunpack.c.l.b16 %v118
  %v327 = vpack.c.b16 %v264, %v263
  %v328 = vpack.c.b16 %v266, %v265
  %v329 = vpack.c.b16 %v268, %v267
  %v330 = vpack.c.b16 %v270, %v269
  %v331 = vpack.c.b16 %v272, %v271
  %v332 = vpack.c.b16 %v274, %v273
  %v333 = vpack.c.b16 %v276, %v275
  %v334 = vpack.c.b16 %v278, %v277
  %v335 = vpack.c.b16 %v280, %v279
  %v336 = vpack.c.b16 %v282, %v281
  %v337 = vpack.c.b16 %v284, %v283
  %v338 = vpack.c.b16 %v286, %v285
  %v339 = vpack.c.b16 %v288, %v287
  %v340 = vpack.c.b16 %v290, %v289
  %v341 = vpack.c.b16 %v292, %v291
  %v342 = vpack.c.b16 %v294, %v293
  %v343 = vpack.c.b16 %v296, %v295
  %v344 = vpack.c.b16 %v298, %v297
  %v345 = vpack.c.b16 %v300, %v299
  %v346 = vpack.c.b16 %v302, %v301
  %v347 = vpack.c.b16 %v304, %v303
  %v348 = vpack.c.b16 %v306, %v305
  %v349 = vpack.c.b16 %v308, %v307
  %v350 = vpack.c.b16 %v310, %v309
  %v351 = vpack.c.b16 %v312, %v311
  %v352 = vpack.c.b16 %v314, %v313
  %v353 = vpack.c.b16 %v316, %v315
  %v354 = vpack.c.b16 %v318, %v317
  %v355 = vpack.c.b16 %v320, %v319
  %v356 = vpack.c.b16 %v322, %v321
  %v357 = vpack.c.b16 %v324, %v323
  %v358 = vpack.c.b16 %v326, %v325
  %391 = vmatprep.subr.bf16.mxu0 0
  %392 = vmatpush1.bf16.msra.mxu0 %v327
  %393 = vmatprep.subr.bf16.mxu0 0
  %394 = vmatpush1.bf16.msra.mxu0 %v328
  %395 = vmatprep.subr.bf16.mxu0 0
  %396 = vmatpush1.bf16.msra.mxu0 %v329
  %397 = vmatprep.subr.bf16.mxu0 0
  %398 = vmatpush1.bf16.msra.mxu0 %v330
  %399 = vmatprep.subr.bf16.mxu0 0
  %400 = vmatpush1.bf16.msra.mxu0 %v331
  %401 = vmatprep.subr.bf16.mxu0 0
  %402 = vmatpush1.bf16.msra.mxu0 %v332
  %403 = vmatprep.subr.bf16.mxu0 0
  %404 = vmatpush1.bf16.msra.mxu0 %v333
  %405 = vmatprep.subr.bf16.mxu0 0
  %406 = vmatpush1.bf16.msra.mxu0 %v334
  %407 = vmatprep.subr.bf16.mxu0 0
  %408 = vmatpush1.bf16.msra.mxu0 %v335
  %409 = vmatprep.subr.bf16.mxu0 0
  %410 = vmatpush1.bf16.msra.mxu0 %v336
  %411 = vmatprep.subr.bf16.mxu0 0
  %412 = vmatpush1.bf16.msra.mxu0 %v337
  %413 = vmatprep.subr.bf16.mxu0 0
  %414 = vmatpush1.bf16.msra.mxu0 %v338
  %415 = vmatprep.subr.bf16.mxu0 0
  %416 = vmatpush1.bf16.msra.mxu0 %v339
  %417 = vmatprep.subr.bf16.mxu0 0
  %418 = vmatpush1.bf16.msra.mxu0 %v340
  %419 = vmatprep.subr.bf16.mxu0 0
  %420 = vmatpush1.bf16.msra.mxu0 %v341
  %421 = vmatprep.subr.bf16.mxu0 0
  %422 = vmatpush1.bf16.msra.mxu0 %v342
  %423 = vmatprep.mubr.bf16.mxu0 %v168
  %424 = vmatmul.mubr.bf16.gmra.mrb[0].mxu0 %v167
  %v425 = vpop.f32.mrb[0].mxu0
  %v426 = vadd.f32 0.0, %v425
  %v427 = vpop.f32.mrb[0].mxu0
  %v428 = vpop.f32.mrb[0].mxu0
  %v429 = vadd.f32 0.0, %v428
  %v430 = vpop.f32.mrb[0].mxu0
  %431 = vmatprep.mubr.bf16.mxu0 %v172
  %432 = vmatmul.mubr.bf16.gmra.mrb[0].mxu0 %v171
  %v433 = vpop.f32.mrb[0].mxu0
  %v434 = vadd.f32 0.0, %v433
  %v435 = vpop.f32.mrb[0].mxu0
  %v436 = vpop.f32.mrb[0].mxu0
  %v437 = vadd.f32 0.0, %v436
  %v438 = vpop.f32.mrb[0].mxu0
  %439 = vmatprep.mubr.bf16.mxu0 %v176
  %440 = vmatmul.mubr.bf16.gmra.mrb[0].mxu0 %v175
  %v441 = vpop.f32.mrb[0].mxu0
  %v442 = vadd.f32 0.0, %v441
  %v443 = vpop.f32.mrb[0].mxu0
  %v444 = vpop.f32.mrb[0].mxu0
  %v445 = vadd.f32 0.0, %v444
  %v446 = vpop.f32.mrb[0].mxu0
  %447 = vmatprep.mubr.bf16.mxu0 %v180
  %448 = vmatmul.mubr.bf16.gmra.mrb[0].mxu0 %v179
  %v449 = vpop.f32.mrb[0].mxu0
  %v450 = vadd.f32 0.0, %v449
  %v451 = vpop.f32.mrb[0].mxu0
  %v452 = vpop.f32.mrb[0].mxu0
  %v453 = vadd.f32 0.0, %v452
  %v454 = vpop.f32.mrb[0].mxu0
  %455 = vdwg.mxu0
  %456 = vmatprep.subr.bf16.mxu0 0
  %457 = vmatpush1.bf16.msra.mxu0 %v343
  %458 = vmatprep.subr.bf16.mxu0 0
  %459 = vmatpush1.bf16.msra.mxu0 %v344
  %460 = vmatprep.subr.bf16.mxu0 0
  %461 = vmatpush1.bf16.msra.mxu0 %v345
  %462 = vmatprep.subr.bf16.mxu0 0
  %463 = vmatpush1.bf16.msra.mxu0 %v346
  %464 = vmatprep.subr.bf16.mxu0 0
  %465 = vmatpush1.bf16.msra.mxu0 %v347
  %466 = vmatprep.subr.bf16.mxu0 0
  %467 = vmatpush1.bf16.msra.mxu0 %v348
  %468 = vmatprep.subr.bf16.mxu0 0
  %469 = vmatpush1.bf16.msra.mxu0 %v349
  %470 = vmatprep.subr.bf16.mxu0 0
  %471 = vmatpush1.bf16.msra.mxu0 %v350
  %472 = vmatprep.subr.bf16.mxu0 0
  %473 = vmatpush1.bf16.msra.mxu0 %v351
  %474 = vmatprep.subr.bf16.mxu0 0
  %475 = vmatpush1.bf16.msra.mxu0 %v352
  %476 = vmatprep.subr.bf16.mxu0 0
  %477 = vmatpush1.bf16.msra.mxu0 %v353
  %478 = vmatprep.subr.bf16.mxu0 0
  %479 = vmatpush1.bf16.msra.mxu0 %v354
  %480 = vmatprep.subr.bf16.mxu0 0
  %481 = vmatpush1.bf16.msra.mxu0 %v355
  %482 = vmatprep.subr.bf16.mxu0 0
  %483 = vmatpush1.bf16.msra.mxu0 %v356
  %484 = vmatprep.subr.bf16.mxu0 0
  %485 = vmatpush1.bf16.msra.mxu0 %v357
  %486 = vmatprep.subr.bf16.mxu0 0
  %487 = vmatpush1.bf16.msra.mxu0 %v358
  %488 = vmatprep.mubr.bf16.mxu0 %v170
  %489 = vmatmul.mubr.bf16.gmra.mrb[0].mxu0 %v169
  %v490 = vpop.f32.mrb[0].mxu0
  %v491 = vadd.f32 %v426, %v490
  %v492 = vpop.f32.mrb[0].mxu0
  %v493 = vpop.f32.mrb[0].mxu0
  %v494 = vadd.f32 %v429, %v493
  %v495 = vpop.f32.mrb[0].mxu0
  %496 = vmatprep.mubr.bf16.mxu0 %v174
  %497 = vmatmul.mubr.bf16.gmra.mrb[0].mxu0 %v173
  %v498 = vpop.f32.mrb[0].mxu0
  %v499 = vadd.f32 %v434, %v498
  %v500 = vpop.f32.mrb[0].mxu0
  %v501 = vpop.f32.mrb[0].mxu0
  %v502 = vadd.f32 %v437, %v501
  %v503 = vpop.f32.mrb[0].mxu0
  %504 = vmatprep.mubr.bf16.mxu0 %v178
  %505 = vmatmul.mubr.bf16.gmra.mrb[0].mxu0 %v177
  %v506 = vpop.f32.mrb[0].mxu0
  %v507 = vadd.f32 %v442, %v506
  %v508 = vpop.f32.mrb[0].mxu0
  %v509 = vpop.f32.mrb[0].mxu0
  %v510 = vadd.f32 %v445, %v509
  %v511 = vpop.f32.mrb[0].mxu0
  %512 = vmatprep.mubr.bf16.mxu0 %v182
  %513 = vmatmul.mubr.bf16.gmra.mrb[0].mxu0 %v181
  %v514 = vpop.f32.mrb[0].mxu0
  %v515 = vadd.f32 %v450, %v514
  %v516 = vpop.f32.mrb[0].mxu0
  %v517 = vpop.f32.mrb[0].mxu0
  %v518 = vadd.f32 %v453, %v517
  %v519 = vpop.f32.mrb[0].mxu0
  %520 = vdwg.mxu0
  %v521 = vadd.f32 %v31, %v491
  %v522 = vadd.f32 %v32, %v494
  %v523 = vadd.f32 %v33, %v499
  %v524 = vadd.f32 %v34, %v502
  %v525 = vadd.f32 %v35, %v507
  %v526 = vadd.f32 %v36, %v510
  %v527 = vadd.f32 %v37, %v515
  %v528 = vadd.f32 %v38, %v518
  %vm529 = vcmask 588800
  %530 = vst.msk [vmem:[%s3] sm:$0xff] %vm529, %v521
  %531 = vst.msk [vmem:[%s3 + $0x8] sm:$0xff] %vm529, %v522
  %532 = vst.msk [vmem:[%s3 + $0x10] sm:$0xff] %vm529, %v523
  %533 = vst.msk [vmem:[%s3 + $0x18] sm:$0xff] %vm529, %v524
  %534 = vst.msk [vmem:[%s3 + $0x20] sm:$0xff] %vm529, %v525
  %535 = vst.msk [vmem:[%s3 + $0x28] sm:$0xff] %vm529, %v526
  %536 = vst.msk [vmem:[%s3 + $0x30] sm:$0xff] %vm529, %v527
  %537 = vst.msk [vmem:[%s3 + $0x38] sm:$0xff] %vm529, %v528
  // Predicated region
  $region18: #{discriminator_forward.8} parent=0 // pred_check
    %p538 = pneg %p18
  $region19: #{discriminator_forward.8} parent=0 // pred_check_branch
    %540 = sbr.rel (%p538) target = $region21
  $region20: #{discriminator_forward.8} parent=0 // pred_region
    %v541 = vld [vmem:[%s3] sm:$0xff]
    %v542 = vld [vmem:[%s3 + $0x8] sm:$0xff]
    %v543 = vld [vmem:[%s3 + $0x10] sm:$0xff]
    %v544 = vld [vmem:[%s3 + $0x18] sm:$0xff]
    %v545 = vld [vmem:[%s3 + $0x20] sm:$0xff]
    %v546 = vld [vmem:[%s3 + $0x28] sm:$0xff]
    %v547 = vld [vmem:[%s3 + $0x30] sm:$0xff]
    %v548 = vld [vmem:[%s3 + $0x38] sm:$0xff]
    %v549 = vsel %vm529, %v541, 0.0
    %550 = vadd.xlane.f32.xlu0 %v549
    %v551 = vpop.xlane.xlu0 %550
    %v552 = vsel %vm529, %v542, 0.0
    %553 = vadd.xlane.f32.xlu0 %v552
    %v554 = vpop.xlane.xlu0 %553
    %v555 = vsel %vm529, %v543, 0.0
    %556 = vadd.xlane.f32.xlu0 %v555
    %v557 = vpop.xlane.xlu0 %556
    %v558 = vsel %vm529, %v544, 0.0
    %559 = vadd.xlane.f32.xlu0 %v558
    %v560 = vpop.xlane.xlu0 %559
    %v561 = vsel %vm529, %v545, 0.0
    %562 = vadd.xlane.f32.xlu0 %v561
    %v563 = vpop.xlane.xlu0 %562
    %v564 = vsel %vm529, %v546, 0.0
    %565 = vadd.xlane.f32.xlu0 %v564
    %v566 = vpop.xlane.xlu0 %565
    %v567 = vsel %vm529, %v547, 0.0
    %568 = vadd.xlane.f32.xlu0 %v567
    %v569 = vpop.xlane.xlu0 %568
    %v570 = vsel %vm529, %v548, 0.0
    %571 = vadd.xlane.f32.xlu0 %v570
    %v572 = vpop.xlane.xlu0 %571
    %v573 = vmul.f32 %v541, %v541
    %v574 = vmul.f32 %v542, %v542
    %v575 = vmul.f32 %v543, %v543
    %v576 = vmul.f32 %v544, %v544
    %v577 = vmul.f32 %v545, %v545
    %v578 = vmul.f32 %v546, %v546
    %v579 = vmul.f32 %v547, %v547
    %v580 = vmul.f32 %v548, %v548
    %v581 = vsel %vm529, %v573, 0.0
    %582 = vadd.xlane.f32.xlu0 %v581
    %v583 = vpop.xlane.xlu0 %582
    %v584 = vsel %vm529, %v574, 0.0
    %585 = vadd.xlane.f32.xlu0 %v584
    %v586 = vpop.xlane.xlu0 %585
    %v587 = vsel %vm529, %v575, 0.0
    %588 = vadd.xlane.f32.xlu0 %v587
    %v589 = vpop.xlane.xlu0 %588
    %v590 = vsel %vm529, %v576, 0.0
    %591 = vadd.xlane.f32.xlu0 %v590
    %v592 = vpop.xlane.xlu0 %591
    %v593 = vsel %vm529, %v577, 0.0
    %594 = vadd.xlane.f32.xlu0 %v593
    %v595 = vpop.xlane.xlu0 %594
    %v596 = vsel %vm529, %v578, 0.0
    %597 = vadd.xlane.f32.xlu0 %v596
    %v598 = vpop.xlane.xlu0 %597
    %v599 = vsel %vm529, %v579, 0.0
    %600 = vadd.xlane.f32.xlu0 %v599
    %v601 = vpop.xlane.xlu0 %600
    %v602 = vsel %vm529, %v580, 0.0
    %603 = vadd.xlane.f32.xlu0 %v602
    %v604 = vpop.xlane.xlu0 %603
    %605 = vst [vmem:[%s4] sm:$0xff] %v551
    %606 = vst [vmem:[%s4 + $0x8] sm:$0xff] %v554
    %607 = vst [vmem:[%s4 + $0x10] sm:$0xff] %v557
    %608 = vst [vmem:[%s4 + $0x18] sm:$0xff] %v560
    %609 = vst [vmem:[%s4 + $0x20] sm:$0xff] %v563
    %610 = vst [vmem:[%s4 + $0x28] sm:$0xff] %v566
    %611 = vst [vmem:[%s4 + $0x30] sm:$0xff] %v569
    %612 = vst [vmem:[%s4 + $0x38] sm:$0xff] %v572
    %613 = vst [vmem:[%s5] sm:$0xff] %v583
    %614 = vst [vmem:[%s5 + $0x8] sm:$0xff] %v586
    %615 = vst [vmem:[%s5 + $0x10] sm:$0xff] %v589
    %616 = vst [vmem:[%s5 + $0x18] sm:$0xff] %v592
    %617 = vst [vmem:[%s5 + $0x20] sm:$0xff] %v595
    %618 = vst [vmem:[%s5 + $0x28] sm:$0xff] %v598
    %619 = vst [vmem:[%s5 + $0x30] sm:$0xff] %v601
    %620 = vst [vmem:[%s5 + $0x38] sm:$0xff] %v604
    %v621 = vld [vmem:[%s2] sm:$0xff]
    %v622 = vld [vmem:[%s2 + $0x8] sm:$0xff]
    %v623 = vld [vmem:[%s2 + $0x10] sm:$0xff]
    %v624 = vld [vmem:[%s2 + $0x18] sm:$0xff]
    %v625 = vld [vmem:[%s2 + $0x20] sm:$0xff]
    %v626 = vld [vmem:[%s2 + $0x28] sm:$0xff]
    %v627 = vld [vmem:[%s2 + $0x30] sm:$0xff]
    %v628 = vld [vmem:[%s2 + $0x38] sm:$0xff]
    %630 = vset.pattern.permute.xlu0 0
    %631 = vperm.xlu0 %630, %v621
    %v632 = vpop.permute.xlu0 %631
    %635 = vset.pattern.permute.xlu0 0
    %636 = vperm.xlu0 %635, %v622
    %v637 = vpop.permute.xlu0 %636
    %640 = vset.pattern.permute.xlu0 0
    %641 = vperm.xlu0 %640, %v623
    %v642 = vpop.permute.xlu0 %641
    %645 = vset.pattern.permute.xlu0 0
    %646 = vperm.xlu0 %645, %v624
    %v647 = vpop.permute.xlu0 %646
    %650 = vset.pattern.permute.xlu0 0
    %651 = vperm.xlu0 %650, %v625
    %v652 = vpop.permute.xlu0 %651
    %655 = vset.pattern.permute.xlu0 0
    %656 = vperm.xlu0 %655, %v626
    %v657 = vpop.permute.xlu0 %656
    %660 = vset.pattern.permute.xlu0 0
    %661 = vperm.xlu0 %660, %v627
    %v662 = vpop.permute.xlu0 %661
    %665 = vset.pattern.permute.xlu0 0
    %666 = vperm.xlu0 %665, %v628
    %v667 = vpop.permute.xlu0 %666
    %v669 = vadd.f32 %v541, %v632
    %v670 = vadd.f32 %v542, %v637
    %v671 = vadd.f32 %v543, %v642
    %v672 = vadd.f32 %v544, %v647
    %v673 = vadd.f32 %v545, %v652
    %v674 = vadd.f32 %v546, %v657
    %v675 = vadd.f32 %v547, %v662
    %v676 = vadd.f32 %v548, %v667
    %677 = vst.msk [vmem:[%s3] sm:$0xff] %vm529, %v669
    %678 = vst.msk [vmem:[%s3 + $0x8] sm:$0xff] %vm529, %v670
    %679 = vst.msk [vmem:[%s3 + $0x10] sm:$0xff] %vm529, %v671
    %680 = vst.msk [vmem:[%s3 + $0x18] sm:$0xff] %vm529, %v672
    %681 = vst.msk [vmem:[%s3 + $0x20] sm:$0xff] %vm529, %v673
    %682 = vst.msk [vmem:[%s3 + $0x28] sm:$0xff] %vm529, %v674
    %683 = vst.msk [vmem:[%s3 + $0x30] sm:$0xff] %vm529, %v675
    %684 = vst.msk [vmem:[%s3 + $0x38] sm:$0xff] %vm529, %v676
  $region21: #{discriminator_forward.8} parent=0 // pred_fallthru
    _
  // Predicated region
  $region22: #{discriminator_forward.8} parent=0 // pred_check
    _
  $region23: #{discriminator_forward.8} parent=0 // pred_check_branch
    %686 = sbr.rel (0) target = $region25
  $region24: #{discriminator_forward.8} parent=0 // pred_region
    _
  $region25: #{discriminator_forward.8} parent=0 // pred_fallthru
    _
  // Predicated region
  $region26: #{discriminator_forward.8} parent=0 // pred_check
    _
  $region27: #{discriminator_forward.8} parent=0 // pred_check_branch
    %688 = sbr.rel (0) target = $region29
  $region28: #{discriminator_forward.8} parent=0 // pred_region
    _
  $region29: #{discriminator_forward.8} parent=0 // pred_fallthru
    _
  // Predicated region
  $region30: #{discriminator_forward.8} parent=0 // pred_check
    _
  $region31: #{discriminator_forward.8} parent=0 // pred_check_branch
    %690 = sbr.rel (0) target = $region33
  $region32: #{discriminator_forward.8} parent=0 // pred_region
    _
  $region33: #{discriminator_forward.8} parent=0 // pred_fallthru
    _
  // Predicated region
  $region34: #{discriminator_forward.8} parent=0 // pred_check
    _
  $region35: #{discriminator_forward.8} parent=0 // pred_check_branch
    %692 = sbr.rel (0) target = $region37
  $region36: #{discriminator_forward.8} parent=0 // pred_region
    _
  $region37: #{discriminator_forward.8} parent=0 // pred_fallthru
    _
  // Predicated region
  $region38: #{discriminator_forward.8} parent=0 // pred_check
    _
  $region39: #{discriminator_forward.8} parent=0 // pred_check_branch
    %694 = sbr.rel (0) target = $region41
  $region40: #{discriminator_forward.8} parent=0 // pred_region
    _
  $region41: #{discriminator_forward.8} parent=0 // pred_fallthru
    _
  // Predicated region
  $region42: #{discriminator_forward.8} parent=0 // pred_check
    _
  $region43: #{discriminator_forward.8} parent=0 // pred_check_branch
    %696 = sbr.rel (0) target = $region45
  $region44: #{discriminator_forward.8} parent=0 // pred_region
    _
  $region45: #{discriminator_forward.8} parent=0 // pred_fallthru
    _

// kernel: discriminator_forward.9
$region0: #{discriminator_forward.9}
  #allocation0 [shape = 'u32[]', space=smem, size = 0x4, offset = 0x4, fixed_abs, tag = 'smem constant byte address 0x4 - core index']
  #allocation1 [shape = 'u32[144,128]{1,0:T(1,128)}', space=vmem, size = 0x12000, scoped, tag = 'internal scratch']
  %s0 = inlined_call_operand.vmem [shape: bf16[128,1024], index: 0, kind: input, shape index: {}]
  %s1 = inlined_call_operand.vmem [shape: bf16[1024,18], index: 1, kind: input, shape index: {}]
  %s2 = inlined_call_operand.vmem [shape: f32[128,1], index: 2, kind: input, shape index: {}]
  %s3 = inlined_call_operand.vmem [shape: f32[128,18], index: 3, kind: output, shape index: {}]
  %s4 = sld [smem:[#allocation0]]
  $region30: #{discriminator_forward.9} parent=0
    _
  %s6 = ssub.s32 1, %s4
  %s7 = scalar_select 0, %s6, %s4
  // Predicated region
  $region2: #{discriminator_forward.9} parent=0 // pred_check
    _
  $region3: #{discriminator_forward.9} parent=0 // pred_check_branch
    %9 = sbr.rel (0) target = $region5
  $region4: #{discriminator_forward.9} parent=0 // pred_region
    _
  $region5: #{discriminator_forward.9} parent=0 // pred_fallthru
    _
  // Predicated region
  $region6: #{discriminator_forward.9} parent=0 // pred_check
    _
  $region7: #{discriminator_forward.9} parent=0 // pred_check_branch
    %11 = sbr.rel (0) target = $region9
  $region8: #{discriminator_forward.9} parent=0 // pred_region
    _
  $region9: #{discriminator_forward.9} parent=0 // pred_fallthru
    _
  // Predicated region
  $region10: #{discriminator_forward.9} parent=0 // pred_check
    _
  $region11: #{discriminator_forward.9} parent=0 // pred_check_branch
    %13 = sbr.rel (0) target = $region13
  $region12: #{discriminator_forward.9} parent=0 // pred_region
    _
  $region13: #{discriminator_forward.9} parent=0 // pred_fallthru
    _
  %p15 = scmp.eq.s32.totalorder 0, 0
  // Predicated region
  $region14: #{discriminator_forward.9} parent=0 // pred_check
    %p16 = pneg %p15
  $region15: #{discriminator_forward.9} parent=0 // pred_check_branch
    %18 = sbr.rel (%p16) target = $region17
  $region16: #{discriminator_forward.9} parent=0 // pred_region
    %vm19 = vcmask 146432
    %20 = vst.msk [vmem:[%s3] sm:$0xff] %vm19, 0.0
    %21 = vst.msk [vmem:[%s3 + $0x8] sm:$0xff] %vm19, 0.0
    %22 = vst.msk [vmem:[%s3 + $0x10] sm:$0xff] %vm19, 0.0
    %23 = vst.msk [vmem:[%s3 + $0x18] sm:$0xff] %vm19, 0.0
    %24 = vst.msk [vmem:[%s3 + $0x20] sm:$0xff] %vm19, 0.0
    %25 = vst.msk [vmem:[%s3 + $0x28] sm:$0xff] %vm19, 0.0
    %26 = vst.msk [vmem:[%s3 + $0x30] sm:$0xff] %vm19, 0.0
    %27 = vst.msk [vmem:[%s3 + $0x38] sm:$0xff] %vm19, 0.0
    %28 = vst.msk [vmem:[%s3 + $0x40] sm:$0xff] %vm19, 0.0
    %29 = vst.msk [vmem:[%s3 + $0x48] sm:$0xff] %vm19, 0.0
    %30 = vst.msk [vmem:[%s3 + $0x50] sm:$0xff] %vm19, 0.0
    %31 = vst.msk [vmem:[%s3 + $0x58] sm:$0xff] %vm19, 0.0
    %32 = vst.msk [vmem:[%s3 + $0x60] sm:$0xff] %vm19, 0.0
    %33 = vst.msk [vmem:[%s3 + $0x68] sm:$0xff] %vm19, 0.0
    %34 = vst.msk [vmem:[%s3 + $0x70] sm:$0xff] %vm19, 0.0
    %35 = vst.msk [vmem:[%s3 + $0x78] sm:$0xff] %vm19, 0.0
  $region17: #{discriminator_forward.9} parent=0 // pred_fallthru
    _
  %v36 = vld [vmem:[%s3] sm:$0xff]
  %v37 = vld [vmem:[%s3 + $0x8] sm:$0xff]
  %v38 = vld [vmem:[%s3 + $0x10] sm:$0xff]
  %v39 = vld [vmem:[%s3 + $0x18] sm:$0xff]
  %v40 = vld [vmem:[%s3 + $0x20] sm:$0xff]
  %v41 = vld [vmem:[%s3 + $0x28] sm:$0xff]
  %v42 = vld [vmem:[%s3 + $0x30] sm:$0xff]
  %v43 = vld [vmem:[%s3 + $0x38] sm:$0xff]
  %v44 = vld [vmem:[%s3 + $0x40] sm:$0xff]
  %v45 = vld [vmem:[%s3 + $0x48] sm:$0xff]
  %v46 = vld [vmem:[%s3 + $0x50] sm:$0xff]
  %v47 = vld [vmem:[%s3 + $0x58] sm:$0xff]
  %v48 = vld [vmem:[%s3 + $0x60] sm:$0xff]
  %v49 = vld [vmem:[%s3 + $0x68] sm:$0xff]
  %v50 = vld [vmem:[%s3 + $0x70] sm:$0xff]
  %v51 = vld [vmem:[%s3 + $0x78] sm:$0xff]
  %v52 = vld [vmem:[%s0] sm:$0xff]
  %v53 = vld [vmem:[%s0 + $0x8] sm:$0xff]
  %v54 = vld [vmem:[%s0 + $0x10] sm:$0xff]
  %v55 = vld [vmem:[%s0 + $0x18] sm:$0xff]
  %v56 = vld [vmem:[%s0 + $0x20] sm:$0xff]
  %v57 = vld [vmem:[%s0 + $0x28] sm:$0xff]
  %v58 = vld [vmem:[%s0 + $0x30] sm:$0xff]
  %v59 = vld [vmem:[%s0 + $0x38] sm:$0xff]
  %v60 = vld [vmem:[%s0 + $0x40] sm:$0xff]
  %v61 = vld [vmem:[%s0 + $0x48] sm:$0xff]
  %v62 = vld [vmem:[%s0 + $0x50] sm:$0xff]
  %v63 = vld [vmem:[%s0 + $0x58] sm:$0xff]
  %v64 = vld [vmem:[%s0 + $0x60] sm:$0xff]
  %v65 = vld [vmem:[%s0 + $0x68] sm:$0xff]
  %v66 = vld [vmem:[%s0 + $0x70] sm:$0xff]
  %v67 = vld [vmem:[%s0 + $0x78] sm:$0xff]
  %v68 = vld [vmem:[%s0 + $0x80] sm:$0xff]
  %v69 = vld [vmem:[%s0 + $0x88] sm:$0xff]
  %v70 = vld [vmem:[%s0 + $0x90] sm:$0xff]
  %v71 = vld [vmem:[%s0 + $0x98] sm:$0xff]
  %v72 = vld [vmem:[%s0 + $0xa0] sm:$0xff]
  %v73 = vld [vmem:[%s0 + $0xa8] sm:$0xff]
  %v74 = vld [vmem:[%s0 + $0xb0] sm:$0xff]
  %v75 = vld [vmem:[%s0 + $0xb8] sm:$0xff]
  %v76 = vld [vmem:[%s0 + $0xc0] sm:$0xff]
  %v77 = vld [vmem:[%s0 + $0xc8] sm:$0xff]
  %v78 = vld [vmem:[%s0 + $0xd0] sm:$0xff]
  %v79 = vld [vmem:[%s0 + $0xd8] sm:$0xff]
  %v80 = vld [vmem:[%s0 + $0xe0] sm:$0xff]
  %v81 = vld [vmem:[%s0 + $0xe8] sm:$0xff]
  %v82 = vld [vmem:[%s0 + $0xf0] sm:$0xff]
  %v83 = vld [vmem:[%s0 + $0xf8] sm:$0xff]
  %v84 = vld [vmem:[%s0 + $0x100] sm:$0xff]
  %v85 = vld [vmem:[%s0 + $0x108] sm:$0xff]
  %v86 = vld [vmem:[%s0 + $0x110] sm:$0xff]
  %v87 = vld [vmem:[%s0 + $0x118] sm:$0xff]
  %v88 = vld [vmem:[%s0 + $0x120] sm:$0xff]
  %v89 = vld [vmem:[%s0 + $0x128] sm:$0xff]
  %v90 = vld [vmem:[%s0 + $0x130] sm:$0xff]
  %v91 = vld [vmem:[%s0 + $0x138] sm:$0xff]
  %v92 = vld [vmem:[%s0 + $0x140] sm:$0xff]
  %v93 = vld [vmem:[%s0 + $0x148] sm:$0xff]
  %v94 = vld [vmem:[%s0 + $0x150] sm:$0xff]
  %v95 = vld [vmem:[%s0 + $0x158] sm:$0xff]
  %v96 = vld [vmem:[%s0 + $0x160] sm:$0xff]
  %v97 = vld [vmem:[%s0 + $0x168] sm:$0xff]
  %v98 = vld [vmem:[%s0 + $0x170] sm:$0xff]
  %v99 = vld [vmem:[%s0 + $0x178] sm:$0xff]
  %v100 = vld [vmem:[%s0 + $0x180] sm:$0xff]
  %v101 = vld [vmem:[%s0 + $0x188] sm:$0xff]
  %v102 = vld [vmem:[%s0 + $0x190] sm:$0xff]
  %v103 = vld [vmem:[%s0 + $0x198] sm:$0xff]
  %v104 = vld [vmem:[%s0 + $0x1a0] sm:$0xff]
  %v105 = vld [vmem:[%s0 + $0x1a8] sm:$0xff]
  %v106 = vld [vmem:[%s0 + $0x1b0] sm:$0xff]
  %v107 = vld [vmem:[%s0 + $0x1b8] sm:$0xff]
  %v108 = vld [vmem:[%s0 + $0x1c0] sm:$0xff]
  %v109 = vld [vmem:[%s0 + $0x1c8] sm:$0xff]
  %v110 = vld [vmem:[%s0 + $0x1d0] sm:$0xff]
  %v111 = vld [vmem:[%s0 + $0x1d8] sm:$0xff]
  %v112 = vld [vmem:[%s0 + $0x1e0] sm:$0xff]
  %v113 = vld [vmem:[%s0 + $0x1e8] sm:$0xff]
  %v114 = vld [vmem:[%s0 + $0x1f0] sm:$0xff]
  %v115 = vld [vmem:[%s0 + $0x1f8] sm:$0xff]
  %v116 = vld [vmem:[%s1] sm:$0xf]
  %v117 = vld [vmem:[%s1 + $0x4] sm:$0xf]
  %v118 = vld [vmem:[%s1 + $0x8] sm:$0xf]
  %v119 = vld [vmem:[%s1 + $0xc] sm:$0xf]
  %v120 = vld [vmem:[%s1 + $0x10] sm:$0xf]
  %v121 = vld [vmem:[%s1 + $0x14] sm:$0xf]
  %v122 = vld [vmem:[%s1 + $0x18] sm:$0xf]
  %v123 = vld [vmem:[%s1 + $0x1c] sm:$0xf]
  %v124 = vld [vmem:[%s1 + $0x20] sm:$0xf]
  %v125 = vld [vmem:[%s1 + $0x24] sm:$0xf]
  %v126 = vld [vmem:[%s1 + $0x28] sm:$0xf]
  %v127 = vld [vmem:[%s1 + $0x2c] sm:$0xf]
  %v128 = vld [vmem:[%s1 + $0x30] sm:$0xf]
  %v129 = vld [vmem:[%s1 + $0x34] sm:$0xf]
  %v130 = vld [vmem:[%s1 + $0x38] sm:$0xf]
  %v131 = vld [vmem:[%s1 + $0x3c] sm:$0xf]
  %v132 = vld [vmem:[%s1 + $0x40] sm:$0xf]
  %v133 = vld [vmem:[%s1 + $0x44] sm:$0xf]
  %v134 = vld [vmem:[%s1 + $0x48] sm:$0xf]
  %v135 = vld [vmem:[%s1 + $0x4c] sm:$0xf]
  %v136 = vld [vmem:[%s1 + $0x50] sm:$0xf]
  %v137 = vld [vmem:[%s1 + $0x54] sm:$0xf]
  %v138 = vld [vmem:[%s1 + $0x58] sm:$0xf]
  %v139 = vld [vmem:[%s1 + $0x5c] sm:$0xf]
  %v140 = vld [vmem:[%s1 + $0x60] sm:$0xf]
  %v141 = vld [vmem:[%s1 + $0x64] sm:$0xf]
  %v142 = vld [vmem:[%s1 + $0x68] sm:$0xf]
  %v143 = vld [vmem:[%s1 + $0x6c] sm:$0xf]
  %v144 = vld [vmem:[%s1 + $0x70] sm:$0xf]
  %v145 = vld [vmem:[%s1 + $0x74] sm:$0xf]
  %v146 = vld [vmem:[%s1 + $0x78] sm:$0xf]
  %v147 = vld [vmem:[%s1 + $0x7c] sm:$0xf]
  %v148 = vld [vmem:[%s1 + $0x80] sm:$0xf]
  %v149 = vld [vmem:[%s1 + $0x84] sm:$0xf]
  %v150 = vld [vmem:[%s1 + $0x88] sm:$0xf]
  %v151 = vld [vmem:[%s1 + $0x8c] sm:$0xf]
  %v152 = vld [vmem:[%s1 + $0x90] sm:$0xf]
  %v153 = vld [vmem:[%s1 + $0x94] sm:$0xf]
  %v154 = vld [vmem:[%s1 + $0x98] sm:$0xf]
  %v155 = vld [vmem:[%s1 + $0x9c] sm:$0xf]
  %v156 = vld [vmem:[%s1 + $0xa0] sm:$0xf]
  %v157 = vld [vmem:[%s1 + $0xa4] sm:$0xf]
  %v158 = vld [vmem:[%s1 + $0xa8] sm:$0xf]
  %v159 = vld [vmem:[%s1 + $0xac] sm:$0xf]
  %v160 = vld [vmem:[%s1 + $0xb0] sm:$0xf]
  %v161 = vld [vmem:[%s1 + $0xb4] sm:$0xf]
  %v162 = vld [vmem:[%s1 + $0xb8] sm:$0xf]
  %v163 = vld [vmem:[%s1 + $0xbc] sm:$0xf]
  %v164 = vld [vmem:[%s1 + $0xc0] sm:$0xf]
  %v165 = vld [vmem:[%s1 + $0xc4] sm:$0xf]
  %v166 = vld [vmem:[%s1 + $0xc8] sm:$0xf]
  %v167 = vld [vmem:[%s1 + $0xcc] sm:$0xf]
  %v168 = vld [vmem:[%s1 + $0xd0] sm:$0xf]
  %v169 = vld [vmem:[%s1 + $0xd4] sm:$0xf]
  %v170 = vld [vmem:[%s1 + $0xd8] sm:$0xf]
  %v171 = vld [vmem:[%s1 + $0xdc] sm:$0xf]
  %v172 = vld [vmem:[%s1 + $0xe0] sm:$0xf]
  %v173 = vld [vmem:[%s1 + $0xe4] sm:$0xf]
  %v174 = vld [vmem:[%s1 + $0xe8] sm:$0xf]
  %v175 = vld [vmem:[%s1 + $0xec] sm:$0xf]
  %v176 = vld [vmem:[%s1 + $0xf0] sm:$0xf]
  %v177 = vld [vmem:[%s1 + $0xf4] sm:$0xf]
  %v178 = vld [vmem:[%s1 + $0xf8] sm:$0xf]
  %v179 = vld [vmem:[%s1 + $0xfc] sm:$0xf]
  %v180 = vld [vmem:[%s1 + $0x100] sm:$0xf]
  %v181 = vld [vmem:[%s1 + $0x104] sm:$0xf]
  %v182 = vld [vmem:[%s1 + $0x108] sm:$0xf]
  %v183 = vld [vmem:[%s1 + $0x10c] sm:$0xf]
  %v184 = vld [vmem:[%s1 + $0x110] sm:$0xf]
  %v185 = vld [vmem:[%s1 + $0x114] sm:$0xf]
  %v186 = vld [vmem:[%s1 + $0x118] sm:$0xf]
  %v187 = vld [vmem:[%s1 + $0x11c] sm:$0xf]
  %v188 = vld [vmem:[%s1 + $0x120] sm:$0xf]
  %v189 = vld [vmem:[%s1 + $0x124] sm:$0xf]
  %v190 = vld [vmem:[%s1 + $0x128] sm:$0xf]
  %v191 = vld [vmem:[%s1 + $0x12c] sm:$0xf]
  %v192 = vld [vmem:[%s1 + $0x130] sm:$0xf]
  %v193 = vld [vmem:[%s1 + $0x134] sm:$0xf]
  %v194 = vld [vmem:[%s1 + $0x138] sm:$0xf]
  %v195 = vld [vmem:[%s1 + $0x13c] sm:$0xf]
  %v196 = vld [vmem:[%s1 + $0x140] sm:$0xf]
  %v197 = vld [vmem:[%s1 + $0x144] sm:$0xf]
  %v198 = vld [vmem:[%s1 + $0x148] sm:$0xf]
  %v199 = vld [vmem:[%s1 + $0x14c] sm:$0xf]
  %v200 = vld [vmem:[%s1 + $0x150] sm:$0xf]
  %v201 = vld [vmem:[%s1 + $0x154] sm:$0xf]
  %v202 = vld [vmem:[%s1 + $0x158] sm:$0xf]
  %v203 = vld [vmem:[%s1 + $0x15c] sm:$0xf]
  %v204 = vld [vmem:[%s1 + $0x160] sm:$0xf]
  %v205 = vld [vmem:[%s1 + $0x164] sm:$0xf]
  %v206 = vld [vmem:[%s1 + $0x168] sm:$0xf]
  %v207 = vld [vmem:[%s1 + $0x16c] sm:$0xf]
  %v208 = vld [vmem:[%s1 + $0x170] sm:$0xf]
  %v209 = vld [vmem:[%s1 + $0x174] sm:$0xf]
  %v210 = vld [vmem:[%s1 + $0x178] sm:$0xf]
  %v211 = vld [vmem:[%s1 + $0x17c] sm:$0xf]
  %v212 = vld [vmem:[%s1 + $0x180] sm:$0xf]
  %v213 = vld [vmem:[%s1 + $0x184] sm:$0xf]
  %v214 = vld [vmem:[%s1 + $0x188] sm:$0xf]
  %v215 = vld [vmem:[%s1 + $0x18c] sm:$0xf]
  %v216 = vld [vmem:[%s1 + $0x190] sm:$0xf]
  %v217 = vld [vmem:[%s1 + $0x194] sm:$0xf]
  %v218 = vld [vmem:[%s1 + $0x198] sm:$0xf]
  %v219 = vld [vmem:[%s1 + $0x19c] sm:$0xf]
  %v220 = vld [vmem:[%s1 + $0x1a0] sm:$0xf]
  %v221 = vld [vmem:[%s1 + $0x1a4] sm:$0xf]
  %v222 = vld [vmem:[%s1 + $0x1a8] sm:$0xf]
  %v223 = vld [vmem:[%s1 + $0x1ac] sm:$0xf]
  %v224 = vld [vmem:[%s1 + $0x1b0] sm:$0xf]
  %v225 = vld [vmem:[%s1 + $0x1b4] sm:$0xf]
  %v226 = vld [vmem:[%s1 + $0x1b8] sm:$0xf]
  %v227 = vld [vmem:[%s1 + $0x1bc] sm:$0xf]
  %v228 = vld [vmem:[%s1 + $0x1c0] sm:$0xf]
  %v229 = vld [vmem:[%s1 + $0x1c4] sm:$0xf]
  %v230 = vld [vmem:[%s1 + $0x1c8] sm:$0xf]
  %v231 = vld [vmem:[%s1 + $0x1cc] sm:$0xf]
  %v232 = vld [vmem:[%s1 + $0x1d0] sm:$0xf]
  %v233 = vld [vmem:[%s1 + $0x1d4] sm:$0xf]
  %v234 = vld [vmem:[%s1 + $0x1d8] sm:$0xf]
  %v235 = vld [vmem:[%s1 + $0x1dc] sm:$0xf]
  %v236 = vld [vmem:[%s1 + $0x1e0] sm:$0xf]
  %v237 = vld [vmem:[%s1 + $0x1e4] sm:$0xf]
  %v238 = vld [vmem:[%s1 + $0x1e8] sm:$0xf]
  %v239 = vld [vmem:[%s1 + $0x1ec] sm:$0xf]
  %v240 = vld [vmem:[%s1 + $0x1f0] sm:$0xf]
  %v241 = vld [vmem:[%s1 + $0x1f4] sm:$0xf]
  %v242 = vld [vmem:[%s1 + $0x1f8] sm:$0xf]
  %v243 = vld [vmem:[%s1 + $0x1fc] sm:$0xf]
  %v308 = vunpack.c.l.b16 %v52
  %v309 = vunpack.c.h.b16 %v52
  %v310 = vunpack.c.l.b16 %v53
  %v311 = vunpack.c.h.b16 %v53
  %v312 = vunpack.c.l.b16 %v54
  %v313 = vunpack.c.h.b16 %v54
  %v314 = vunpack.c.l.b16 %v55
  %v315 = vunpack.c.h.b16 %v55
  %v316 = vunpack.c.l.b16 %v56
  %v317 = vunpack.c.h.b16 %v56
  %v318 = vunpack.c.l.b16 %v57
  %v319 = vunpack.c.h.b16 %v57
  %v320 = vunpack.c.l.b16 %v58
  %v321 = vunpack.c.h.b16 %v58
  %v322 = vunpack.c.l.b16 %v59
  %v323 = vunpack.c.h.b16 %v59
  %v324 = vunpack.c.l.b16 %v60
  %v325 = vunpack.c.h.b16 %v60
  %v326 = vunpack.c.l.b16 %v61
  %v327 = vunpack.c.h.b16 %v61
  %v328 = vunpack.c.l.b16 %v62
  %v329 = vunpack.c.h.b16 %v62
  %v330 = vunpack.c.l.b16 %v63
  %v331 = vunpack.c.h.b16 %v63
  %v332 = vunpack.c.l.b16 %v64
  %v333 = vunpack.c.h.b16 %v64
  %v334 = vunpack.c.l.b16 %v65
  %v335 = vunpack.c.h.b16 %v65
  %v336 = vunpack.c.l.b16 %v66
  %v337 = vunpack.c.h.b16 %v66
  %v338 = vunpack.c.l.b16 %v67
  %v339 = vunpack.c.h.b16 %v67
  %v340 = vunpack.c.l.b16 %v68
  %v341 = vunpack.c.h.b16 %v68
  %v342 = vunpack.c.l.b16 %v69
  %v343 = vunpack.c.h.b16 %v69
  %v344 = vunpack.c.l.b16 %v70
  %v345 = vunpack.c.h.b16 %v70
  %v346 = vunpack.c.l.b16 %v71
  %v347 = vunpack.c.h.b16 %v71
  %v348 = vunpack.c.l.b16 %v72
  %v349 = vunpack.c.h.b16 %v72
  %v350 = vunpack.c.l.b16 %v73
  %v351 = vunpack.c.h.b16 %v73
  %v352 = vunpack.c.l.b16 %v74
  %v353 = vunpack.c.h.b16 %v74
  %v354 = vunpack.c.l.b16 %v75
  %v355 = vunpack.c.h.b16 %v75
  %v356 = vunpack.c.l.b16 %v76
  %v357 = vunpack.c.h.b16 %v76
  %v358 = vunpack.c.l.b16 %v77
  %v359 = vunpack.c.h.b16 %v77
  %v360 = vunpack.c.l.b16 %v78
  %v361 = vunpack.c.h.b16 %v78
  %v362 = vunpack.c.l.b16 %v79
  %v363 = vunpack.c.h.b16 %v79
  %v364 = vunpack.c.l.b16 %v80
  %v365 = vunpack.c.h.b16 %v80
  %v366 = vunpack.c.l.b16 %v81
  %v367 = vunpack.c.h.b16 %v81
  %v368 = vunpack.c.l.b16 %v82
  %v369 = vunpack.c.h.b16 %v82
  %v370 = vunpack.c.l.b16 %v83
  %v371 = vunpack.c.h.b16 %v83
  %v372 = vunpack.c.l.b16 %v84
  %v373 = vunpack.c.h.b16 %v84
  %v374 = vunpack.c.l.b16 %v85
  %v375 = vunpack.c.h.b16 %v85
  %v376 = vunpack.c.l.b16 %v86
  %v377 = vunpack.c.h.b16 %v86
  %v378 = vunpack.c.l.b16 %v87
  %v379 = vunpack.c.h.b16 %v87
  %v380 = vunpack.c.l.b16 %v88
  %v381 = vunpack.c.h.b16 %v88
  %v382 = vunpack.c.l.b16 %v89
  %v383 = vunpack.c.h.b16 %v89
  %v384 = vunpack.c.l.b16 %v90
  %v385 = vunpack.c.h.b16 %v90
  %v386 = vunpack.c.l.b16 %v91
  %v387 = vunpack.c.h.b16 %v91
  %v388 = vunpack.c.l.b16 %v92
  %v389 = vunpack.c.h.b16 %v92
  %v390 = vunpack.c.l.b16 %v93
  %v391 = vunpack.c.h.b16 %v93
  %v392 = vunpack.c.l.b16 %v94
  %v393 = vunpack.c.h.b16 %v94
  %v394 = vunpack.c.l.b16 %v95
  %v395 = vunpack.c.h.b16 %v95
  %v396 = vunpack.c.l.b16 %v96
  %v397 = vunpack.c.h.b16 %v96
  %v398 = vunpack.c.l.b16 %v97
  %v399 = vunpack.c.h.b16 %v97
  %v400 = vunpack.c.l.b16 %v98
  %v401 = vunpack.c.h.b16 %v98
  %v402 = vunpack.c.l.b16 %v99
  %v403 = vunpack.c.h.b16 %v99
  %v404 = vunpack.c.l.b16 %v100
  %v405 = vunpack.c.h.b16 %v100
  %v406 = vunpack.c.l.b16 %v101
  %v407 = vunpack.c.h.b16 %v101
  %v408 = vunpack.c.l.b16 %v102
  %v409 = vunpack.c.h.b16 %v102
  %v410 = vunpack.c.l.b16 %v103
  %v411 = vunpack.c.h.b16 %v103
  %v412 = vunpack.c.l.b16 %v104
  %v413 = vunpack.c.h.b16 %v104
  %v414 = vunpack.c.l.b16 %v105
  %v415 = vunpack.c.h.b16 %v105
  %v416 = vunpack.c.l.b16 %v106
  %v417 = vunpack.c.h.b16 %v106
  %v418 = vunpack.c.l.b16 %v107
  %v419 = vunpack.c.h.b16 %v107
  %v420 = vunpack.c.l.b16 %v108
  %v421 = vunpack.c.h.b16 %v108
  %v422 = vunpack.c.l.b16 %v109
  %v423 = vunpack.c.h.b16 %v109
  %v424 = vunpack.c.l.b16 %v110
  %v425 = vunpack.c.h.b16 %v110
  %v426 = vunpack.c.l.b16 %v111
  %v427 = vunpack.c.h.b16 %v111
  %v428 = vunpack.c.l.b16 %v112
  %v429 = vunpack.c.h.b16 %v112
  %v430 = vunpack.c.l.b16 %v113
  %v431 = vunpack.c.h.b16 %v113
  %v432 = vunpack.c.l.b16 %v114
  %v433 = vunpack.c.h.b16 %v114
  %v434 = vunpack.c.l.b16 %v115
  %v435 = vunpack.c.h.b16 %v115
  %v436 = vpack.c.b16 %v316, %v308
  %v437 = vpack.c.b16 %v317, %v309
  %v438 = vpack.c.b16 %v318, %v310
  %v439 = vpack.c.b16 %v319, %v311
  %v440 = vpack.c.b16 %v320, %v312
  %v441 = vpack.c.b16 %v321, %v313
  %v442 = vpack.c.b16 %v322, %v314
  %v443 = vpack.c.b16 %v323, %v315
  %v444 = vpack.c.b16 %v332, %v324
  %v445 = vpack.c.b16 %v333, %v325
  %v446 = vpack.c.b16 %v334, %v326
  %v447 = vpack.c.b16 %v335, %v327
  %v448 = vpack.c.b16 %v336, %v328
  %v449 = vpack.c.b16 %v337, %v329
  %v450 = vpack.c.b16 %v338, %v330
  %v451 = vpack.c.b16 %v339, %v331
  %v452 = vpack.c.b16 %v348, %v340
  %v453 = vpack.c.b16 %v349, %v341
  %v454 = vpack.c.b16 %v350, %v342
  %v455 = vpack.c.b16 %v351, %v343
  %v456 = vpack.c.b16 %v352, %v344
  %v457 = vpack.c.b16 %v353, %v345
  %v458 = vpack.c.b16 %v354, %v346
  %v459 = vpack.c.b16 %v355, %v347
  %v460 = vpack.c.b16 %v364, %v356
  %v461 = vpack.c.b16 %v365, %v357
  %v462 = vpack.c.b16 %v366, %v358
  %v463 = vpack.c.b16 %v367, %v359
  %v464 = vpack.c.b16 %v368, %v360
  %v465 = vpack.c.b16 %v369, %v361
  %v466 = vpack.c.b16 %v370, %v362
  %v467 = vpack.c.b16 %v371, %v363
  %v468 = vpack.c.b16 %v380, %v372
  %v469 = vpack.c.b16 %v381, %v373
  %v470 = vpack.c.b16 %v382, %v374
  %v471 = vpack.c.b16 %v383, %v375
  %v472 = vpack.c.b16 %v384, %v376
  %v473 = vpack.c.b16 %v385, %v377
  %v474 = vpack.c.b16 %v386, %v378
  %v475 = vpack.c.b16 %v387, %v379
  %v476 = vpack.c.b16 %v396, %v388
  %v477 = vpack.c.b16 %v397, %v389
  %v478 = vpack.c.b16 %v398, %v390
  %v479 = vpack.c.b16 %v399, %v391
  %v480 = vpack.c.b16 %v400, %v392
  %v481 = vpack.c.b16 %v401, %v393
  %v482 = vpack.c.b16 %v402, %v394
  %v483 = vpack.c.b16 %v403, %v395
  %v484 = vpack.c.b16 %v412, %v404
  %v485 = vpack.c.b16 %v413, %v405
  %v486 = vpack.c.b16 %v414, %v406
  %v487 = vpack.c.b16 %v415, %v407
  %v488 = vpack.c.b16 %v416, %v408
  %v489 = vpack.c.b16 %v417, %v409
  %v490 = vpack.c.b16 %v418, %v410
  %v491 = vpack.c.b16 %v419, %v411
  %v492 = vpack.c.b16 %v428, %v420
  %v493 = vpack.c.b16 %v429, %v421
  %v494 = vpack.c.b16 %v430, %v422
  %v495 = vpack.c.b16 %v431, %v423
  %v496 = vpack.c.b16 %v432, %v424
  %v497 = vpack.c.b16 %v433, %v425
  %v498 = vpack.c.b16 %v434, %v426
  %v499 = vpack.c.b16 %v435, %v427
  %v692 = vunpack.c.l.b16 %v116
  %v693 = vunpack.c.l.b16 %v117
  %v694 = vunpack.c.l.b16 %v118
  %v695 = vunpack.c.l.b16 %v119
  %v696 = vunpack.c.l.b16 %v120
  %v697 = vunpack.c.l.b16 %v121
  %v698 = vunpack.c.l.b16 %v122
  %v699 = vunpack.c.l.b16 %v123
  %v700 = vunpack.c.l.b16 %v124
  %v701 = vunpack.c.l.b16 %v125
  %v702 = vunpack.c.l.b16 %v126
  %v703 = vunpack.c.l.b16 %v127
  %v704 = vunpack.c.l.b16 %v128
  %v705 = vunpack.c.l.b16 %v129
  %v706 = vunpack.c.l.b16 %v130
  %v707 = vunpack.c.l.b16 %v131
  %v708 = vunpack.c.l.b16 %v132
  %v709 = vunpack.c.l.b16 %v133
  %v710 = vunpack.c.l.b16 %v134
  %v711 = vunpack.c.l.b16 %v135
  %v712 = vunpack.c.l.b16 %v136
  %v713 = vunpack.c.l.b16 %v137
  %v714 = vunpack.c.l.b16 %v138
  %v715 = vunpack.c.l.b16 %v139
  %v716 = vunpack.c.l.b16 %v140
  %v717 = vunpack.c.l.b16 %v141
  %v718 = vunpack.c.l.b16 %v142
  %v719 = vunpack.c.l.b16 %v143
  %v720 = vunpack.c.l.b16 %v144
  %v721 = vunpack.c.l.b16 %v145
  %v722 = vunpack.c.l.b16 %v146
  %v723 = vunpack.c.l.b16 %v147
  %v724 = vunpack.c.l.b16 %v148
  %v725 = vunpack.c.l.b16 %v149
  %v726 = vunpack.c.l.b16 %v150
  %v727 = vunpack.c.l.b16 %v151
  %v728 = vunpack.c.l.b16 %v152
  %v729 = vunpack.c.l.b16 %v153
  %v730 = vunpack.c.l.b16 %v154
  %v731 = vunpack.c.l.b16 %v155
  %v732 = vunpack.c.l.b16 %v156
  %v733 = vunpack.c.l.b16 %v157
  %v734 = vunpack.c.l.b16 %v158
  %v735 = vunpack.c.l.b16 %v159
  %v736 = vunpack.c.l.b16 %v160
  %v737 = vunpack.c.l.b16 %v161
  %v738 = vunpack.c.l.b16 %v162
  %v739 = vunpack.c.l.b16 %v163
  %v740 = vunpack.c.l.b16 %v164
  %v741 = vunpack.c.l.b16 %v165
  %v742 = vunpack.c.l.b16 %v166
  %v743 = vunpack.c.l.b16 %v167
  %v744 = vunpack.c.l.b16 %v168
  %v745 = vunpack.c.l.b16 %v169
  %v746 = vunpack.c.l.b16 %v170
  %v747 = vunpack.c.l.b16 %v171
  %v748 = vunpack.c.l.b16 %v172
  %v749 = vunpack.c.l.b16 %v173
  %v750 = vunpack.c.l.b16 %v174
  %v751 = vunpack.c.l.b16 %v175
  %v752 = vunpack.c.l.b16 %v176
  %v753 = vunpack.c.l.b16 %v177
  %v754 = vunpack.c.l.b16 %v178
  %v755 = vunpack.c.l.b16 %v179
  %v756 = vunpack.c.l.b16 %v180
  %v757 = vunpack.c.l.b16 %v181
  %v758 = vunpack.c.l.b16 %v182
  %v759 = vunpack.c.l.b16 %v183
  %v760 = vunpack.c.l.b16 %v184
  %v761 = vunpack.c.l.b16 %v185
  %v762 = vunpack.c.l.b16 %v186
  %v763 = vunpack.c.l.b16 %v187
  %v764 = vunpack.c.l.b16 %v188
  %v765 = vunpack.c.l.b16 %v189
  %v766 = vunpack.c.l.b16 %v190
  %v767 = vunpack.c.l.b16 %v191
  %v768 = vunpack.c.l.b16 %v192
  %v769 = vunpack.c.l.b16 %v193
  %v770 = vunpack.c.l.b16 %v194
  %v771 = vunpack.c.l.b16 %v195
  %v772 = vunpack.c.l.b16 %v196
  %v773 = vunpack.c.l.b16 %v197
  %v774 = vunpack.c.l.b16 %v198
  %v775 = vunpack.c.l.b16 %v199
  %v776 = vunpack.c.l.b16 %v200
  %v777 = vunpack.c.l.b16 %v201
  %v778 = vunpack.c.l.b16 %v202
  %v779 = vunpack.c.l.b16 %v203
  %v780 = vunpack.c.l.b16 %v204
  %v781 = vunpack.c.l.b16 %v205
  %v782 = vunpack.c.l.b16 %v206
  %v783 = vunpack.c.l.b16 %v207
  %v784 = vunpack.c.l.b16 %v208
  %v785 = vunpack.c.l.b16 %v209
  %v786 = vunpack.c.l.b16 %v210
  %v787 = vunpack.c.l.b16 %v211
  %v788 = vunpack.c.l.b16 %v212
  %v789 = vunpack.c.l.b16 %v213
  %v790 = vunpack.c.l.b16 %v214
  %v791 = vunpack.c.l.b16 %v215
  %v792 = vunpack.c.l.b16 %v216
  %v793 = vunpack.c.l.b16 %v217
  %v794 = vunpack.c.l.b16 %v218
  %v795 = vunpack.c.l.b16 %v219
  %v796 = vunpack.c.l.b16 %v220
  %v797 = vunpack.c.l.b16 %v221
  %v798 = vunpack.c.l.b16 %v222
  %v799 = vunpack.c.l.b16 %v223
  %v800 = vunpack.c.l.b16 %v224
  %v801 = vunpack.c.l.b16 %v225
  %v802 = vunpack.c.l.b16 %v226
  %v803 = vunpack.c.l.b16 %v227
  %v804 = vunpack.c.l.b16 %v228
  %v805 = vunpack.c.l.b16 %v229
  %v806 = vunpack.c.l.b16 %v230
  %v807 = vunpack.c.l.b16 %v231
  %v808 = vunpack.c.l.b16 %v232
  %v809 = vunpack.c.l.b16 %v233
  %v810 = vunpack.c.l.b16 %v234
  %v811 = vunpack.c.l.b16 %v235
  %v812 = vunpack.c.l.b16 %v236
  %v813 = vunpack.c.l.b16 %v237
  %v814 = vunpack.c.l.b16 %v238
  %v815 = vunpack.c.l.b16 %v239
  %v816 = vunpack.c.l.b16 %v240
  %v817 = vunpack.c.l.b16 %v241
  %v818 = vunpack.c.l.b16 %v242
  %v819 = vunpack.c.l.b16 %v243
  %v820 = vpack.c.b16 %v693, %v692
  %v821 = vpack.c.b16 %v695, %v694
  %v822 = vpack.c.b16 %v697, %v696
  %v823 = vpack.c.b16 %v699, %v698
  %v824 = vpack.c.b16 %v701, %v700
  %v825 = vpack.c.b16 %v703, %v702
  %v826 = vpack.c.b16 %v705, %v704
  %v827 = vpack.c.b16 %v707, %v706
  %v828 = vpack.c.b16 %v709, %v708
  %v829 = vpack.c.b16 %v711, %v710
  %v830 = vpack.c.b16 %v713, %v712
  %v831 = vpack.c.b16 %v715, %v714
  %v832 = vpack.c.b16 %v717, %v716
  %v833 = vpack.c.b16 %v719, %v718
  %v834 = vpack.c.b16 %v721, %v720
  %v835 = vpack.c.b16 %v723, %v722
  %v836 = vpack.c.b16 %v725, %v724
  %v837 = vpack.c.b16 %v727, %v726
  %v838 = vpack.c.b16 %v729, %v728
  %v839 = vpack.c.b16 %v731, %v730
  %v840 = vpack.c.b16 %v733, %v732
  %v841 = vpack.c.b16 %v735, %v734
  %v842 = vpack.c.b16 %v737, %v736
  %v843 = vpack.c.b16 %v739, %v738
  %v844 = vpack.c.b16 %v741, %v740
  %v845 = vpack.c.b16 %v743, %v742
  %v846 = vpack.c.b16 %v745, %v744
  %v847 = vpack.c.b16 %v747, %v746
  %v848 = vpack.c.b16 %v749, %v748
  %v849 = vpack.c.b16 %v751, %v750
  %v850 = vpack.c.b16 %v753, %v752
  %v851 = vpack.c.b16 %v755, %v754
  %v852 = vpack.c.b16 %v757, %v756
  %v853 = vpack.c.b16 %v759, %v758
  %v854 = vpack.c.b16 %v761, %v760
  %v855 = vpack.c.b16 %v763, %v762
  %v856 = vpack.c.b16 %v765, %v764
  %v857 = vpack.c.b16 %v767, %v766
  %v858 = vpack.c.b16 %v769, %v768
  %v859 = vpack.c.b16 %v771, %v770
  %v860 = vpack.c.b16 %v773, %v772
  %v861 = vpack.c.b16 %v775, %v774
  %v862 = vpack.c.b16 %v777, %v776
  %v863 = vpack.c.b16 %v779, %v778
  %v864 = vpack.c.b16 %v781, %v780
  %v865 = vpack.c.b16 %v783, %v782
  %v866 = vpack.c.b16 %v785, %v784
  %v867 = vpack.c.b16 %v787, %v786
  %v868 = vpack.c.b16 %v789, %v788
  %v869 = vpack.c.b16 %v791, %v790
  %v870 = vpack.c.b16 %v793, %v792
  %v871 = vpack.c.b16 %v795, %v794
  %v872 = vpack.c.b16 %v797, %v796
  %v873 = vpack.c.b16 %v799, %v798
  %v874 = vpack.c.b16 %v801, %v800
  %v875 = vpack.c.b16 %v803, %v802
  %v876 = vpack.c.b16 %v805, %v804
  %v877 = vpack.c.b16 %v807, %v806
  %v878 = vpack.c.b16 %v809, %v808
  %v879 = vpack.c.b16 %v811, %v810
  %v880 = vpack.c.b16 %v813, %v812
  %v881 = vpack.c.b16 %v815, %v814
  %v882 = vpack.c.b16 %v817, %v816
  %v883 = vpack.c.b16 %v819, %v818
  %948 = vmatprep.subr.bf16.mxu0 0
  %949 = vmatpush1.bf16.msra.mxu0 %v820
  %950 = vmatprep.subr.bf16.mxu0 0
  %951 = vmatpush1.bf16.msra.mxu0 %v821
  %952 = vmatprep.subr.bf16.mxu0 0
  %953 = vmatpush1.bf16.msra.mxu0 %v822
  %954 = vmatprep.subr.bf16.mxu0 0
  %955 = vmatpush1.bf16.msra.mxu0 %v823
  %956 = vmatprep.subr.bf16.mxu0 0
  %957 = vmatpush1.bf16.msra.mxu0 %v824
  %958 = vmatprep.subr.bf16.mxu0 0
  %959 = vmatpush1.bf16.msra.mxu0 %v825
  %960 = vmatprep.subr.bf16.mxu0 0
  %961 = vmatpush1.bf16.msra.mxu0 %v826
  %962 = vmatprep.subr.bf16.mxu0 0
  %963 = vmatpush1.bf16.msra.mxu0 %v827
  %964 = vmatprep.subr.bf16.mxu0 0
  %965 = vmatpush1.bf16.msra.mxu0 %v828
  %966 = vmatprep.subr.bf16.mxu0 0
  %967 = vmatpush1.bf16.msra.mxu0 %v829
  %968 = vmatprep.subr.bf16.mxu0 0
  %969 = vmatpush1.bf16.msra.mxu0 %v830
  %970 = vmatprep.subr.bf16.mxu0 0
  %971 = vmatpush1.bf16.msra.mxu0 %v831
  %972 = vmatprep.subr.bf16.mxu0 0
  %973 = vmatpush1.bf16.msra.mxu0 %v832
  %974 = vmatprep.subr.bf16.mxu0 0
  %975 = vmatpush1.bf16.msra.mxu0 %v833
  %976 = vmatprep.subr.bf16.mxu0 0
  %977 = vmatpush1.bf16.msra.mxu0 %v834
  %978 = vmatprep.subr.bf16.mxu0 0
  %979 = vmatpush1.bf16.msra.mxu0 %v835
  %980 = vmatprep.mubr.bf16.mxu0 %v437
  %981 = vmatmul.mubr.bf16.gmra.mrb[0].mxu0 %v436
  %v982 = vpop.f32.mrb[0].mxu0
  %v983 = vadd.f32 0.0, %v982
  %v984 = vpop.f32.mrb[0].mxu0
  %v985 = vpop.f32.mrb[0].mxu0
  %v986 = vadd.f32 0.0, %v985
  %v987 = vpop.f32.mrb[0].mxu0
  %988 = vmatprep.mubr.bf16.mxu0 %v445
  %989 = vmatmul.mubr.bf16.gmra.mrb[0].mxu0 %v444
  %v990 = vpop.f32.mrb[0].mxu0
  %v991 = vadd.f32 0.0, %v990
  %v992 = vpop.f32.mrb[0].mxu0
  %v993 = vpop.f32.mrb[0].mxu0
  %v994 = vadd.f32 0.0, %v993
  %v995 = vpop.f32.mrb[0].mxu0
  %996 = vmatprep.mubr.bf16.mxu0 %v453
  %997 = vmatmul.mubr.bf16.gmra.mrb[0].mxu0 %v452
  %v998 = vpop.f32.mrb[0].mxu0
  %v999 = vadd.f32 0.0, %v998
  %v1000 = vpop.f32.mrb[0].mxu0
  %v1001 = vpop.f32.mrb[0].mxu0
  %v1002 = vadd.f32 0.0, %v1001
  %v1003 = vpop.f32.mrb[0].mxu0
  %1004 = vmatprep.mubr.bf16.mxu0 %v461
  %1005 = vmatmul.mubr.bf16.gmra.mrb[0].mxu0 %v460
  %v1006 = vpop.f32.mrb[0].mxu0
  %v1007 = vadd.f32 0.0, %v1006
  %v1008 = vpop.f32.mrb[0].mxu0
  %v1009 = vpop.f32.mrb[0].mxu0
  %v1010 = vadd.f32 0.0, %v1009
  %v1011 = vpop.f32.mrb[0].mxu0
  %1012 = vmatprep.mubr.bf16.mxu0 %v469
  %1013 = vmatmul.mubr.bf16.gmra.mrb[0].mxu0 %v468
  %v1014 = vpop.f32.mrb[0].mxu0
  %v1015 = vadd.f32 0.0, %v1014
  %v1016 = vpop.f32.mrb[0].mxu0
  %v1017 = vpop.f32.mrb[0].mxu0
  %v1018 = vadd.f32 0.0, %v1017
  %v1019 = vpop.f32.mrb[0].mxu0
  %1020 = vmatprep.mubr.bf16.mxu0 %v477
  %1021 = vmatmul.mubr.bf16.gmra.mrb[0].mxu0 %v476
  %v1022 = vpop.f32.mrb[0].mxu0
  %v1023 = vadd.f32 0.0, %v1022
  %v1024 = vpop.f32.mrb[0].mxu0
  %v1025 = vpop.f32.mrb[0].mxu0
  %v1026 = vadd.f32 0.0, %v1025
  %v1027 = vpop.f32.mrb[0].mxu0
  %1028 = vmatprep.mubr.bf16.mxu0 %v485
  %1029 = vmatmul.mubr.bf16.gmra.mrb[0].mxu0 %v484
  %v1030 = vpop.f32.mrb[0].mxu0
  %v1031 = vadd.f32 0.0, %v1030
  %v1032 = vpop.f32.mrb[0].mxu0
  %v1033 = vpop.f32.mrb[0].mxu0
  %v1034 = vadd.f32 0.0, %v1033
  %v1035 = vpop.f32.mrb[0].mxu0
  %1036 = vmatprep.mubr.bf16.mxu0 %v493
  %1037 = vmatmul.mubr.bf16.gmra.mrb[0].mxu0 %v492
  %v1038 = vpop.f32.mrb[0].mxu0
  %v1039 = vadd.f32 0.0, %v1038
  %v1040 = vpop.f32.mrb[0].mxu0
  %v1041 = vpop.f32.mrb[0].mxu0
  %v1042 = vadd.f32 0.0, %v1041
  %v1043 = vpop.f32.mrb[0].mxu0
  %1044 = vdwg.mxu0
  %1045 = vmatprep.subr.bf16.mxu0 0
  %1046 = vmatpush1.bf16.msra.mxu0 %v836
  %1047 = vmatprep.subr.bf16.mxu0 0
  %1048 = vmatpush1.bf16.msra.mxu0 %v837
  %1049 = vmatprep.subr.bf16.mxu0 0
  %1050 = vmatpush1.bf16.msra.mxu0 %v838
  %1051 = vmatprep.subr.bf16.mxu0 0
  %1052 = vmatpush1.bf16.msra.mxu0 %v839
  %1053 = vmatprep.subr.bf16.mxu0 0
  %1054 = vmatpush1.bf16.msra.mxu0 %v840
  %1055 = vmatprep.subr.bf16.mxu0 0
  %1056 = vmatpush1.bf16.msra.mxu0 %v841
  %1057 = vmatprep.subr.bf16.mxu0 0
  %1058 = vmatpush1.bf16.msra.mxu0 %v842
  %1059 = vmatprep.subr.bf16.mxu0 0
  %1060 = vmatpush1.bf16.msra.mxu0 %v843
  %1061 = vmatprep.subr.bf16.mxu0 0
  %1062 = vmatpush1.bf16.msra.mxu0 %v844
  %1063 = vmatprep.subr.bf16.mxu0 0
  %1064 = vmatpush1.bf16.msra.mxu0 %v845
  %1065 = vmatprep.subr.bf16.mxu0 0
  %1066 = vmatpush1.bf16.msra.mxu0 %v846
  %1067 = vmatprep.subr.bf16.mxu0 0
  %1068 = vmatpush1.bf16.msra.mxu0 %v847
  %1069 = vmatprep.subr.bf16.mxu0 0
  %1070 = vmatpush1.bf16.msra.mxu0 %v848
  %1071 = vmatprep.subr.bf16.mxu0 0
  %1072 = vmatpush1.bf16.msra.mxu0 %v849
  %1073 = vmatprep.subr.bf16.mxu0 0
  %1074 = vmatpush1.bf16.msra.mxu0 %v850
  %1075 = vmatprep.subr.bf16.mxu0 0
  %1076 = vmatpush1.bf16.msra.mxu0 %v851
  %1077 = vmatprep.mubr.bf16.mxu0 %v439
  %1078 = vmatmul.mubr.bf16.gmra.mrb[0].mxu0 %v438
  %v1079 = vpop.f32.mrb[0].mxu0
  %v1080 = vadd.f32 %v983, %v1079
  %v1081 = vpop.f32.mrb[0].mxu0
  %v1082 = vpop.f32.mrb[0].mxu0
  %v1083 = vadd.f32 %v986, %v1082
  %v1084 = vpop.f32.mrb[0].mxu0
  %1085 = vmatprep.mubr.bf16.mxu0 %v447
  %1086 = vmatmul.mubr.bf16.gmra.mrb[0].mxu0 %v446
  %v1087 = vpop.f32.mrb[0].mxu0
  %v1088 = vadd.f32 %v991, %v1087
  %v1089 = vpop.f32.mrb[0].mxu0
  %v1090 = vpop.f32.mrb[0].mxu0
  %v1091 = vadd.f32 %v994, %v1090
  %v1092 = vpop.f32.mrb[0].mxu0
  %1093 = vmatprep.mubr.bf16.mxu0 %v455
  %1094 = vmatmul.mubr.bf16.gmra.mrb[0].mxu0 %v454
  %v1095 = vpop.f32.mrb[0].mxu0
  %v1096 = vadd.f32 %v999, %v1095
  %v1097 = vpop.f32.mrb[0].mxu0
  %v1098 = vpop.f32.mrb[0].mxu0
  %v1099 = vadd.f32 %v1002, %v1098
  %v1100 = vpop.f32.mrb[0].mxu0
  %1101 = vmatprep.mubr.bf16.mxu0 %v463
  %1102 = vmatmul.mubr.bf16.gmra.mrb[0].mxu0 %v462
  %v1103 = vpop.f32.mrb[0].mxu0
  %v1104 = vadd.f32 %v1007, %v1103
  %v1105 = vpop.f32.mrb[0].mxu0
  %v1106 = vpop.f32.mrb[0].mxu0
  %v1107 = vadd.f32 %v1010, %v1106
  %v1108 = vpop.f32.mrb[0].mxu0
  %1109 = vmatprep.mubr.bf16.mxu0 %v471
  %1110 = vmatmul.mubr.bf16.gmra.mrb[0].mxu0 %v470
  %v1111 = vpop.f32.mrb[0].mxu0
  %v1112 = vadd.f32 %v1015, %v1111
  %v1113 = vpop.f32.mrb[0].mxu0
  %v1114 = vpop.f32.mrb[0].mxu0
  %v1115 = vadd.f32 %v1018, %v1114
  %v1116 = vpop.f32.mrb[0].mxu0
  %1117 = vmatprep.mubr.bf16.mxu0 %v479
  %1118 = vmatmul.mubr.bf16.gmra.mrb[0].mxu0 %v478
  %v1119 = vpop.f32.mrb[0].mxu0
  %v1120 = vadd.f32 %v1023, %v1119
  %v1121 = vpop.f32.mrb[0].mxu0
  %v1122 = vpop.f32.mrb[0].mxu0
  %v1123 = vadd.f32 %v1026, %v1122
  %v1124 = vpop.f32.mrb[0].mxu0
  %1125 = vmatprep.mubr.bf16.mxu0 %v487
  %1126 = vmatmul.mubr.bf16.gmra.mrb[0].mxu0 %v486
  %v1127 = vpop.f32.mrb[0].mxu0
  %v1128 = vadd.f32 %v1031, %v1127
  %v1129 = vpop.f32.mrb[0].mxu0
  %v1130 = vpop.f32.mrb[0].mxu0
  %v1131 = vadd.f32 %v1034, %v1130
  %v1132 = vpop.f32.mrb[0].mxu0
  %1133 = vmatprep.mubr.bf16.mxu0 %v495
  %1134 = vmatmul.mubr.bf16.gmra.mrb[0].mxu0 %v494
  %v1135 = vpop.f32.mrb[0].mxu0
  %v1136 = vadd.f32 %v1039, %v1135
  %v1137 = vpop.f32.mrb[0].mxu0
  %v1138 = vpop.f32.mrb[0].mxu0
  %v1139 = vadd.f32 %v1042, %v1138
  %v1140 = vpop.f32.mrb[0].mxu0
  %1141 = vdwg.mxu0
  %1142 = vmatprep.subr.bf16.mxu0 0
  %1143 = vmatpush1.bf16.msra.mxu0 %v852
  %1144 = vmatprep.subr.bf16.mxu0 0
  %1145 = vmatpush1.bf16.msra.mxu0 %v853
  %1146 = vmatprep.subr.bf16.mxu0 0
  %1147 = vmatpush1.bf16.msra.mxu0 %v854
  %1148 = vmatprep.subr.bf16.mxu0 0
  %1149 = vmatpush1.bf16.msra.mxu0 %v855
  %1150 = vmatprep.subr.bf16.mxu0 0
  %1151 = vmatpush1.bf16.msra.mxu0 %v856
  %1152 = vmatprep.subr.bf16.mxu0 0
  %1153 = vmatpush1.bf16.msra.mxu0 %v857
  %1154 = vmatprep.subr.bf16.mxu0 0
  %1155 = vmatpush1.bf16.msra.mxu0 %v858
  %1156 = vmatprep.subr.bf16.mxu0 0
  %1157 = vmatpush1.bf16.msra.mxu0 %v859
  %1158 = vmatprep.subr.bf16.mxu0 0
  %1159 = vmatpush1.bf16.msra.mxu0 %v860
  %1160 = vmatprep.subr.bf16.mxu0 0
  %1161 = vmatpush1.bf16.msra.mxu0 %v861
  %1162 = vmatprep.subr.bf16.mxu0 0
  %1163 = vmatpush1.bf16.msra.mxu0 %v862
  %1164 = vmatprep.subr.bf16.mxu0 0
  %1165 = vmatpush1.bf16.msra.mxu0 %v863
  %1166 = vmatprep.subr.bf16.mxu0 0
  %1167 = vmatpush1.bf16.msra.mxu0 %v864
  %1168 = vmatprep.subr.bf16.mxu0 0
  %1169 = vmatpush1.bf16.msra.mxu0 %v865
  %1170 = vmatprep.subr.bf16.mxu0 0
  %1171 = vmatpush1.bf16.msra.mxu0 %v866
  %1172 = vmatprep.subr.bf16.mxu0 0
  %1173 = vmatpush1.bf16.msra.mxu0 %v867
  %1174 = vmatprep.mubr.bf16.mxu0 %v441
  %1175 = vmatmul.mubr.bf16.gmra.mrb[0].mxu0 %v440
  %v1176 = vpop.f32.mrb[0].mxu0
  %v1177 = vadd.f32 %v1080, %v1176
  %v1178 = vpop.f32.mrb[0].mxu0
  %v1179 = vpop.f32.mrb[0].mxu0
  %v1180 = vadd.f32 %v1083, %v1179
  %v1181 = vpop.f32.mrb[0].mxu0
  %1182 = vmatprep.mubr.bf16.mxu0 %v449
  %1183 = vmatmul.mubr.bf16.gmra.mrb[0].mxu0 %v448
  %v1184 = vpop.f32.mrb[0].mxu0
  %v1185 = vadd.f32 %v1088, %v1184
  %v1186 = vpop.f32.mrb[0].mxu0
  %v1187 = vpop.f32.mrb[0].mxu0
  %v1188 = vadd.f32 %v1091, %v1187
  %v1189 = vpop.f32.mrb[0].mxu0
  %1190 = vmatprep.mubr.bf16.mxu0 %v457
  %1191 = vmatmul.mubr.bf16.gmra.mrb[0].mxu0 %v456
  %v1192 = vpop.f32.mrb[0].mxu0
  %v1193 = vadd.f32 %v1096, %v1192
  %v1194 = vpop.f32.mrb[0].mxu0
  %v1195 = vpop.f32.mrb[0].mxu0
  %v1196 = vadd.f32 %v1099, %v1195
  %v1197 = vpop.f32.mrb[0].mxu0
  %1198 = vmatprep.mubr.bf16.mxu0 %v465
  %1199 = vmatmul.mubr.bf16.gmra.mrb[0].mxu0 %v464
  %v1200 = vpop.f32.mrb[0].mxu0
  %v1201 = vadd.f32 %v1104, %v1200
  %v1202 = vpop.f32.mrb[0].mxu0
  %v1203 = vpop.f32.mrb[0].mxu0
  %v1204 = vadd.f32 %v1107, %v1203
  %v1205 = vpop.f32.mrb[0].mxu0
  %1206 = vmatprep.mubr.bf16.mxu0 %v473
  %1207 = vmatmul.mubr.bf16.gmra.mrb[0].mxu0 %v472
  %v1208 = vpop.f32.mrb[0].mxu0
  %v1209 = vadd.f32 %v1112, %v1208
  %v1210 = vpop.f32.mrb[0].mxu0
  %v1211 = vpop.f32.mrb[0].mxu0
  %v1212 = vadd.f32 %v1115, %v1211
  %v1213 = vpop.f32.mrb[0].mxu0
  %1214 = vmatprep.mubr.bf16.mxu0 %v481
  %1215 = vmatmul.mubr.bf16.gmra.mrb[0].mxu0 %v480
  %v1216 = vpop.f32.mrb[0].mxu0
  %v1217 = vadd.f32 %v1120, %v1216
  %v1218 = vpop.f32.mrb[0].mxu0
  %v1219 = vpop.f32.mrb[0].mxu0
  %v1220 = vadd.f32 %v1123, %v1219
  %v1221 = vpop.f32.mrb[0].mxu0
  %1222 = vmatprep.mubr.bf16.mxu0 %v489
  %1223 = vmatmul.mubr.bf16.gmra.mrb[0].mxu0 %v488
  %v1224 = vpop.f32.mrb[0].mxu0
  %v1225 = vadd.f32 %v1128, %v1224
  %v1226 = vpop.f32.mrb[0].mxu0
  %v1227 = vpop.f32.mrb[0].mxu0
  %v1228 = vadd.f32 %v1131, %v1227
  %v1229 = vpop.f32.mrb[0].mxu0
  %1230 = vmatprep.mubr.bf16.mxu0 %v497
  %1231 = vmatmul.mubr.bf16.gmra.mrb[0].mxu0 %v496
  %v1232 = vpop.f32.mrb[0].mxu0
  %v1233 = vadd.f32 %v1136, %v1232
  %v1234 = vpop.f32.mrb[0].mxu0
  %v1235 = vpop.f32.mrb[0].mxu0
  %v1236 = vadd.f32 %v1139, %v1235
  %v1237 = vpop.f32.mrb[0].mxu0
  %1238 = vdwg.mxu0
  %1239 = vmatprep.subr.bf16.mxu0 0
  %1240 = vmatpush1.bf16.msra.mxu0 %v868
  %1241 = vmatprep.subr.bf16.mxu0 0
  %1242 = vmatpush1.bf16.msra.mxu0 %v869
  %1243 = vmatprep.subr.bf16.mxu0 0
  %1244 = vmatpush1.bf16.msra.mxu0 %v870
  %1245 = vmatprep.subr.bf16.mxu0 0
  %1246 = vmatpush1.bf16.msra.mxu0 %v871
  %1247 = vmatprep.subr.bf16.mxu0 0
  %1248 = vmatpush1.bf16.msra.mxu0 %v872
  %1249 = vmatprep.subr.bf16.mxu0 0
  %1250 = vmatpush1.bf16.msra.mxu0 %v873
  %1251 = vmatprep.subr.bf16.mxu0 0
  %1252 = vmatpush1.bf16.msra.mxu0 %v874
  %1253 = vmatprep.subr.bf16.mxu0 0
  %1254 = vmatpush1.bf16.msra.mxu0 %v875
  %1255 = vmatprep.subr.bf16.mxu0 0
  %1256 = vmatpush1.bf16.msra.mxu0 %v876
  %1257 = vmatprep.subr.bf16.mxu0 0
  %1258 = vmatpush1.bf16.msra.mxu0 %v877
  %1259 = vmatprep.subr.bf16.mxu0 0
  %1260 = vmatpush1.bf16.msra.mxu0 %v878
  %1261 = vmatprep.subr.bf16.mxu0 0
  %1262 = vmatpush1.bf16.msra.mxu0 %v879
  %1263 = vmatprep.subr.bf16.mxu0 0
  %1264 = vmatpush1.bf16.msra.mxu0 %v880
  %1265 = vmatprep.subr.bf16.mxu0 0
  %1266 = vmatpush1.bf16.msra.mxu0 %v881
  %1267 = vmatprep.subr.bf16.mxu0 0
  %1268 = vmatpush1.bf16.msra.mxu0 %v882
  %1269 = vmatprep.subr.bf16.mxu0 0
  %1270 = vmatpush1.bf16.msra.mxu0 %v883
  %1271 = vmatprep.mubr.bf16.mxu0 %v443
  %1272 = vmatmul.mubr.bf16.gmra.mrb[0].mxu0 %v442
  %v1273 = vpop.f32.mrb[0].mxu0
  %v1274 = vadd.f32 %v1177, %v1273
  %v1275 = vpop.f32.mrb[0].mxu0
  %v1276 = vpop.f32.mrb[0].mxu0
  %v1277 = vadd.f32 %v1180, %v1276
  %v1278 = vpop.f32.mrb[0].mxu0
  %1279 = vmatprep.mubr.bf16.mxu0 %v451
  %1280 = vmatmul.mubr.bf16.gmra.mrb[0].mxu0 %v450
  %v1281 = vpop.f32.mrb[0].mxu0
  %v1282 = vadd.f32 %v1185, %v1281
  %v1283 = vpop.f32.mrb[0].mxu0
  %v1284 = vpop.f32.mrb[0].mxu0
  %v1285 = vadd.f32 %v1188, %v1284
  %v1286 = vpop.f32.mrb[0].mxu0
  %1287 = vmatprep.mubr.bf16.mxu0 %v459
  %1288 = vmatmul.mubr.bf16.gmra.mrb[0].mxu0 %v458
  %v1289 = vpop.f32.mrb[0].mxu0
  %v1290 = vadd.f32 %v1193, %v1289
  %v1291 = vpop.f32.mrb[0].mxu0
  %v1292 = vpop.f32.mrb[0].mxu0
  %v1293 = vadd.f32 %v1196, %v1292
  %v1294 = vpop.f32.mrb[0].mxu0
  %1295 = vmatprep.mubr.bf16.mxu0 %v467
  %1296 = vmatmul.mubr.bf16.gmra.mrb[0].mxu0 %v466
  %v1297 = vpop.f32.mrb[0].mxu0
  %v1298 = vadd.f32 %v1201, %v1297
  %v1299 = vpop.f32.mrb[0].mxu0
  %v1300 = vpop.f32.mrb[0].mxu0
  %v1301 = vadd.f32 %v1204, %v1300
  %v1302 = vpop.f32.mrb[0].mxu0
  %1303 = vmatprep.mubr.bf16.mxu0 %v475
  %1304 = vmatmul.mubr.bf16.gmra.mrb[0].mxu0 %v474
  %v1305 = vpop.f32.mrb[0].mxu0
  %v1306 = vadd.f32 %v1209, %v1305
  %v1307 = vpop.f32.mrb[0].mxu0
  %v1308 = vpop.f32.mrb[0].mxu0
  %v1309 = vadd.f32 %v1212, %v1308
  %v1310 = vpop.f32.mrb[0].mxu0
  %1311 = vmatprep.mubr.bf16.mxu0 %v483
  %1312 = vmatmul.mubr.bf16.gmra.mrb[0].mxu0 %v482
  %v1313 = vpop.f32.mrb[0].mxu0
  %v1314 = vadd.f32 %v1217, %v1313
  %v1315 = vpop.f32.mrb[0].mxu0
  %v1316 = vpop.f32.mrb[0].mxu0
  %v1317 = vadd.f32 %v1220, %v1316
  %v1318 = vpop.f32.mrb[0].mxu0
  %1319 = vmatprep.mubr.bf16.mxu0 %v491
  %1320 = vmatmul.mubr.bf16.gmra.mrb[0].mxu0 %v490
  %v1321 = vpop.f32.mrb[0].mxu0
  %v1322 = vadd.f32 %v1225, %v1321
  %v1323 = vpop.f32.mrb[0].mxu0
  %v1324 = vpop.f32.mrb[0].mxu0
  %v1325 = vadd.f32 %v1228, %v1324
  %v1326 = vpop.f32.mrb[0].mxu0
  %1327 = vmatprep.mubr.bf16.mxu0 %v499
  %1328 = vmatmul.mubr.bf16.gmra.mrb[0].mxu0 %v498
  %v1329 = vpop.f32.mrb[0].mxu0
  %v1330 = vadd.f32 %v1233, %v1329
  %v1331 = vpop.f32.mrb[0].mxu0
  %v1332 = vpop.f32.mrb[0].mxu0
  %v1333 = vadd.f32 %v1236, %v1332
  %v1334 = vpop.f32.mrb[0].mxu0
  %1335 = vdwg.mxu0
  %v1336 = vadd.f32 %v36, %v1274
  %v1337 = vadd.f32 %v37, %v1277
  %v1338 = vadd.f32 %v38, %v1282
  %v1339 = vadd.f32 %v39, %v1285
  %v1340 = vadd.f32 %v40, %v1290
  %v1341 = vadd.f32 %v41, %v1293
  %v1342 = vadd.f32 %v42, %v1298
  %v1343 = vadd.f32 %v43, %v1301
  %v1344 = vadd.f32 %v44, %v1306
  %v1345 = vadd.f32 %v45, %v1309
  %v1346 = vadd.f32 %v46, %v1314
  %v1347 = vadd.f32 %v47, %v1317
  %v1348 = vadd.f32 %v48, %v1322
  %v1349 = vadd.f32 %v49, %v1325
  %v1350 = vadd.f32 %v50, %v1330
  %v1351 = vadd.f32 %v51, %v1333
  %vm1352 = vcmask 146432
  %1353 = vst.msk [vmem:[%s3] sm:$0xff] %vm1352, %v1336
  %1354 = vst.msk [vmem:[%s3 + $0x8] sm:$0xff] %vm1352, %v1337
  %1355 = vst.msk [vmem:[%s3 + $0x10] sm:$0xff] %vm1352, %v1338
  %1356 = vst.msk [vmem:[%s3 + $0x18] sm:$0xff] %vm1352, %v1339
  %1357 = vst.msk [vmem:[%s3 + $0x20] sm:$0xff] %vm1352, %v1340
  %1358 = vst.msk [vmem:[%s3 + $0x28] sm:$0xff] %vm1352, %v1341
  %1359 = vst.msk [vmem:[%s3 + $0x30] sm:$0xff] %vm1352, %v1342
  %1360 = vst.msk [vmem:[%s3 + $0x38] sm:$0xff] %vm1352, %v1343
  %1361 = vst.msk [vmem:[%s3 + $0x40] sm:$0xff] %vm1352, %v1344
  %1362 = vst.msk [vmem:[%s3 + $0x48] sm:$0xff] %vm1352, %v1345
  %1363 = vst.msk [vmem:[%s3 + $0x50] sm:$0xff] %vm1352, %v1346
  %1364 = vst.msk [vmem:[%s3 + $0x58] sm:$0xff] %vm1352, %v1347
  %1365 = vst.msk [vmem:[%s3 + $0x60] sm:$0xff] %vm1352, %v1348
  %1366 = vst.msk [vmem:[%s3 + $0x68] sm:$0xff] %vm1352, %v1349
  %1367 = vst.msk [vmem:[%s3 + $0x70] sm:$0xff] %vm1352, %v1350
  %1368 = vst.msk [vmem:[%s3 + $0x78] sm:$0xff] %vm1352, %v1351
  // Predicated region
  $region18: #{discriminator_forward.9} parent=0 // pred_check
    %p1369 = pneg %p15
  $region19: #{discriminator_forward.9} parent=0 // pred_check_branch
    %1371 = sbr.rel (%p1369) target = $region21
  $region20: #{discriminator_forward.9} parent=0 // pred_region
    %v1372 = vld [vmem:[%s3] sm:$0xff]
    %v1373 = vld [vmem:[%s3 + $0x8] sm:$0xff]
    %v1374 = vld [vmem:[%s3 + $0x10] sm:$0xff]
    %v1375 = vld [vmem:[%s3 + $0x18] sm:$0xff]
    %v1376 = vld [vmem:[%s3 + $0x20] sm:$0xff]
    %v1377 = vld [vmem:[%s3 + $0x28] sm:$0xff]
    %v1378 = vld [vmem:[%s3 + $0x30] sm:$0xff]
    %v1379 = vld [vmem:[%s3 + $0x38] sm:$0xff]
    %v1380 = vld [vmem:[%s3 + $0x40] sm:$0xff]
    %v1381 = vld [vmem:[%s3 + $0x48] sm:$0xff]
    %v1382 = vld [vmem:[%s3 + $0x50] sm:$0xff]
    %v1383 = vld [vmem:[%s3 + $0x58] sm:$0xff]
    %v1384 = vld [vmem:[%s3 + $0x60] sm:$0xff]
    %v1385 = vld [vmem:[%s3 + $0x68] sm:$0xff]
    %v1386 = vld [vmem:[%s3 + $0x70] sm:$0xff]
    %v1387 = vld [vmem:[%s3 + $0x78] sm:$0xff]
    %v1388 = vld [vmem:[%s2] sm:$0xff]
    %v1389 = vld [vmem:[%s2 + $0x8] sm:$0xff]
    %v1390 = vld [vmem:[%s2 + $0x10] sm:$0xff]
    %v1391 = vld [vmem:[%s2 + $0x18] sm:$0xff]
    %v1392 = vld [vmem:[%s2 + $0x20] sm:$0xff]
    %v1393 = vld [vmem:[%s2 + $0x28] sm:$0xff]
    %v1394 = vld [vmem:[%s2 + $0x30] sm:$0xff]
    %v1395 = vld [vmem:[%s2 + $0x38] sm:$0xff]
    %v1396 = vld [vmem:[%s2 + $0x40] sm:$0xff]
    %v1397 = vld [vmem:[%s2 + $0x48] sm:$0xff]
    %v1398 = vld [vmem:[%s2 + $0x50] sm:$0xff]
    %v1399 = vld [vmem:[%s2 + $0x58] sm:$0xff]
    %v1400 = vld [vmem:[%s2 + $0x60] sm:$0xff]
    %v1401 = vld [vmem:[%s2 + $0x68] sm:$0xff]
    %v1402 = vld [vmem:[%s2 + $0x70] sm:$0xff]
    %v1403 = vld [vmem:[%s2 + $0x78] sm:$0xff]
    %1405 = vset.pattern.permute.xlu0 0
    %1406 = vperm.xlu0 %1405, %v1388
    %v1407 = vpop.permute.xlu0 %1406
    %1410 = vset.pattern.permute.xlu0 0
    %1411 = vperm.xlu0 %1410, %v1389
    %v1412 = vpop.permute.xlu0 %1411
    %1415 = vset.pattern.permute.xlu0 0
    %1416 = vperm.xlu0 %1415, %v1390
    %v1417 = vpop.permute.xlu0 %1416
    %1420 = vset.pattern.permute.xlu0 0
    %1421 = vperm.xlu0 %1420, %v1391
    %v1422 = vpop.permute.xlu0 %1421
    %1425 = vset.pattern.permute.xlu0 0
    %1426 = vperm.xlu0 %1425, %v1392
    %v1427 = vpop.permute.xlu0 %1426
    %1430 = vset.pattern.permute.xlu0 0
    %1431 = vperm.xlu0 %1430, %v1393
    %v1432 = vpop.permute.xlu0 %1431
    %1435 = vset.pattern.permute.xlu0 0
    %1436 = vperm.xlu0 %1435, %v1394
    %v1437 = vpop.permute.xlu0 %1436
    %1440 = vset.pattern.permute.xlu0 0
    %1441 = vperm.xlu0 %1440, %v1395
    %v1442 = vpop.permute.xlu0 %1441
    %1445 = vset.pattern.permute.xlu0 0
    %1446 = vperm.xlu0 %1445, %v1396
    %v1447 = vpop.permute.xlu0 %1446
    %1450 = vset.pattern.permute.xlu0 0
    %1451 = vperm.xlu0 %1450, %v1397
    %v1452 = vpop.permute.xlu0 %1451
    %1455 = vset.pattern.permute.xlu0 0
    %1456 = vperm.xlu0 %1455, %v1398
    %v1457 = vpop.permute.xlu0 %1456
    %1460 = vset.pattern.permute.xlu0 0
    %1461 = vperm.xlu0 %1460, %v1399
    %v1462 = vpop.permute.xlu0 %1461
    %1465 = vset.pattern.permute.xlu0 0
    %1466 = vperm.xlu0 %1465, %v1400
    %v1467 = vpop.permute.xlu0 %1466
    %1470 = vset.pattern.permute.xlu0 0
    %1471 = vperm.xlu0 %1470, %v1401
    %v1472 = vpop.permute.xlu0 %1471
    %1475 = vset.pattern.permute.xlu0 0
    %1476 = vperm.xlu0 %1475, %v1402
    %v1477 = vpop.permute.xlu0 %1476
    %1480 = vset.pattern.permute.xlu0 0
    %1481 = vperm.xlu0 %1480, %v1403
    %v1482 = vpop.permute.xlu0 %1481
    %v1484 = vadd.f32 %v1372, %v1407
    %v1485 = vadd.f32 %v1373, %v1412
    %v1486 = vadd.f32 %v1374, %v1417
    %v1487 = vadd.f32 %v1375, %v1422
    %v1488 = vadd.f32 %v1376, %v1427
    %v1489 = vadd.f32 %v1377, %v1432
    %v1490 = vadd.f32 %v1378, %v1437
    %v1491 = vadd.f32 %v1379, %v1442
    %v1492 = vadd.f32 %v1380, %v1447
    %v1493 = vadd.f32 %v1381, %v1452
    %v1494 = vadd.f32 %v1382, %v1457
    %v1495 = vadd.f32 %v1383, %v1462
    %v1496 = vadd.f32 %v1384, %v1467
    %v1497 = vadd.f32 %v1385, %v1472
    %v1498 = vadd.f32 %v1386, %v1477
    %v1499 = vadd.f32 %v1387, %v1482
    %1500 = vst.msk [vmem:[%s3] sm:$0xff] %vm1352, %v1484
    %1501 = vst.msk [vmem:[%s3 + $0x8] sm:$0xff] %vm1352, %v1485
    %1502 = vst.msk [vmem:[%s3 + $0x10] sm:$0xff] %vm1352, %v1486
    %1503 = vst.msk [vmem:[%s3 + $0x18] sm:$0xff] %vm1352, %v1487
    %1504 = vst.msk [vmem:[%s3 + $0x20] sm:$0xff] %vm1352, %v1488
    %1505 = vst.msk [vmem:[%s3 + $0x28] sm:$0xff] %vm1352, %v1489
    %1506 = vst.msk [vmem:[%s3 + $0x30] sm:$0xff] %vm1352, %v1490
    %1507 = vst.msk [vmem:[%s3 + $0x38] sm:$0xff] %vm1352, %v1491
    %1508 = vst.msk [vmem:[%s3 + $0x40] sm:$0xff] %vm1352, %v1492
    %1509 = vst.msk [vmem:[%s3 + $0x48] sm:$0xff] %vm1352, %v1493
    %1510 = vst.msk [vmem:[%s3 + $0x50] sm:$0xff] %vm1352, %v1494
    %1511 = vst.msk [vmem:[%s3 + $0x58] sm:$0xff] %vm1352, %v1495
    %1512 = vst.msk [vmem:[%s3 + $0x60] sm:$0xff] %vm1352, %v1496
    %1513 = vst.msk [vmem:[%s3 + $0x68] sm:$0xff] %vm1352, %v1497
    %1514 = vst.msk [vmem:[%s3 + $0x70] sm:$0xff] %vm1352, %v1498
    %1515 = vst.msk [vmem:[%s3 + $0x78] sm:$0xff] %vm1352, %v1499
  $region21: #{discriminator_forward.9} parent=0 // pred_fallthru
    _
  // Predicated region
  $region22: #{discriminator_forward.9} parent=0 // pred_check
    _
  $region23: #{discriminator_forward.9} parent=0 // pred_check_branch
    %1517 = sbr.rel (0) target = $region25
  $region24: #{discriminator_forward.9} parent=0 // pred_region
    _
  $region25: #{discriminator_forward.9} parent=0 // pred_fallthru
    _
  // Predicated region
  $region26: #{discriminator_forward.9} parent=0 // pred_check
    _
  $region27: #{discriminator_forward.9} parent=0 // pred_check_branch
    %1519 = sbr.rel (0) target = $region29
  $region28: #{discriminator_forward.9} parent=0 // pred_region
    _
  $region29: #{discriminator_forward.9} parent=0 // pred_fallthru
    _

</llo_original>
